<compile_context>
chip_gen: v7x
topology: tpu7x:2x2x1
jax: 0.10.0
libtpu: 0.0.40
codegen_flags: <defaults>
</compile_context>

<pallas_src>
import jax
import jax.numpy as jnp
from jax import lax
from jax.experimental import pallas as pl
from jax.experimental.pallas import tpu as pltpu


# ----------------------------------------------------------------------------
# Fused decoder kernel: all GRU layers + fc head in one pallas_call.
# ----------------------------------------------------------------------------
def _make_decoder_kernel(num_layers, T, Bp, B, H, Vp):
    """Kernel over flat (T*Bp, .) activations.

    Inputs : x (T*Bp, Din0), h0 (L, Bp, H),
             per layer: wih (Din_l, 3H), whh (H, 3H), bx (1, 3H), bhn (1, H),
             fc_w (H, Vp), fc_b (1, Vp)
    Outputs: logits (B, T, Vp)  [batch-major, lane-dense], hT (L, Bp, H)
    Scratch: act (T*Bp, H), gx (T*Bp, 3H)
    """
    n_in = 2 + 4 * num_layers + 2

    def kernel(*refs):
        x_ref, h0_ref = refs[0], refs[1]
        layer_refs = refs[2:2 + 4 * num_layers]
        fcw_ref = refs[2 + 4 * num_layers]           # (H, Vp)
        fcb_ref = refs[3 + 4 * num_layers]           # (1, Vp)
        logits_ref = refs[n_in]                      # (B, T, Vp)
        hT_ref = refs[n_in + 1]                      # (L, Bp, H)
        act_s = refs[n_in + 2]                       # (T*Bp, H)
        gx_s = refs[n_in + 3]                        # (T*Bp, 3H)

        for l in range(num_layers):
            wih_ref = layer_refs[4 * l + 0]          # (Din_l, 3H) gates [r|z|n]
            whh_ref = layer_refs[4 * l + 1]          # (H, 3H)
            bx_ref = layer_refs[4 * l + 2]           # (1, 3H) = [b_ir+b_hr | b_iz+b_hz | b_in]
            bhn_ref = layer_refs[4 * l + 3]          # (1, H)  = b_hn (gated by r)

            # Layer input: embeddings+context for layer 0, previous layer's
            # VMEM-resident outputs otherwise.
            xin = x_ref[...] if l == 0 else act_s[...]

            # Hoisted fused input projection: one wide MXU pass for all time steps.
            gx_s[...] = (jnp.dot(xin, wih_ref[...],
                                 preferred_element_type=jnp.float32)
                         + bx_ref[...])

            whh = whh_ref[...]
            b_hn = bhn_ref[...]

            def gru_step(t, h):
                start = t * Bp
                if not isinstance(start, int):
                    start = pl.multiple_of(start, 8)     # aligned sublane offset
                rows = pl.ds(start, Bp)
                gx = gx_s[rows, :]                                        # (Bp, 3H)
                gh = jnp.dot(h, whh, preferred_element_type=jnp.float32)  # (Bp, 3H)
                rz = jax.nn.sigmoid(gx[:, :2 * H] + gh[:, :2 * H])
                r = rz[:, :H]
                z = rz[:, H:]
                n = jnp.tanh(gx[:, 2 * H:] + r * (gh[:, 2 * H:] + b_hn))
                h_new = (1.0 - z) * n + z * h
                act_s[rows, :] = h_new          # aligned unmasked store; next layer's input
                return h_new

            if T <= 64:
                # Fully unrolled recurrence: gives the scheduler cross-step visibility.
                h = h0_ref[l]
                for t in range(T):
                    h = gru_step(t, h)
            else:
                h = lax.fori_loop(0, T, gru_step, h0_ref[l])
            hT_ref[l] = h                        # one store per layer

        # Fused fc head, written batch-major so no post-kernel transpose is needed.
        fcw = fcw_ref[...]
        fcb = fcb_ref[...]
        for b in range(B):                       # real batch only; padded rows skipped
            rows_b = act_s[pl.ds(b, T, stride=Bp), :]          # (T, H) strided row gather
            logits_ref[b] = (jnp.dot(rows_b, fcw,
                                     preferred_element_type=jnp.float32) + fcb)

    return kernel


def decoder_gru_fc(x, h0, gru_layers, fc_w_t, fc_b):
    """x: (T, B, Din0) f32; h0: (L, B, H) f32; fc_w_t: (H, Vp); fc_b: (1, Vp).

    Returns (logits (B, T, Vp) batch-major, final_hidden (L, B, H)).
    """
    T, B, Din0 = x.shape
    L, _, H = h0.shape
    Vp = fc_w_t.shape[1]

    # Pad batch to a full sublane group so per-step stores are aligned & unmasked.
    Bp = ((B + 7) // 8) * 8
    x = jnp.asarray(x, jnp.float32)
    h0 = jnp.asarray(h0, jnp.float32)
    if Bp != B:
        x = jnp.pad(x, ((0, 0), (0, Bp - B), (0, 0)))
        h0 = jnp.pad(h0, ((0, 0), (0, Bp - B), (0, 0)))
    x2 = x.reshape(T * Bp, Din0)

    def _full_block(shape):
        zeros = (0,) * len(shape)
        return pl.BlockSpec(shape, lambda i, _z=zeros: _z)

    args = [x2, h0]
    in_specs = [_full_block(x2.shape), _full_block(h0.shape)]
    for (wih, whh, bx, bhn) in gru_layers:
        args += [wih, whh, bx, bhn]
        in_specs += [_full_block(wih.shape), _full_block(whh.shape),
                     _full_block(bx.shape), _full_block(bhn.shape)]
    args += [fc_w_t, fc_b]
    in_specs += [_full_block(fc_w_t.shape), _full_block(fc_b.shape)]

    out_shape = (jax.ShapeDtypeStruct((B, T, Vp), jnp.float32),
                 jax.ShapeDtypeStruct((L, Bp, H), jnp.float32))
    out_specs = [_full_block((B, T, Vp)), _full_block((L, Bp, H))]

    scratch_shapes = [
        pltpu.VMEM((T * Bp, H), jnp.float32),        # inter-layer activations
        pltpu.VMEM((T * Bp, 3 * H), jnp.float32),    # fused input-gate projections
    ]

    # Explicit VMEM budget (generous slack, capped for v7x's 64 MiB physical VMEM).
    vmem_bytes = sum(int(a.size) * 4 for a in args)
    vmem_bytes += (T * Bp * 4 * H + B * T * Vp + L * Bp * H) * 4
    vmem_limit = int(min(max(2 * vmem_bytes + (2 << 20), 4 << 20), 64 << 20))

    kernel = _make_decoder_kernel(L, T, Bp, B, H, Vp)

    logits, hT = pl.pallas_call(
        kernel,
        out_shape=out_shape,
        grid_spec=pltpu.PrefetchScalarGridSpec(
            num_scalar_prefetch=0,
            grid=(1,),
            in_specs=in_specs,
            out_specs=out_specs,
            scratch_shapes=scratch_shapes),
        compiler_params=pltpu.CompilerParams(
            dimension_semantics=("arbitrary",),
            vmem_limit_bytes=vmem_limit),
    )(*args)

    return logits, hT[:, :B, :]


# ----------------------------------------------------------------------------
# Parameters (PyTorch layouts, pre-packed once into the kernel layout)
# ----------------------------------------------------------------------------
def xavier_uniform(key, shape):
    fan_out, fan_in = shape
    bound = (6.0 / (fan_in + fan_out)) ** 0.5
    return jax.random.uniform(key, shape, jnp.float32, -bound, bound)


def pack_gru_layer(w_ih, w_hh, b_ih, b_hh, H):
    """PyTorch (3H, Din)/(3H, H)/(3H,) GRU params -> fused kernel layout.

    Returns (wih (Din, 3H), whh (H, 3H), bx (1, 3H), bhn (1, H)); gate order [r|z|n];
    r/z biases pre-folded, weights pre-transposed/concatenated once.
    """
    wih_p = w_ih.T                                   # (Din, 3H)
    whh_p = w_hh.T                                   # (H, 3H)
    bx_p = jnp.concatenate(
        [b_ih[:2 * H] + b_hh[:2 * H], b_ih[2 * H:]]).reshape(1, 3 * H)
    bhn_p = b_hh[2 * H:].reshape(1, H)               # stays separate (gated by r)
    return wih_p, whh_p, bx_p, bhn_p


def make_decoder_params(key, vocab_size, embed_size, num_hiddens, num_layers):
    keys = jax.random.split(key, 1 + 4 * num_layers + 2)
    # nn.Embedding default init: N(0, 1)
    emb = jax.random.normal(keys[0], (vocab_size, embed_size), jnp.float32)
    H = num_hiddens
    bound = 1.0 / (H ** 0.5)                         # PyTorch default GRU bias init
    layers = []
    kidx = 1
    for layer in range(num_layers):
        in_size = (embed_size + num_hiddens) if layer == 0 else num_hiddens
        w_ih = xavier_uniform(keys[kidx], (3 * H, in_size)); kidx += 1   # init_seq2seq
        w_hh = xavier_uniform(keys[kidx], (3 * H, H)); kidx += 1
        b_ih = jax.random.uniform(keys[kidx], (3 * H,), jnp.float32, -bound, bound); kidx += 1
        b_hh = jax.random.uniform(keys[kidx], (3 * H,), jnp.float32, -bound, bound); kidx += 1
        layers.append(pack_gru_layer(w_ih, w_hh, b_ih, b_hh, H))
    # LazyLinear(vocab_size): default Linear-style init (fan_in = H)
    fc_w = jax.random.uniform(keys[kidx], (vocab_size, H), jnp.float32, -bound, bound); kidx += 1
    fc_b = jax.random.uniform(keys[kidx], (vocab_size,), jnp.float32, -bound, bound)
    # Pre-transpose + pad vocab to a lane-dense multiple of 128 (sliced off post-kernel).
    Vp = ((vocab_size + 127) // 128) * 128
    fc_w_t = jnp.zeros((H, Vp), jnp.float32).at[:, :vocab_size].set(fc_w.T)
    fc_b_p = jnp.zeros((1, Vp), jnp.float32).at[:, :vocab_size].set(fc_b)
    return emb, layers, fc_w_t, fc_b_p


# ----------------------------------------------------------------------------
# Seq2SeqDecoder forward (embedding/concat are plain-JAX glue; no output transpose)
# ----------------------------------------------------------------------------
def seq2seq_decoder_forward(X, state, emb_table, gru_layers, fc_w_t, fc_b):
    """X: (batch, seq) int token ids; state = (enc_outputs, hidden_state).

    Returns (outputs (batch, seq, vocab), [enc_outputs, new_hidden_state]).
    """
    enc_outputs, hidden_state = state
    # embs = relu(embedding(X.t()))  -> (T, B, E)
    # NOTE: jnp.take clips out-of-range ids (PyTorch nn.Embedding would error).
    embs = jax.nn.relu(jnp.take(emb_table, X.T.astype(jnp.int32), axis=0))
    T = embs.shape[0]
    context = enc_outputs[-1]                                    # (B, H)
    context_rep = jnp.broadcast_to(context[None, :, :],
                                   (T,) + context.shape)         # (T, B, H)
    embs_and_context = jnp.concatenate([embs, context_rep], axis=-1)  # (T, B, E+H)

    logits_pad, hT = decoder_gru_fc(embs_and_context, hidden_state,
                                    gru_layers, fc_w_t, fc_b)    # (B,T,Vp), (L,B,H)
    V = emb_table.shape[0]
    outputs = logits_pad[..., :V]        # already batch-major -> no swapaxes / HBM pass
    return outputs, [enc_outputs, hT]


if __name__ == "__main__":
    vocab_size = 50
    embed_size = 32
    num_hiddens = 32
    num_layers = 2
    batch = 2
    seq_len = 8
    enc_seq_len = 8

    key = jax.random.PRNGKey(0)
    pkey, xkey, ekey, hkey = jax.random.split(key, 4)
    emb_table, gru_layers, fc_w_t, fc_b = make_decoder_params(
        pkey, vocab_size, embed_size, num_hiddens, num_layers)

    X = jax.random.randint(xkey, (batch, seq_len), 0, vocab_size, dtype=jnp.int32)
    # Simulated encoder state: init_state(enc_all_outputs) is the identity.
    enc_outputs = jax.random.normal(ekey, (enc_seq_len, batch, num_hiddens), jnp.float32)
    hidden_state = jax.random.normal(hkey, (num_layers, batch, num_hiddens), jnp.float32)
    state = (enc_outputs, hidden_state)

    outputs, new_state = seq2seq_decoder_forward(
        X, state, emb_table, gru_layers, fc_w_t, fc_b)
    jax.block_until_ready((outputs, new_state[0], new_state[1]))

    assert outputs.shape == (batch, seq_len, vocab_size)
    assert new_state[0].shape == (enc_seq_len, batch, num_hiddens)
    assert new_state[1].shape == (num_layers, batch, num_hiddens)
    print("KERNEL_OK")
</pallas_src>

<mosaic_0001>
module attributes {stable_mosaic.version = 11 : i64} {
  func.func @kernel(%arg0: i32, %arg1: memref<64x64xf32, #tpu.memory_space<vmem>>, %arg2: memref<2x8x32xf32, #tpu.memory_space<vmem>>, %arg3: memref<64x96xf32, #tpu.memory_space<vmem>>, %arg4: memref<32x96xf32, #tpu.memory_space<vmem>>, %arg5: memref<1x96xf32, #tpu.memory_space<vmem>>, %arg6: memref<1x32xf32, #tpu.memory_space<vmem>>, %arg7: memref<32x96xf32, #tpu.memory_space<vmem>>, %arg8: memref<32x96xf32, #tpu.memory_space<vmem>>, %arg9: memref<1x96xf32, #tpu.memory_space<vmem>>, %arg10: memref<1x32xf32, #tpu.memory_space<vmem>>, %arg11: memref<32x128xf32, #tpu.memory_space<vmem>>, %arg12: memref<1x128xf32, #tpu.memory_space<vmem>>, %arg13: memref<2x8x128xf32, #tpu.memory_space<vmem>>, %arg14: memref<2x8x32xf32, #tpu.memory_space<vmem>>, %arg15: memref<64x32xf32, #tpu.memory_space<vmem>>, %arg16: memref<64x96xf32, #tpu.memory_space<vmem>>) attributes {dimension_semantics = [#tpu.dimension_semantics<arbitrary>], iteration_bounds = array<i64: 1>, scalar_prefetch = 0 : i64, scratch_operands = 2 : i64, tpu.core_type = #tpu.core_type<tc>, window_params = [{pipeline_mode = #tpu.pipeline_mode<synchronous>, transform_indices = @transform_0, window_bounds = array<i64: 64, 64>}, {pipeline_mode = #tpu.pipeline_mode<synchronous>, transform_indices = @transform_1, window_bounds = array<i64: 2, 8, 32>}, {pipeline_mode = #tpu.pipeline_mode<synchronous>, transform_indices = @transform_2, window_bounds = array<i64: 64, 96>}, {pipeline_mode = #tpu.pipeline_mode<synchronous>, transform_indices = @transform_3, window_bounds = array<i64: 32, 96>}, {pipeline_mode = #tpu.pipeline_mode<synchronous>, transform_indices = @transform_4, window_bounds = array<i64: 1, 96>}, {pipeline_mode = #tpu.pipeline_mode<synchronous>, transform_indices = @transform_5, window_bounds = array<i64: 1, 32>}, {pipeline_mode = #tpu.pipeline_mode<synchronous>, transform_indices = @transform_6, window_bounds = array<i64: 32, 96>}, {pipeline_mode = #tpu.pipeline_mode<synchronous>, transform_indices = @transform_7, window_bounds = array<i64: 32, 96>}, {pipeline_mode = #tpu.pipeline_mode<synchronous>, transform_indices = @transform_8, window_bounds = array<i64: 1, 96>}, {pipeline_mode = #tpu.pipeline_mode<synchronous>, transform_indices = @transform_9, window_bounds = array<i64: 1, 32>}, {pipeline_mode = #tpu.pipeline_mode<synchronous>, transform_indices = @transform_10, window_bounds = array<i64: 32, 128>}, {pipeline_mode = #tpu.pipeline_mode<synchronous>, transform_indices = @transform_11, window_bounds = array<i64: 1, 128>}, {pipeline_mode = #tpu.pipeline_mode<synchronous>, transform_indices = @transform_12, window_bounds = array<i64: 2, 8, 128>}, {pipeline_mode = #tpu.pipeline_mode<synchronous>, transform_indices = @transform_13, window_bounds = array<i64: 2, 8, 32>}]} {
    %c0 = arith.constant 0 : index
    %c0_0 = arith.constant 0 : index
    %0 = vector.load %arg1[%c0, %c0_0] : memref<64x64xf32, #tpu.memory_space<vmem>>, vector<64x64xf32>
    %c0_1 = arith.constant 0 : index
    %c0_2 = arith.constant 0 : index
    %1 = vector.load %arg3[%c0_1, %c0_2] : memref<64x96xf32, #tpu.memory_space<vmem>>, vector<64x96xf32>
    %cst = arith.constant dense<0.000000e+00> : vector<64x96xf32>
    %2 = tpu.matmul %0, %1, %cst {dimension_numbers = #tpu.dot_dimension_numbers<[1], [0], [0], [1], [0, 0, 1, 1], [], []>} : vector<64x64xf32>, vector<64x96xf32>, vector<64x96xf32> -> vector<64x96xf32>
    %c0_3 = arith.constant 0 : index
    %c0_4 = arith.constant 0 : index
    %3 = vector.load %arg5[%c0_3, %c0_4] : memref<1x96xf32, #tpu.memory_space<vmem>>, vector<1x96xf32>
    %4 = vector.broadcast %3 : vector<1x96xf32> to vector<64x96xf32>
    %5 = arith.addf %2, %4 : vector<64x96xf32>
    %c0_5 = arith.constant 0 : index
    %c0_6 = arith.constant 0 : index
    %6 = vector.load %arg16[%c0_5, %c0_6] : memref<64x96xf32, #tpu.memory_space<vmem>>, vector<64x96xf32>
    tpu.vector_store %arg16[%c0_5, %c0_6], %5 {strides = array<i32>} : memref<64x96xf32, #tpu.memory_space<vmem>>, vector<64x96xf32>,
    %c0_7 = arith.constant 0 : index
    %c0_8 = arith.constant 0 : index
    %7 = vector.load %arg4[%c0_7, %c0_8] : memref<32x96xf32, #tpu.memory_space<vmem>>, vector<32x96xf32>
    %c0_9 = arith.constant 0 : index
    %c0_10 = arith.constant 0 : index
    %8 = vector.load %arg6[%c0_9, %c0_10] : memref<1x32xf32, #tpu.memory_space<vmem>>, vector<1x32xf32>
    %c0_11 = arith.constant 0 : index
    %c0_12 = arith.constant 0 : index
    %c0_13 = arith.constant 0 : index
    %9 = vector.load %arg2[%c0_11, %c0_12, %c0_13] : memref<2x8x32xf32, #tpu.memory_space<vmem>>, vector<1x8x32xf32>
    %10 = vector.shape_cast %9 : vector<1x8x32xf32> to vector<8x32xf32>
    %c0_14 = arith.constant 0 : index
    %c0_15 = arith.constant 0 : index
    %11 = vector.load %arg16[%c0_14, %c0_15] : memref<64x96xf32, #tpu.memory_space<vmem>>, vector<8x96xf32>
    %cst_16 = arith.constant dense<0.000000e+00> : vector<8x96xf32>
    %12 = tpu.matmul %10, %7, %cst_16 {dimension_numbers = #tpu.dot_dimension_numbers<[1], [0], [0], [1], [0, 0, 1, 1], [], []>} : vector<8x32xf32>, vector<32x96xf32>, vector<8x96xf32> -> vector<8x96xf32>
    %13 = vector.extract_strided_slice %11 {offsets = [0, 0], sizes = [8, 64], strides = [1, 1]} : vector<8x96xf32> to vector<8x64xf32>
    %14 = vector.extract_strided_slice %12 {offsets = [0, 0], sizes = [8, 64], strides = [1, 1]} : vector<8x96xf32> to vector<8x64xf32>
    %15 = arith.addf %13, %14 : vector<8x64xf32>
    %16 = arith.negf %15 : vector<8x64xf32>
    %17 = math.exp %16 : vector<8x64xf32>
    %cst_17 = arith.constant 1.000000e+00 : f32
    %18 = vector.broadcast %cst_17 : f32 to vector<8x64xf32>
    %19 = arith.addf %18, %17 : vector<8x64xf32>
    %20 = arith.divf %18, %19 : vector<8x64xf32>
    %21 = vector.extract_strided_slice %20 {offsets = [0, 0], sizes = [8, 32], strides = [1, 1]} : vector<8x64xf32> to vector<8x32xf32>
    %22 = vector.extract_strided_slice %20 {offsets = [0, 32], sizes = [8, 32], strides = [1, 1]} : vector<8x64xf32> to vector<8x32xf32>
    %23 = vector.extract_strided_slice %11 {offsets = [0, 64], sizes = [8, 32], strides = [1, 1]} : vector<8x96xf32> to vector<8x32xf32>
    %24 = vector.extract_strided_slice %12 {offsets = [0, 64], sizes = [8, 32], strides = [1, 1]} : vector<8x96xf32> to vector<8x32xf32>
    %25 = vector.broadcast %8 : vector<1x32xf32> to vector<8x32xf32>
    %26 = arith.addf %24, %25 : vector<8x32xf32>
    %27 = arith.mulf %21, %26 : vector<8x32xf32>
    %28 = arith.addf %23, %27 : vector<8x32xf32>
    %29 = math.tanh %28 : vector<8x32xf32>
    %cst_18 = arith.constant 1.000000e+00 : f32
    %30 = vector.broadcast %cst_18 : f32 to vector<8x32xf32>
    %31 = arith.subf %30, %22 : vector<8x32xf32>
    %32 = arith.mulf %31, %29 : vector<8x32xf32>
    %33 = arith.mulf %22, %10 : vector<8x32xf32>
    %34 = arith.addf %32, %33 : vector<8x32xf32>
    %c0_19 = arith.constant 0 : index
    %c0_20 = arith.constant 0 : index
    %35 = vector.load %arg15[%c0_19, %c0_20] : memref<64x32xf32, #tpu.memory_space<vmem>>, vector<8x32xf32>
    tpu.vector_store %arg15[%c0_19, %c0_20], %34 {strides = array<i32>} : memref<64x32xf32, #tpu.memory_space<vmem>>, vector<8x32xf32>,
    %c8 = arith.constant 8 : index
    %c0_21 = arith.constant 0 : index
    %36 = vector.load %arg16[%c8, %c0_21] : memref<64x96xf32, #tpu.memory_space<vmem>>, vector<8x96xf32>
    %cst_22 = arith.constant dense<0.000000e+00> : vector<8x96xf32>
    %37 = tpu.matmul %34, %7, %cst_22 {dimension_numbers = #tpu.dot_dimension_numbers<[1], [0], [0], [1], [0, 0, 1, 1], [], []>} : vector<8x32xf32>, vector<32x96xf32>, vector<8x96xf32> -> vector<8x96xf32>
    %38 = vector.extract_strided_slice %36 {offsets = [0, 0], sizes = [8, 64], strides = [1, 1]} : vector<8x96xf32> to vector<8x64xf32>
    %39 = vector.extract_strided_slice %37 {offsets = [0, 0], sizes = [8, 64], strides = [1, 1]} : vector<8x96xf32> to vector<8x64xf32>
    %40 = arith.addf %38, %39 : vector<8x64xf32>
    %41 = arith.negf %40 : vector<8x64xf32>
    %42 = math.exp %41 : vector<8x64xf32>
    %cst_23 = arith.constant 1.000000e+00 : f32
    %43 = vector.broadcast %cst_23 : f32 to vector<8x64xf32>
    %44 = arith.addf %43, %42 : vector<8x64xf32>
    %45 = arith.divf %43, %44 : vector<8x64xf32>
    %46 = vector.extract_strided_slice %45 {offsets = [0, 0], sizes = [8, 32], strides = [1, 1]} : vector<8x64xf32> to vector<8x32xf32>
    %47 = vector.extract_strided_slice %45 {offsets = [0, 32], sizes = [8, 32], strides = [1, 1]} : vector<8x64xf32> to vector<8x32xf32>
    %48 = vector.extract_strided_slice %36 {offsets = [0, 64], sizes = [8, 32], strides = [1, 1]} : vector<8x96xf32> to vector<8x32xf32>
    %49 = vector.extract_strided_slice %37 {offsets = [0, 64], sizes = [8, 32], strides = [1, 1]} : vector<8x96xf32> to vector<8x32xf32>
    %50 = vector.broadcast %8 : vector<1x32xf32> to vector<8x32xf32>
    %51 = arith.addf %49, %50 : vector<8x32xf32>
    %52 = arith.mulf %46, %51 : vector<8x32xf32>
    %53 = arith.addf %48, %52 : vector<8x32xf32>
    %54 = math.tanh %53 : vector<8x32xf32>
    %cst_24 = arith.constant 1.000000e+00 : f32
    %55 = vector.broadcast %cst_24 : f32 to vector<8x32xf32>
    %56 = arith.subf %55, %47 : vector<8x32xf32>
    %57 = arith.mulf %56, %54 : vector<8x32xf32>
    %58 = arith.mulf %47, %34 : vector<8x32xf32>
    %59 = arith.addf %57, %58 : vector<8x32xf32>
    %c8_25 = arith.constant 8 : index
    %c0_26 = arith.constant 0 : index
    %60 = vector.load %arg15[%c8_25, %c0_26] : memref<64x32xf32, #tpu.memory_space<vmem>>, vector<8x32xf32>
    tpu.vector_store %arg15[%c8_25, %c0_26], %59 {strides = array<i32>} : memref<64x32xf32, #tpu.memory_space<vmem>>, vector<8x32xf32>,
    %c16 = arith.constant 16 : index
    %c0_27 = arith.constant 0 : index
    %61 = vector.load %arg16[%c16, %c0_27] : memref<64x96xf32, #tpu.memory_space<vmem>>, vector<8x96xf32>
    %cst_28 = arith.constant dense<0.000000e+00> : vector<8x96xf32>
    %62 = tpu.matmul %59, %7, %cst_28 {dimension_numbers = #tpu.dot_dimension_numbers<[1], [0], [0], [1], [0, 0, 1, 1], [], []>} : vector<8x32xf32>, vector<32x96xf32>, vector<8x96xf32> -> vector<8x96xf32>
    %63 = vector.extract_strided_slice %61 {offsets = [0, 0], sizes = [8, 64], strides = [1, 1]} : vector<8x96xf32> to vector<8x64xf32>
    %64 = vector.extract_strided_slice %62 {offsets = [0, 0], sizes = [8, 64], strides = [1, 1]} : vector<8x96xf32> to vector<8x64xf32>
    %65 = arith.addf %63, %64 : vector<8x64xf32>
    %66 = arith.negf %65 : vector<8x64xf32>
    %67 = math.exp %66 : vector<8x64xf32>
    %cst_29 = arith.constant 1.000000e+00 : f32
    %68 = vector.broadcast %cst_29 : f32 to vector<8x64xf32>
    %69 = arith.addf %68, %67 : vector<8x64xf32>
    %70 = arith.divf %68, %69 : vector<8x64xf32>
    %71 = vector.extract_strided_slice %70 {offsets = [0, 0], sizes = [8, 32], strides = [1, 1]} : vector<8x64xf32> to vector<8x32xf32>
    %72 = vector.extract_strided_slice %70 {offsets = [0, 32], sizes = [8, 32], strides = [1, 1]} : vector<8x64xf32> to vector<8x32xf32>
    %73 = vector.extract_strided_slice %61 {offsets = [0, 64], sizes = [8, 32], strides = [1, 1]} : vector<8x96xf32> to vector<8x32xf32>
    %74 = vector.extract_strided_slice %62 {offsets = [0, 64], sizes = [8, 32], strides = [1, 1]} : vector<8x96xf32> to vector<8x32xf32>
    %75 = vector.broadcast %8 : vector<1x32xf32> to vector<8x32xf32>
    %76 = arith.addf %74, %75 : vector<8x32xf32>
    %77 = arith.mulf %71, %76 : vector<8x32xf32>
    %78 = arith.addf %73, %77 : vector<8x32xf32>
    %79 = math.tanh %78 : vector<8x32xf32>
    %cst_30 = arith.constant 1.000000e+00 : f32
    %80 = vector.broadcast %cst_30 : f32 to vector<8x32xf32>
    %81 = arith.subf %80, %72 : vector<8x32xf32>
    %82 = arith.mulf %81, %79 : vector<8x32xf32>
    %83 = arith.mulf %72, %59 : vector<8x32xf32>
    %84 = arith.addf %82, %83 : vector<8x32xf32>
    %c16_31 = arith.constant 16 : index
    %c0_32 = arith.constant 0 : index
    %85 = vector.load %arg15[%c16_31, %c0_32] : memref<64x32xf32, #tpu.memory_space<vmem>>, vector<8x32xf32>
    tpu.vector_store %arg15[%c16_31, %c0_32], %84 {strides = array<i32>} : memref<64x32xf32, #tpu.memory_space<vmem>>, vector<8x32xf32>,
    %c24 = arith.constant 24 : index
    %c0_33 = arith.constant 0 : index
    %86 = vector.load %arg16[%c24, %c0_33] : memref<64x96xf32, #tpu.memory_space<vmem>>, vector<8x96xf32>
    %cst_34 = arith.constant dense<0.000000e+00> : vector<8x96xf32>
    %87 = tpu.matmul %84, %7, %cst_34 {dimension_numbers = #tpu.dot_dimension_numbers<[1], [0], [0], [1], [0, 0, 1, 1], [], []>} : vector<8x32xf32>, vector<32x96xf32>, vector<8x96xf32> -> vector<8x96xf32>
    %88 = vector.extract_strided_slice %86 {offsets = [0, 0], sizes = [8, 64], strides = [1, 1]} : vector<8x96xf32> to vector<8x64xf32>
    %89 = vector.extract_strided_slice %87 {offsets = [0, 0], sizes = [8, 64], strides = [1, 1]} : vector<8x96xf32> to vector<8x64xf32>
    %90 = arith.addf %88, %89 : vector<8x64xf32>
    %91 = arith.negf %90 : vector<8x64xf32>
    %92 = math.exp %91 : vector<8x64xf32>
    %cst_35 = arith.constant 1.000000e+00 : f32
    %93 = vector.broadcast %cst_35 : f32 to vector<8x64xf32>
    %94 = arith.addf %93, %92 : vector<8x64xf32>
    %95 = arith.divf %93, %94 : vector<8x64xf32>
    %96 = vector.extract_strided_slice %95 {offsets = [0, 0], sizes = [8, 32], strides = [1, 1]} : vector<8x64xf32> to vector<8x32xf32>
    %97 = vector.extract_strided_slice %95 {offsets = [0, 32], sizes = [8, 32], strides = [1, 1]} : vector<8x64xf32> to vector<8x32xf32>
    %98 = vector.extract_strided_slice %86 {offsets = [0, 64], sizes = [8, 32], strides = [1, 1]} : vector<8x96xf32> to vector<8x32xf32>
    %99 = vector.extract_strided_slice %87 {offsets = [0, 64], sizes = [8, 32], strides = [1, 1]} : vector<8x96xf32> to vector<8x32xf32>
    %100 = vector.broadcast %8 : vector<1x32xf32> to vector<8x32xf32>
    %101 = arith.addf %99, %100 : vector<8x32xf32>
    %102 = arith.mulf %96, %101 : vector<8x32xf32>
    %103 = arith.addf %98, %102 : vector<8x32xf32>
    %104 = math.tanh %103 : vector<8x32xf32>
    %cst_36 = arith.constant 1.000000e+00 : f32
    %105 = vector.broadcast %cst_36 : f32 to vector<8x32xf32>
    %106 = arith.subf %105, %97 : vector<8x32xf32>
    %107 = arith.mulf %106, %104 : vector<8x32xf32>
    %108 = arith.mulf %97, %84 : vector<8x32xf32>
    %109 = arith.addf %107, %108 : vector<8x32xf32>
    %c24_37 = arith.constant 24 : index
    %c0_38 = arith.constant 0 : index
    %110 = vector.load %arg15[%c24_37, %c0_38] : memref<64x32xf32, #tpu.memory_space<vmem>>, vector<8x32xf32>
    tpu.vector_store %arg15[%c24_37, %c0_38], %109 {strides = array<i32>} : memref<64x32xf32, #tpu.memory_space<vmem>>, vector<8x32xf32>,
    %c32 = arith.constant 32 : index
    %c0_39 = arith.constant 0 : index
    %111 = vector.load %arg16[%c32, %c0_39] : memref<64x96xf32, #tpu.memory_space<vmem>>, vector<8x96xf32>
    %cst_40 = arith.constant dense<0.000000e+00> : vector<8x96xf32>
    %112 = tpu.matmul %109, %7, %cst_40 {dimension_numbers = #tpu.dot_dimension_numbers<[1], [0], [0], [1], [0, 0, 1, 1], [], []>} : vector<8x32xf32>, vector<32x96xf32>, vector<8x96xf32> -> vector<8x96xf32>
    %113 = vector.extract_strided_slice %111 {offsets = [0, 0], sizes = [8, 64], strides = [1, 1]} : vector<8x96xf32> to vector<8x64xf32>
    %114 = vector.extract_strided_slice %112 {offsets = [0, 0], sizes = [8, 64], strides = [1, 1]} : vector<8x96xf32> to vector<8x64xf32>
    %115 = arith.addf %113, %114 : vector<8x64xf32>
    %116 = arith.negf %115 : vector<8x64xf32>
    %117 = math.exp %116 : vector<8x64xf32>
    %cst_41 = arith.constant 1.000000e+00 : f32
    %118 = vector.broadcast %cst_41 : f32 to vector<8x64xf32>
    %119 = arith.addf %118, %117 : vector<8x64xf32>
    %120 = arith.divf %118, %119 : vector<8x64xf32>
    %121 = vector.extract_strided_slice %120 {offsets = [0, 0], sizes = [8, 32], strides = [1, 1]} : vector<8x64xf32> to vector<8x32xf32>
    %122 = vector.extract_strided_slice %120 {offsets = [0, 32], sizes = [8, 32], strides = [1, 1]} : vector<8x64xf32> to vector<8x32xf32>
    %123 = vector.extract_strided_slice %111 {offsets = [0, 64], sizes = [8, 32], strides = [1, 1]} : vector<8x96xf32> to vector<8x32xf32>
    %124 = vector.extract_strided_slice %112 {offsets = [0, 64], sizes = [8, 32], strides = [1, 1]} : vector<8x96xf32> to vector<8x32xf32>
    %125 = vector.broadcast %8 : vector<1x32xf32> to vector<8x32xf32>
    %126 = arith.addf %124, %125 : vector<8x32xf32>
    %127 = arith.mulf %121, %126 : vector<8x32xf32>
    %128 = arith.addf %123, %127 : vector<8x32xf32>
    %129 = math.tanh %128 : vector<8x32xf32>
    %cst_42 = arith.constant 1.000000e+00 : f32
    %130 = vector.broadcast %cst_42 : f32 to vector<8x32xf32>
    %131 = arith.subf %130, %122 : vector<8x32xf32>
    %132 = arith.mulf %131, %129 : vector<8x32xf32>
    %133 = arith.mulf %122, %109 : vector<8x32xf32>
    %134 = arith.addf %132, %133 : vector<8x32xf32>
    %c32_43 = arith.constant 32 : index
    %c0_44 = arith.constant 0 : index
    %135 = vector.load %arg15[%c32_43, %c0_44] : memref<64x32xf32, #tpu.memory_space<vmem>>, vector<8x32xf32>
    tpu.vector_store %arg15[%c32_43, %c0_44], %134 {strides = array<i32>} : memref<64x32xf32, #tpu.memory_space<vmem>>, vector<8x32xf32>,
    %c40 = arith.constant 40 : index
    %c0_45 = arith.constant 0 : index
    %136 = vector.load %arg16[%c40, %c0_45] : memref<64x96xf32, #tpu.memory_space<vmem>>, vector<8x96xf32>
    %cst_46 = arith.constant dense<0.000000e+00> : vector<8x96xf32>
    %137 = tpu.matmul %134, %7, %cst_46 {dimension_numbers = #tpu.dot_dimension_numbers<[1], [0], [0], [1], [0, 0, 1, 1], [], []>} : vector<8x32xf32>, vector<32x96xf32>, vector<8x96xf32> -> vector<8x96xf32>
    %138 = vector.extract_strided_slice %136 {offsets = [0, 0], sizes = [8, 64], strides = [1, 1]} : vector<8x96xf32> to vector<8x64xf32>
    %139 = vector.extract_strided_slice %137 {offsets = [0, 0], sizes = [8, 64], strides = [1, 1]} : vector<8x96xf32> to vector<8x64xf32>
    %140 = arith.addf %138, %139 : vector<8x64xf32>
    %141 = arith.negf %140 : vector<8x64xf32>
    %142 = math.exp %141 : vector<8x64xf32>
    %cst_47 = arith.constant 1.000000e+00 : f32
    %143 = vector.broadcast %cst_47 : f32 to vector<8x64xf32>
    %144 = arith.addf %143, %142 : vector<8x64xf32>
    %145 = arith.divf %143, %144 : vector<8x64xf32>
    %146 = vector.extract_strided_slice %145 {offsets = [0, 0], sizes = [8, 32], strides = [1, 1]} : vector<8x64xf32> to vector<8x32xf32>
    %147 = vector.extract_strided_slice %145 {offsets = [0, 32], sizes = [8, 32], strides = [1, 1]} : vector<8x64xf32> to vector<8x32xf32>
    %148 = vector.extract_strided_slice %136 {offsets = [0, 64], sizes = [8, 32], strides = [1, 1]} : vector<8x96xf32> to vector<8x32xf32>
    %149 = vector.extract_strided_slice %137 {offsets = [0, 64], sizes = [8, 32], strides = [1, 1]} : vector<8x96xf32> to vector<8x32xf32>
    %150 = vector.broadcast %8 : vector<1x32xf32> to vector<8x32xf32>
    %151 = arith.addf %149, %150 : vector<8x32xf32>
    %152 = arith.mulf %146, %151 : vector<8x32xf32>
    %153 = arith.addf %148, %152 : vector<8x32xf32>
    %154 = math.tanh %153 : vector<8x32xf32>
    %cst_48 = arith.constant 1.000000e+00 : f32
    %155 = vector.broadcast %cst_48 : f32 to vector<8x32xf32>
    %156 = arith.subf %155, %147 : vector<8x32xf32>
    %157 = arith.mulf %156, %154 : vector<8x32xf32>
    %158 = arith.mulf %147, %134 : vector<8x32xf32>
    %159 = arith.addf %157, %158 : vector<8x32xf32>
    %c40_49 = arith.constant 40 : index
    %c0_50 = arith.constant 0 : index
    %160 = vector.load %arg15[%c40_49, %c0_50] : memref<64x32xf32, #tpu.memory_space<vmem>>, vector<8x32xf32>
    tpu.vector_store %arg15[%c40_49, %c0_50], %159 {strides = array<i32>} : memref<64x32xf32, #tpu.memory_space<vmem>>, vector<8x32xf32>,
    %c48 = arith.constant 48 : index
    %c0_51 = arith.constant 0 : index
    %161 = vector.load %arg16[%c48, %c0_51] : memref<64x96xf32, #tpu.memory_space<vmem>>, vector<8x96xf32>
    %cst_52 = arith.constant dense<0.000000e+00> : vector<8x96xf32>
    %162 = tpu.matmul %159, %7, %cst_52 {dimension_numbers = #tpu.dot_dimension_numbers<[1], [0], [0], [1], [0, 0, 1, 1], [], []>} : vector<8x32xf32>, vector<32x96xf32>, vector<8x96xf32> -> vector<8x96xf32>
    %163 = vector.extract_strided_slice %161 {offsets = [0, 0], sizes = [8, 64], strides = [1, 1]} : vector<8x96xf32> to vector<8x64xf32>
    %164 = vector.extract_strided_slice %162 {offsets = [0, 0], sizes = [8, 64], strides = [1, 1]} : vector<8x96xf32> to vector<8x64xf32>
    %165 = arith.addf %163, %164 : vector<8x64xf32>
    %166 = arith.negf %165 : vector<8x64xf32>
    %167 = math.exp %166 : vector<8x64xf32>
    %cst_53 = arith.constant 1.000000e+00 : f32
    %168 = vector.broadcast %cst_53 : f32 to vector<8x64xf32>
    %169 = arith.addf %168, %167 : vector<8x64xf32>
    %170 = arith.divf %168, %169 : vector<8x64xf32>
    %171 = vector.extract_strided_slice %170 {offsets = [0, 0], sizes = [8, 32], strides = [1, 1]} : vector<8x64xf32> to vector<8x32xf32>
    %172 = vector.extract_strided_slice %170 {offsets = [0, 32], sizes = [8, 32], strides = [1, 1]} : vector<8x64xf32> to vector<8x32xf32>
    %173 = vector.extract_strided_slice %161 {offsets = [0, 64], sizes = [8, 32], strides = [1, 1]} : vector<8x96xf32> to vector<8x32xf32>
    %174 = vector.extract_strided_slice %162 {offsets = [0, 64], sizes = [8, 32], strides = [1, 1]} : vector<8x96xf32> to vector<8x32xf32>
    %175 = vector.broadcast %8 : vector<1x32xf32> to vector<8x32xf32>
    %176 = arith.addf %174, %175 : vector<8x32xf32>
    %177 = arith.mulf %171, %176 : vector<8x32xf32>
    %178 = arith.addf %173, %177 : vector<8x32xf32>
    %179 = math.tanh %178 : vector<8x32xf32>
    %cst_54 = arith.constant 1.000000e+00 : f32
    %180 = vector.broadcast %cst_54 : f32 to vector<8x32xf32>
    %181 = arith.subf %180, %172 : vector<8x32xf32>
    %182 = arith.mulf %181, %179 : vector<8x32xf32>
    %183 = arith.mulf %172, %159 : vector<8x32xf32>
    %184 = arith.addf %182, %183 : vector<8x32xf32>
    %c48_55 = arith.constant 48 : index
    %c0_56 = arith.constant 0 : index
    %185 = vector.load %arg15[%c48_55, %c0_56] : memref<64x32xf32, #tpu.memory_space<vmem>>, vector<8x32xf32>
    tpu.vector_store %arg15[%c48_55, %c0_56], %184 {strides = array<i32>} : memref<64x32xf32, #tpu.memory_space<vmem>>, vector<8x32xf32>,
    %c56 = arith.constant 56 : index
    %c0_57 = arith.constant 0 : index
    %186 = vector.load %arg16[%c56, %c0_57] : memref<64x96xf32, #tpu.memory_space<vmem>>, vector<8x96xf32>
    %cst_58 = arith.constant dense<0.000000e+00> : vector<8x96xf32>
    %187 = tpu.matmul %184, %7, %cst_58 {dimension_numbers = #tpu.dot_dimension_numbers<[1], [0], [0], [1], [0, 0, 1, 1], [], []>} : vector<8x32xf32>, vector<32x96xf32>, vector<8x96xf32> -> vector<8x96xf32>
    %188 = vector.extract_strided_slice %186 {offsets = [0, 0], sizes = [8, 64], strides = [1, 1]} : vector<8x96xf32> to vector<8x64xf32>
    %189 = vector.extract_strided_slice %187 {offsets = [0, 0], sizes = [8, 64], strides = [1, 1]} : vector<8x96xf32> to vector<8x64xf32>
    %190 = arith.addf %188, %189 : vector<8x64xf32>
    %191 = arith.negf %190 : vector<8x64xf32>
    %192 = math.exp %191 : vector<8x64xf32>
    %cst_59 = arith.constant 1.000000e+00 : f32
    %193 = vector.broadcast %cst_59 : f32 to vector<8x64xf32>
    %194 = arith.addf %193, %192 : vector<8x64xf32>
    %195 = arith.divf %193, %194 : vector<8x64xf32>
    %196 = vector.extract_strided_slice %195 {offsets = [0, 0], sizes = [8, 32], strides = [1, 1]} : vector<8x64xf32> to vector<8x32xf32>
    %197 = vector.extract_strided_slice %195 {offsets = [0, 32], sizes = [8, 32], strides = [1, 1]} : vector<8x64xf32> to vector<8x32xf32>
    %198 = vector.extract_strided_slice %186 {offsets = [0, 64], sizes = [8, 32], strides = [1, 1]} : vector<8x96xf32> to vector<8x32xf32>
    %199 = vector.extract_strided_slice %187 {offsets = [0, 64], sizes = [8, 32], strides = [1, 1]} : vector<8x96xf32> to vector<8x32xf32>
    %200 = vector.broadcast %8 : vector<1x32xf32> to vector<8x32xf32>
    %201 = arith.addf %199, %200 : vector<8x32xf32>
    %202 = arith.mulf %196, %201 : vector<8x32xf32>
    %203 = arith.addf %198, %202 : vector<8x32xf32>
    %204 = math.tanh %203 : vector<8x32xf32>
    %cst_60 = arith.constant 1.000000e+00 : f32
    %205 = vector.broadcast %cst_60 : f32 to vector<8x32xf32>
    %206 = arith.subf %205, %197 : vector<8x32xf32>
    %207 = arith.mulf %206, %204 : vector<8x32xf32>
    %208 = arith.mulf %197, %184 : vector<8x32xf32>
    %209 = arith.addf %207, %208 : vector<8x32xf32>
    %c56_61 = arith.constant 56 : index
    %c0_62 = arith.constant 0 : index
    %210 = vector.load %arg15[%c56_61, %c0_62] : memref<64x32xf32, #tpu.memory_space<vmem>>, vector<8x32xf32>
    tpu.vector_store %arg15[%c56_61, %c0_62], %209 {strides = array<i32>} : memref<64x32xf32, #tpu.memory_space<vmem>>, vector<8x32xf32>,
    %c0_63 = arith.constant 0 : index
    %c0_64 = arith.constant 0 : index
    %c0_65 = arith.constant 0 : index
    %211 = vector.load %arg14[%c0_63, %c0_64, %c0_65] : memref<2x8x32xf32, #tpu.memory_space<vmem>>, vector<1x8x32xf32>
    %212 = vector.shape_cast %211 : vector<1x8x32xf32> to vector<8x32xf32>
    %213 = vector.shape_cast %209 : vector<8x32xf32> to vector<1x8x32xf32>
    tpu.vector_store %arg14[%c0_63, %c0_64, %c0_65], %213 {strides = array<i32>} : memref<2x8x32xf32, #tpu.memory_space<vmem>>, vector<1x8x32xf32>,
    %c0_66 = arith.constant 0 : index
    %c0_67 = arith.constant 0 : index
    %214 = vector.load %arg15[%c0_66, %c0_67] : memref<64x32xf32, #tpu.memory_space<vmem>>, vector<64x32xf32>
    %c0_68 = arith.constant 0 : index
    %c0_69 = arith.constant 0 : index
    %215 = vector.load %arg7[%c0_68, %c0_69] : memref<32x96xf32, #tpu.memory_space<vmem>>, vector<32x96xf32>
    %cst_70 = arith.constant dense<0.000000e+00> : vector<64x96xf32>
    %216 = tpu.matmul %214, %215, %cst_70 {dimension_numbers = #tpu.dot_dimension_numbers<[1], [0], [0], [1], [0, 0, 1, 1], [], []>} : vector<64x32xf32>, vector<32x96xf32>, vector<64x96xf32> -> vector<64x96xf32>
    %c0_71 = arith.constant 0 : index
    %c0_72 = arith.constant 0 : index
    %217 = vector.load %arg9[%c0_71, %c0_72] : memref<1x96xf32, #tpu.memory_space<vmem>>, vector<1x96xf32>
    %218 = vector.broadcast %217 : vector<1x96xf32> to vector<64x96xf32>
    %219 = arith.addf %216, %218 : vector<64x96xf32>
    %c0_73 = arith.constant 0 : index
    %c0_74 = arith.constant 0 : index
    %220 = vector.load %arg16[%c0_73, %c0_74] : memref<64x96xf32, #tpu.memory_space<vmem>>, vector<64x96xf32>
    tpu.vector_store %arg16[%c0_73, %c0_74], %219 {strides = array<i32>} : memref<64x96xf32, #tpu.memory_space<vmem>>, vector<64x96xf32>,
    %c0_75 = arith.constant 0 : index
    %c0_76 = arith.constant 0 : index
    %221 = vector.load %arg8[%c0_75, %c0_76] : memref<32x96xf32, #tpu.memory_space<vmem>>, vector<32x96xf32>
    %c0_77 = arith.constant 0 : index
    %c0_78 = arith.constant 0 : index
    %222 = vector.load %arg10[%c0_77, %c0_78] : memref<1x32xf32, #tpu.memory_space<vmem>>, vector<1x32xf32>
    %c1 = arith.constant 1 : index
    %c0_79 = arith.constant 0 : index
    %c0_80 = arith.constant 0 : index
    %223 = vector.load %arg2[%c1, %c0_79, %c0_80] : memref<2x8x32xf32, #tpu.memory_space<vmem>>, vector<1x8x32xf32>
    %224 = vector.shape_cast %223 : vector<1x8x32xf32> to vector<8x32xf32>
    %c0_81 = arith.constant 0 : index
    %c0_82 = arith.constant 0 : index
    %225 = vector.load %arg16[%c0_81, %c0_82] : memref<64x96xf32, #tpu.memory_space<vmem>>, vector<8x96xf32>
    %cst_83 = arith.constant dense<0.000000e+00> : vector<8x96xf32>
    %226 = tpu.matmul %224, %221, %cst_83 {dimension_numbers = #tpu.dot_dimension_numbers<[1], [0], [0], [1], [0, 0, 1, 1], [], []>} : vector<8x32xf32>, vector<32x96xf32>, vector<8x96xf32> -> vector<8x96xf32>
    %227 = vector.extract_strided_slice %225 {offsets = [0, 0], sizes = [8, 64], strides = [1, 1]} : vector<8x96xf32> to vector<8x64xf32>
    %228 = vector.extract_strided_slice %226 {offsets = [0, 0], sizes = [8, 64], strides = [1, 1]} : vector<8x96xf32> to vector<8x64xf32>
    %229 = arith.addf %227, %228 : vector<8x64xf32>
    %230 = arith.negf %229 : vector<8x64xf32>
    %231 = math.exp %230 : vector<8x64xf32>
    %cst_84 = arith.constant 1.000000e+00 : f32
    %232 = vector.broadcast %cst_84 : f32 to vector<8x64xf32>
    %233 = arith.addf %232, %231 : vector<8x64xf32>
    %234 = arith.divf %232, %233 : vector<8x64xf32>
    %235 = vector.extract_strided_slice %234 {offsets = [0, 0], sizes = [8, 32], strides = [1, 1]} : vector<8x64xf32> to vector<8x32xf32>
    %236 = vector.extract_strided_slice %234 {offsets = [0, 32], sizes = [8, 32], strides = [1, 1]} : vector<8x64xf32> to vector<8x32xf32>
    %237 = vector.extract_strided_slice %225 {offsets = [0, 64], sizes = [8, 32], strides = [1, 1]} : vector<8x96xf32> to vector<8x32xf32>
    %238 = vector.extract_strided_slice %226 {offsets = [0, 64], sizes = [8, 32], strides = [1, 1]} : vector<8x96xf32> to vector<8x32xf32>
    %239 = vector.broadcast %222 : vector<1x32xf32> to vector<8x32xf32>
    %240 = arith.addf %238, %239 : vector<8x32xf32>
    %241 = arith.mulf %235, %240 : vector<8x32xf32>
    %242 = arith.addf %237, %241 : vector<8x32xf32>
    %243 = math.tanh %242 : vector<8x32xf32>
    %cst_85 = arith.constant 1.000000e+00 : f32
    %244 = vector.broadcast %cst_85 : f32 to vector<8x32xf32>
    %245 = arith.subf %244, %236 : vector<8x32xf32>
    %246 = arith.mulf %245, %243 : vector<8x32xf32>
    %247 = arith.mulf %236, %224 : vector<8x32xf32>
    %248 = arith.addf %246, %247 : vector<8x32xf32>
    %c0_86 = arith.constant 0 : index
    %c0_87 = arith.constant 0 : index
    %249 = vector.load %arg15[%c0_86, %c0_87] : memref<64x32xf32, #tpu.memory_space<vmem>>, vector<8x32xf32>
    tpu.vector_store %arg15[%c0_86, %c0_87], %248 {strides = array<i32>} : memref<64x32xf32, #tpu.memory_space<vmem>>, vector<8x32xf32>,
    %c8_88 = arith.constant 8 : index
    %c0_89 = arith.constant 0 : index
    %250 = vector.load %arg16[%c8_88, %c0_89] : memref<64x96xf32, #tpu.memory_space<vmem>>, vector<8x96xf32>
    %cst_90 = arith.constant dense<0.000000e+00> : vector<8x96xf32>
    %251 = tpu.matmul %248, %221, %cst_90 {dimension_numbers = #tpu.dot_dimension_numbers<[1], [0], [0], [1], [0, 0, 1, 1], [], []>} : vector<8x32xf32>, vector<32x96xf32>, vector<8x96xf32> -> vector<8x96xf32>
    %252 = vector.extract_strided_slice %250 {offsets = [0, 0], sizes = [8, 64], strides = [1, 1]} : vector<8x96xf32> to vector<8x64xf32>
    %253 = vector.extract_strided_slice %251 {offsets = [0, 0], sizes = [8, 64], strides = [1, 1]} : vector<8x96xf32> to vector<8x64xf32>
    %254 = arith.addf %252, %253 : vector<8x64xf32>
    %255 = arith.negf %254 : vector<8x64xf32>
    %256 = math.exp %255 : vector<8x64xf32>
    %cst_91 = arith.constant 1.000000e+00 : f32
    %257 = vector.broadcast %cst_91 : f32 to vector<8x64xf32>
    %258 = arith.addf %257, %256 : vector<8x64xf32>
    %259 = arith.divf %257, %258 : vector<8x64xf32>
    %260 = vector.extract_strided_slice %259 {offsets = [0, 0], sizes = [8, 32], strides = [1, 1]} : vector<8x64xf32> to vector<8x32xf32>
    %261 = vector.extract_strided_slice %259 {offsets = [0, 32], sizes = [8, 32], strides = [1, 1]} : vector<8x64xf32> to vector<8x32xf32>
    %262 = vector.extract_strided_slice %250 {offsets = [0, 64], sizes = [8, 32], strides = [1, 1]} : vector<8x96xf32> to vector<8x32xf32>
    %263 = vector.extract_strided_slice %251 {offsets = [0, 64], sizes = [8, 32], strides = [1, 1]} : vector<8x96xf32> to vector<8x32xf32>
    %264 = vector.broadcast %222 : vector<1x32xf32> to vector<8x32xf32>
    %265 = arith.addf %263, %264 : vector<8x32xf32>
    %266 = arith.mulf %260, %265 : vector<8x32xf32>
    %267 = arith.addf %262, %266 : vector<8x32xf32>
    %268 = math.tanh %267 : vector<8x32xf32>
    %cst_92 = arith.constant 1.000000e+00 : f32
    %269 = vector.broadcast %cst_92 : f32 to vector<8x32xf32>
    %270 = arith.subf %269, %261 : vector<8x32xf32>
    %271 = arith.mulf %270, %268 : vector<8x32xf32>
    %272 = arith.mulf %261, %248 : vector<8x32xf32>
    %273 = arith.addf %271, %272 : vector<8x32xf32>
    %c8_93 = arith.constant 8 : index
    %c0_94 = arith.constant 0 : index
    %274 = vector.load %arg15[%c8_93, %c0_94] : memref<64x32xf32, #tpu.memory_space<vmem>>, vector<8x32xf32>
    tpu.vector_store %arg15[%c8_93, %c0_94], %273 {strides = array<i32>} : memref<64x32xf32, #tpu.memory_space<vmem>>, vector<8x32xf32>,
    %c16_95 = arith.constant 16 : index
    %c0_96 = arith.constant 0 : index
    %275 = vector.load %arg16[%c16_95, %c0_96] : memref<64x96xf32, #tpu.memory_space<vmem>>, vector<8x96xf32>
    %cst_97 = arith.constant dense<0.000000e+00> : vector<8x96xf32>
    %276 = tpu.matmul %273, %221, %cst_97 {dimension_numbers = #tpu.dot_dimension_numbers<[1], [0], [0], [1], [0, 0, 1, 1], [], []>} : vector<8x32xf32>, vector<32x96xf32>, vector<8x96xf32> -> vector<8x96xf32>
    %277 = vector.extract_strided_slice %275 {offsets = [0, 0], sizes = [8, 64], strides = [1, 1]} : vector<8x96xf32> to vector<8x64xf32>
    %278 = vector.extract_strided_slice %276 {offsets = [0, 0], sizes = [8, 64], strides = [1, 1]} : vector<8x96xf32> to vector<8x64xf32>
    %279 = arith.addf %277, %278 : vector<8x64xf32>
    %280 = arith.negf %279 : vector<8x64xf32>
    %281 = math.exp %280 : vector<8x64xf32>
    %cst_98 = arith.constant 1.000000e+00 : f32
    %282 = vector.broadcast %cst_98 : f32 to vector<8x64xf32>
    %283 = arith.addf %282, %281 : vector<8x64xf32>
    %284 = arith.divf %282, %283 : vector<8x64xf32>
    %285 = vector.extract_strided_slice %284 {offsets = [0, 0], sizes = [8, 32], strides = [1, 1]} : vector<8x64xf32> to vector<8x32xf32>
    %286 = vector.extract_strided_slice %284 {offsets = [0, 32], sizes = [8, 32], strides = [1, 1]} : vector<8x64xf32> to vector<8x32xf32>
    %287 = vector.extract_strided_slice %275 {offsets = [0, 64], sizes = [8, 32], strides = [1, 1]} : vector<8x96xf32> to vector<8x32xf32>
    %288 = vector.extract_strided_slice %276 {offsets = [0, 64], sizes = [8, 32], strides = [1, 1]} : vector<8x96xf32> to vector<8x32xf32>
    %289 = vector.broadcast %222 : vector<1x32xf32> to vector<8x32xf32>
    %290 = arith.addf %288, %289 : vector<8x32xf32>
    %291 = arith.mulf %285, %290 : vector<8x32xf32>
    %292 = arith.addf %287, %291 : vector<8x32xf32>
    %293 = math.tanh %292 : vector<8x32xf32>
    %cst_99 = arith.constant 1.000000e+00 : f32
    %294 = vector.broadcast %cst_99 : f32 to vector<8x32xf32>
    %295 = arith.subf %294, %286 : vector<8x32xf32>
    %296 = arith.mulf %295, %293 : vector<8x32xf32>
    %297 = arith.mulf %286, %273 : vector<8x32xf32>
    %298 = arith.addf %296, %297 : vector<8x32xf32>
    %c16_100 = arith.constant 16 : index
    %c0_101 = arith.constant 0 : index
    %299 = vector.load %arg15[%c16_100, %c0_101] : memref<64x32xf32, #tpu.memory_space<vmem>>, vector<8x32xf32>
    tpu.vector_store %arg15[%c16_100, %c0_101], %298 {strides = array<i32>} : memref<64x32xf32, #tpu.memory_space<vmem>>, vector<8x32xf32>,
    %c24_102 = arith.constant 24 : index
    %c0_103 = arith.constant 0 : index
    %300 = vector.load %arg16[%c24_102, %c0_103] : memref<64x96xf32, #tpu.memory_space<vmem>>, vector<8x96xf32>
    %cst_104 = arith.constant dense<0.000000e+00> : vector<8x96xf32>
    %301 = tpu.matmul %298, %221, %cst_104 {dimension_numbers = #tpu.dot_dimension_numbers<[1], [0], [0], [1], [0, 0, 1, 1], [], []>} : vector<8x32xf32>, vector<32x96xf32>, vector<8x96xf32> -> vector<8x96xf32>
    %302 = vector.extract_strided_slice %300 {offsets = [0, 0], sizes = [8, 64], strides = [1, 1]} : vector<8x96xf32> to vector<8x64xf32>
    %303 = vector.extract_strided_slice %301 {offsets = [0, 0], sizes = [8, 64], strides = [1, 1]} : vector<8x96xf32> to vector<8x64xf32>
    %304 = arith.addf %302, %303 : vector<8x64xf32>
    %305 = arith.negf %304 : vector<8x64xf32>
    %306 = math.exp %305 : vector<8x64xf32>
    %cst_105 = arith.constant 1.000000e+00 : f32
    %307 = vector.broadcast %cst_105 : f32 to vector<8x64xf32>
    %308 = arith.addf %307, %306 : vector<8x64xf32>
    %309 = arith.divf %307, %308 : vector<8x64xf32>
    %310 = vector.extract_strided_slice %309 {offsets = [0, 0], sizes = [8, 32], strides = [1, 1]} : vector<8x64xf32> to vector<8x32xf32>
    %311 = vector.extract_strided_slice %309 {offsets = [0, 32], sizes = [8, 32], strides = [1, 1]} : vector<8x64xf32> to vector<8x32xf32>
    %312 = vector.extract_strided_slice %300 {offsets = [0, 64], sizes = [8, 32], strides = [1, 1]} : vector<8x96xf32> to vector<8x32xf32>
    %313 = vector.extract_strided_slice %301 {offsets = [0, 64], sizes = [8, 32], strides = [1, 1]} : vector<8x96xf32> to vector<8x32xf32>
    %314 = vector.broadcast %222 : vector<1x32xf32> to vector<8x32xf32>
    %315 = arith.addf %313, %314 : vector<8x32xf32>
    %316 = arith.mulf %310, %315 : vector<8x32xf32>
    %317 = arith.addf %312, %316 : vector<8x32xf32>
    %318 = math.tanh %317 : vector<8x32xf32>
    %cst_106 = arith.constant 1.000000e+00 : f32
    %319 = vector.broadcast %cst_106 : f32 to vector<8x32xf32>
    %320 = arith.subf %319, %311 : vector<8x32xf32>
    %321 = arith.mulf %320, %318 : vector<8x32xf32>
    %322 = arith.mulf %311, %298 : vector<8x32xf32>
    %323 = arith.addf %321, %322 : vector<8x32xf32>
    %c24_107 = arith.constant 24 : index
    %c0_108 = arith.constant 0 : index
    %324 = vector.load %arg15[%c24_107, %c0_108] : memref<64x32xf32, #tpu.memory_space<vmem>>, vector<8x32xf32>
    tpu.vector_store %arg15[%c24_107, %c0_108], %323 {strides = array<i32>} : memref<64x32xf32, #tpu.memory_space<vmem>>, vector<8x32xf32>,
    %c32_109 = arith.constant 32 : index
    %c0_110 = arith.constant 0 : index
    %325 = vector.load %arg16[%c32_109, %c0_110] : memref<64x96xf32, #tpu.memory_space<vmem>>, vector<8x96xf32>
    %cst_111 = arith.constant dense<0.000000e+00> : vector<8x96xf32>
    %326 = tpu.matmul %323, %221, %cst_111 {dimension_numbers = #tpu.dot_dimension_numbers<[1], [0], [0], [1], [0, 0, 1, 1], [], []>} : vector<8x32xf32>, vector<32x96xf32>, vector<8x96xf32> -> vector<8x96xf32>
    %327 = vector.extract_strided_slice %325 {offsets = [0, 0], sizes = [8, 64], strides = [1, 1]} : vector<8x96xf32> to vector<8x64xf32>
    %328 = vector.extract_strided_slice %326 {offsets = [0, 0], sizes = [8, 64], strides = [1, 1]} : vector<8x96xf32> to vector<8x64xf32>
    %329 = arith.addf %327, %328 : vector<8x64xf32>
    %330 = arith.negf %329 : vector<8x64xf32>
    %331 = math.exp %330 : vector<8x64xf32>
    %cst_112 = arith.constant 1.000000e+00 : f32
    %332 = vector.broadcast %cst_112 : f32 to vector<8x64xf32>
    %333 = arith.addf %332, %331 : vector<8x64xf32>
    %334 = arith.divf %332, %333 : vector<8x64xf32>
    %335 = vector.extract_strided_slice %334 {offsets = [0, 0], sizes = [8, 32], strides = [1, 1]} : vector<8x64xf32> to vector<8x32xf32>
    %336 = vector.extract_strided_slice %334 {offsets = [0, 32], sizes = [8, 32], strides = [1, 1]} : vector<8x64xf32> to vector<8x32xf32>
    %337 = vector.extract_strided_slice %325 {offsets = [0, 64], sizes = [8, 32], strides = [1, 1]} : vector<8x96xf32> to vector<8x32xf32>
    %338 = vector.extract_strided_slice %326 {offsets = [0, 64], sizes = [8, 32], strides = [1, 1]} : vector<8x96xf32> to vector<8x32xf32>
    %339 = vector.broadcast %222 : vector<1x32xf32> to vector<8x32xf32>
    %340 = arith.addf %338, %339 : vector<8x32xf32>
    %341 = arith.mulf %335, %340 : vector<8x32xf32>
    %342 = arith.addf %337, %341 : vector<8x32xf32>
    %343 = math.tanh %342 : vector<8x32xf32>
    %cst_113 = arith.constant 1.000000e+00 : f32
    %344 = vector.broadcast %cst_113 : f32 to vector<8x32xf32>
    %345 = arith.subf %344, %336 : vector<8x32xf32>
    %346 = arith.mulf %345, %343 : vector<8x32xf32>
    %347 = arith.mulf %336, %323 : vector<8x32xf32>
    %348 = arith.addf %346, %347 : vector<8x32xf32>
    %c32_114 = arith.constant 32 : index
    %c0_115 = arith.constant 0 : index
    %349 = vector.load %arg15[%c32_114, %c0_115] : memref<64x32xf32, #tpu.memory_space<vmem>>, vector<8x32xf32>
    tpu.vector_store %arg15[%c32_114, %c0_115], %348 {strides = array<i32>} : memref<64x32xf32, #tpu.memory_space<vmem>>, vector<8x32xf32>,
    %c40_116 = arith.constant 40 : index
    %c0_117 = arith.constant 0 : index
    %350 = vector.load %arg16[%c40_116, %c0_117] : memref<64x96xf32, #tpu.memory_space<vmem>>, vector<8x96xf32>
    %cst_118 = arith.constant dense<0.000000e+00> : vector<8x96xf32>
    %351 = tpu.matmul %348, %221, %cst_118 {dimension_numbers = #tpu.dot_dimension_numbers<[1], [0], [0], [1], [0, 0, 1, 1], [], []>} : vector<8x32xf32>, vector<32x96xf32>, vector<8x96xf32> -> vector<8x96xf32>
    %352 = vector.extract_strided_slice %350 {offsets = [0, 0], sizes = [8, 64], strides = [1, 1]} : vector<8x96xf32> to vector<8x64xf32>
    %353 = vector.extract_strided_slice %351 {offsets = [0, 0], sizes = [8, 64], strides = [1, 1]} : vector<8x96xf32> to vector<8x64xf32>
    %354 = arith.addf %352, %353 : vector<8x64xf32>
    %355 = arith.negf %354 : vector<8x64xf32>
    %356 = math.exp %355 : vector<8x64xf32>
    %cst_119 = arith.constant 1.000000e+00 : f32
    %357 = vector.broadcast %cst_119 : f32 to vector<8x64xf32>
    %358 = arith.addf %357, %356 : vector<8x64xf32>
    %359 = arith.divf %357, %358 : vector<8x64xf32>
    %360 = vector.extract_strided_slice %359 {offsets = [0, 0], sizes = [8, 32], strides = [1, 1]} : vector<8x64xf32> to vector<8x32xf32>
    %361 = vector.extract_strided_slice %359 {offsets = [0, 32], sizes = [8, 32], strides = [1, 1]} : vector<8x64xf32> to vector<8x32xf32>
    %362 = vector.extract_strided_slice %350 {offsets = [0, 64], sizes = [8, 32], strides = [1, 1]} : vector<8x96xf32> to vector<8x32xf32>
    %363 = vector.extract_strided_slice %351 {offsets = [0, 64], sizes = [8, 32], strides = [1, 1]} : vector<8x96xf32> to vector<8x32xf32>
    %364 = vector.broadcast %222 : vector<1x32xf32> to vector<8x32xf32>
    %365 = arith.addf %363, %364 : vector<8x32xf32>
    %366 = arith.mulf %360, %365 : vector<8x32xf32>
    %367 = arith.addf %362, %366 : vector<8x32xf32>
    %368 = math.tanh %367 : vector<8x32xf32>
    %cst_120 = arith.constant 1.000000e+00 : f32
    %369 = vector.broadcast %cst_120 : f32 to vector<8x32xf32>
    %370 = arith.subf %369, %361 : vector<8x32xf32>
    %371 = arith.mulf %370, %368 : vector<8x32xf32>
    %372 = arith.mulf %361, %348 : vector<8x32xf32>
    %373 = arith.addf %371, %372 : vector<8x32xf32>
    %c40_121 = arith.constant 40 : index
    %c0_122 = arith.constant 0 : index
    %374 = vector.load %arg15[%c40_121, %c0_122] : memref<64x32xf32, #tpu.memory_space<vmem>>, vector<8x32xf32>
    tpu.vector_store %arg15[%c40_121, %c0_122], %373 {strides = array<i32>} : memref<64x32xf32, #tpu.memory_space<vmem>>, vector<8x32xf32>,
    %c48_123 = arith.constant 48 : index
    %c0_124 = arith.constant 0 : index
    %375 = vector.load %arg16[%c48_123, %c0_124] : memref<64x96xf32, #tpu.memory_space<vmem>>, vector<8x96xf32>
    %cst_125 = arith.constant dense<0.000000e+00> : vector<8x96xf32>
    %376 = tpu.matmul %373, %221, %cst_125 {dimension_numbers = #tpu.dot_dimension_numbers<[1], [0], [0], [1], [0, 0, 1, 1], [], []>} : vector<8x32xf32>, vector<32x96xf32>, vector<8x96xf32> -> vector<8x96xf32>
    %377 = vector.extract_strided_slice %375 {offsets = [0, 0], sizes = [8, 64], strides = [1, 1]} : vector<8x96xf32> to vector<8x64xf32>
    %378 = vector.extract_strided_slice %376 {offsets = [0, 0], sizes = [8, 64], strides = [1, 1]} : vector<8x96xf32> to vector<8x64xf32>
    %379 = arith.addf %377, %378 : vector<8x64xf32>
    %380 = arith.negf %379 : vector<8x64xf32>
    %381 = math.exp %380 : vector<8x64xf32>
    %cst_126 = arith.constant 1.000000e+00 : f32
    %382 = vector.broadcast %cst_126 : f32 to vector<8x64xf32>
    %383 = arith.addf %382, %381 : vector<8x64xf32>
    %384 = arith.divf %382, %383 : vector<8x64xf32>
    %385 = vector.extract_strided_slice %384 {offsets = [0, 0], sizes = [8, 32], strides = [1, 1]} : vector<8x64xf32> to vector<8x32xf32>
    %386 = vector.extract_strided_slice %384 {offsets = [0, 32], sizes = [8, 32], strides = [1, 1]} : vector<8x64xf32> to vector<8x32xf32>
    %387 = vector.extract_strided_slice %375 {offsets = [0, 64], sizes = [8, 32], strides = [1, 1]} : vector<8x96xf32> to vector<8x32xf32>
    %388 = vector.extract_strided_slice %376 {offsets = [0, 64], sizes = [8, 32], strides = [1, 1]} : vector<8x96xf32> to vector<8x32xf32>
    %389 = vector.broadcast %222 : vector<1x32xf32> to vector<8x32xf32>
    %390 = arith.addf %388, %389 : vector<8x32xf32>
    %391 = arith.mulf %385, %390 : vector<8x32xf32>
    %392 = arith.addf %387, %391 : vector<8x32xf32>
    %393 = math.tanh %392 : vector<8x32xf32>
    %cst_127 = arith.constant 1.000000e+00 : f32
    %394 = vector.broadcast %cst_127 : f32 to vector<8x32xf32>
    %395 = arith.subf %394, %386 : vector<8x32xf32>
    %396 = arith.mulf %395, %393 : vector<8x32xf32>
    %397 = arith.mulf %386, %373 : vector<8x32xf32>
    %398 = arith.addf %396, %397 : vector<8x32xf32>
    %c48_128 = arith.constant 48 : index
    %c0_129 = arith.constant 0 : index
    %399 = vector.load %arg15[%c48_128, %c0_129] : memref<64x32xf32, #tpu.memory_space<vmem>>, vector<8x32xf32>
    tpu.vector_store %arg15[%c48_128, %c0_129], %398 {strides = array<i32>} : memref<64x32xf32, #tpu.memory_space<vmem>>, vector<8x32xf32>,
    %c56_130 = arith.constant 56 : index
    %c0_131 = arith.constant 0 : index
    %400 = vector.load %arg16[%c56_130, %c0_131] : memref<64x96xf32, #tpu.memory_space<vmem>>, vector<8x96xf32>
    %cst_132 = arith.constant dense<0.000000e+00> : vector<8x96xf32>
    %401 = tpu.matmul %398, %221, %cst_132 {dimension_numbers = #tpu.dot_dimension_numbers<[1], [0], [0], [1], [0, 0, 1, 1], [], []>} : vector<8x32xf32>, vector<32x96xf32>, vector<8x96xf32> -> vector<8x96xf32>
    %402 = vector.extract_strided_slice %400 {offsets = [0, 0], sizes = [8, 64], strides = [1, 1]} : vector<8x96xf32> to vector<8x64xf32>
    %403 = vector.extract_strided_slice %401 {offsets = [0, 0], sizes = [8, 64], strides = [1, 1]} : vector<8x96xf32> to vector<8x64xf32>
    %404 = arith.addf %402, %403 : vector<8x64xf32>
    %405 = arith.negf %404 : vector<8x64xf32>
    %406 = math.exp %405 : vector<8x64xf32>
    %cst_133 = arith.constant 1.000000e+00 : f32
    %407 = vector.broadcast %cst_133 : f32 to vector<8x64xf32>
    %408 = arith.addf %407, %406 : vector<8x64xf32>
    %409 = arith.divf %407, %408 : vector<8x64xf32>
    %410 = vector.extract_strided_slice %409 {offsets = [0, 0], sizes = [8, 32], strides = [1, 1]} : vector<8x64xf32> to vector<8x32xf32>
    %411 = vector.extract_strided_slice %409 {offsets = [0, 32], sizes = [8, 32], strides = [1, 1]} : vector<8x64xf32> to vector<8x32xf32>
    %412 = vector.extract_strided_slice %400 {offsets = [0, 64], sizes = [8, 32], strides = [1, 1]} : vector<8x96xf32> to vector<8x32xf32>
    %413 = vector.extract_strided_slice %401 {offsets = [0, 64], sizes = [8, 32], strides = [1, 1]} : vector<8x96xf32> to vector<8x32xf32>
    %414 = vector.broadcast %222 : vector<1x32xf32> to vector<8x32xf32>
    %415 = arith.addf %413, %414 : vector<8x32xf32>
    %416 = arith.mulf %410, %415 : vector<8x32xf32>
    %417 = arith.addf %412, %416 : vector<8x32xf32>
    %418 = math.tanh %417 : vector<8x32xf32>
    %cst_134 = arith.constant 1.000000e+00 : f32
    %419 = vector.broadcast %cst_134 : f32 to vector<8x32xf32>
    %420 = arith.subf %419, %411 : vector<8x32xf32>
    %421 = arith.mulf %420, %418 : vector<8x32xf32>
    %422 = arith.mulf %411, %398 : vector<8x32xf32>
    %423 = arith.addf %421, %422 : vector<8x32xf32>
    %c56_135 = arith.constant 56 : index
    %c0_136 = arith.constant 0 : index
    %424 = vector.load %arg15[%c56_135, %c0_136] : memref<64x32xf32, #tpu.memory_space<vmem>>, vector<8x32xf32>
    tpu.vector_store %arg15[%c56_135, %c0_136], %423 {strides = array<i32>} : memref<64x32xf32, #tpu.memory_space<vmem>>, vector<8x32xf32>,
    %c1_137 = arith.constant 1 : index
    %c0_138 = arith.constant 0 : index
    %c0_139 = arith.constant 0 : index
    %425 = vector.load %arg14[%c1_137, %c0_138, %c0_139] : memref<2x8x32xf32, #tpu.memory_space<vmem>>, vector<1x8x32xf32>
    %426 = vector.shape_cast %425 : vector<1x8x32xf32> to vector<8x32xf32>
    %427 = vector.shape_cast %423 : vector<8x32xf32> to vector<1x8x32xf32>
    tpu.vector_store %arg14[%c1_137, %c0_138, %c0_139], %427 {strides = array<i32>} : memref<2x8x32xf32, #tpu.memory_space<vmem>>, vector<1x8x32xf32>,
    %c0_140 = arith.constant 0 : index
    %c0_141 = arith.constant 0 : index
    %428 = vector.load %arg11[%c0_140, %c0_141] : memref<32x128xf32, #tpu.memory_space<vmem>>, vector<32x128xf32>
    %c0_142 = arith.constant 0 : index
    %c0_143 = arith.constant 0 : index
    %429 = vector.load %arg12[%c0_142, %c0_143] : memref<1x128xf32, #tpu.memory_space<vmem>>, vector<1x128xf32>
    %c0_144 = arith.constant 0 : index
    %c0_145 = arith.constant 0 : index
    %430 = tpu.strided_load %arg15[%c0_144, %c0_145] {strides = array<i32: 8, 1>} : memref<64x32xf32, #tpu.memory_space<vmem>>, vector<8x32xf32>
    %cst_146 = arith.constant dense<0.000000e+00> : vector<8x128xf32>
    %431 = tpu.matmul %430, %428, %cst_146 {dimension_numbers = #tpu.dot_dimension_numbers<[1], [0], [0], [1], [0, 0, 1, 1], [], []>} : vector<8x32xf32>, vector<32x128xf32>, vector<8x128xf32> -> vector<8x128xf32>
    %432 = vector.broadcast %429 : vector<1x128xf32> to vector<8x128xf32>
    %433 = arith.addf %431, %432 : vector<8x128xf32>
    %c0_147 = arith.constant 0 : index
    %c0_148 = arith.constant 0 : index
    %c0_149 = arith.constant 0 : index
    %434 = vector.load %arg13[%c0_147, %c0_148, %c0_149] : memref<2x8x128xf32, #tpu.memory_space<vmem>>, vector<1x8x128xf32>
    %435 = vector.shape_cast %434 : vector<1x8x128xf32> to vector<8x128xf32>
    %436 = vector.shape_cast %433 : vector<8x128xf32> to vector<1x8x128xf32>
    tpu.vector_store %arg13[%c0_147, %c0_148, %c0_149], %436 {strides = array<i32>} : memref<2x8x128xf32, #tpu.memory_space<vmem>>, vector<1x8x128xf32>,
    %c1_150 = arith.constant 1 : index
    %c0_151 = arith.constant 0 : index
    %437 = tpu.strided_load %arg15[%c1_150, %c0_151] {strides = array<i32: 8, 1>} : memref<64x32xf32, #tpu.memory_space<vmem>>, vector<8x32xf32>
    %cst_152 = arith.constant dense<0.000000e+00> : vector<8x128xf32>
    %438 = tpu.matmul %437, %428, %cst_152 {dimension_numbers = #tpu.dot_dimension_numbers<[1], [0], [0], [1], [0, 0, 1, 1], [], []>} : vector<8x32xf32>, vector<32x128xf32>, vector<8x128xf32> -> vector<8x128xf32>
    %439 = vector.broadcast %429 : vector<1x128xf32> to vector<8x128xf32>
    %440 = arith.addf %438, %439 : vector<8x128xf32>
    %c1_153 = arith.constant 1 : index
    %c0_154 = arith.constant 0 : index
    %c0_155 = arith.constant 0 : index
    %441 = vector.load %arg13[%c1_153, %c0_154, %c0_155] : memref<2x8x128xf32, #tpu.memory_space<vmem>>, vector<1x8x128xf32>
    %442 = vector.shape_cast %441 : vector<1x8x128xf32> to vector<8x128xf32>
    %443 = vector.shape_cast %440 : vector<8x128xf32> to vector<1x8x128xf32>
    tpu.vector_store %arg13[%c1_153, %c0_154, %c0_155], %443 {strides = array<i32>} : memref<2x8x128xf32, #tpu.memory_space<vmem>>, vector<1x8x128xf32>,
    return
  }
  func.func @transform_0(%arg0: i32) -> (i32, i32) {
    %c0_i32 = arith.constant 0 : i32
    %c0_i32_0 = arith.constant 0 : i32
    %c0_i32_1 = arith.constant 0 : i32
    return %c0_i32, %c0_i32_0 : i32, i32
  }
  func.func @transform_1(%arg0: i32) -> (i32, i32, i32) {
    %c0_i32 = arith.constant 0 : i32
    %c0_i32_0 = arith.constant 0 : i32
    %c0_i32_1 = arith.constant 0 : i32
    %c0_i32_2 = arith.constant 0 : i32
    return %c0_i32, %c0_i32_0, %c0_i32_1 : i32, i32, i32
  }
  func.func @transform_2(%arg0: i32) -> (i32, i32) {
    %c0_i32 = arith.constant 0 : i32
    %c0_i32_0 = arith.constant 0 : i32
    %c0_i32_1 = arith.constant 0 : i32
    return %c0_i32, %c0_i32_0 : i32, i32
  }
  func.func @transform_3(%arg0: i32) -> (i32, i32) {
    %c0_i32 = arith.constant 0 : i32
    %c0_i32_0 = arith.constant 0 : i32
    %c0_i32_1 = arith.constant 0 : i32
    return %c0_i32, %c0_i32_0 : i32, i32
  }
  func.func @transform_4(%arg0: i32) -> (i32, i32) {
    %c0_i32 = arith.constant 0 : i32
    %c0_i32_0 = arith.constant 0 : i32
    %c0_i32_1 = arith.constant 0 : i32
    return %c0_i32, %c0_i32_0 : i32, i32
  }
  func.func @transform_5(%arg0: i32) -> (i32, i32) {
    %c0_i32 = arith.constant 0 : i32
    %c0_i32_0 = arith.constant 0 : i32
    %c0_i32_1 = arith.constant 0 : i32
    return %c0_i32, %c0_i32_0 : i32, i32
  }
  func.func @transform_6(%arg0: i32) -> (i32, i32) {
    %c0_i32 = arith.constant 0 : i32
    %c0_i32_0 = arith.constant 0 : i32
    %c0_i32_1 = arith.constant 0 : i32
    return %c0_i32, %c0_i32_0 : i32, i32
  }
  func.func @transform_7(%arg0: i32) -> (i32, i32) {
    %c0_i32 = arith.constant 0 : i32
    %c0_i32_0 = arith.constant 0 : i32
    %c0_i32_1 = arith.constant 0 : i32
    return %c0_i32, %c0_i32_0 : i32, i32
  }
  func.func @transform_8(%arg0: i32) -> (i32, i32) {
    %c0_i32 = arith.constant 0 : i32
    %c0_i32_0 = arith.constant 0 : i32
    %c0_i32_1 = arith.constant 0 : i32
    return %c0_i32, %c0_i32_0 : i32, i32
  }
  func.func @transform_9(%arg0: i32) -> (i32, i32) {
    %c0_i32 = arith.constant 0 : i32
    %c0_i32_0 = arith.constant 0 : i32
    %c0_i32_1 = arith.constant 0 : i32
    return %c0_i32, %c0_i32_0 : i32, i32
  }
  func.func @transform_10(%arg0: i32) -> (i32, i32) {
    %c0_i32 = arith.constant 0 : i32
    %c0_i32_0 = arith.constant 0 : i32
    %c0_i32_1 = arith.constant 0 : i32
    return %c0_i32, %c0_i32_0 : i32, i32
  }
  func.func @transform_11(%arg0: i32) -> (i32, i32) {
    %c0_i32 = arith.constant 0 : i32
    %c0_i32_0 = arith.constant 0 : i32
    %c0_i32_1 = arith.constant 0 : i32
    return %c0_i32, %c0_i32_0 : i32, i32
  }
  func.func @transform_12(%arg0: i32) -> (i32, i32, i32) {
    %c0_i32 = arith.constant 0 : i32
    %c0_i32_0 = arith.constant 0 : i32
    %c0_i32_1 = arith.constant 0 : i32
    %c0_i32_2 = arith.constant 0 : i32
    return %c0_i32, %c0_i32_0, %c0_i32_1 : i32, i32, i32
  }
  func.func @transform_13(%arg0: i32) -> (i32, i32, i32) {
    %c0_i32 = arith.constant 0 : i32
    %c0_i32_0 = arith.constant 0 : i32
    %c0_i32_1 = arith.constant 0 : i32
    %c0_i32_2 = arith.constant 0 : i32
    return %c0_i32, %c0_i32_0, %c0_i32_1 : i32, i32, i32
  }
}

</mosaic_0001>

<llo_original>
// kernel: tpu_custom_call.1
$region0: #{tpu_custom_call.1}
  #allocation0 [shape = 'u32[]', space=smem, size = 0x4, offset = 0x4, fixed_abs, tag = 'smem constant byte address 0x4 - core index']
  #allocation1 [shape = 'u32[144,128]{1,0:T(1,128)}', space=vmem, size = 0x12000, scoped, tag = 'internal scratch']
  #allocation2 [shape = 'f32[64,32]{1,0:T(8,128)}', space=vmem, size = 0x8000, scoped, tag = 'scratch operand']
  #allocation3 [shape = 'f32[64,96]{1,0:T(8,128)}', space=vmem, size = 0x8000, scoped, tag = 'scratch operand']
  %s0 = inlined_call_operand.hbm [shape: f32[64,64], index: 0, kind: input, shape index: {}]
  %s1 = inlined_call_operand.hbm [shape: f32[2,8,32], index: 1, kind: input, shape index: {}]
  %s2 = inlined_call_operand.hbm [shape: f32[64,96], index: 2, kind: input, shape index: {}]
  %s3 = inlined_call_operand.hbm [shape: f32[32,96], index: 3, kind: input, shape index: {}]
  %s4 = inlined_call_operand.vmem [shape: f32[1,96], index: 4, kind: input, shape index: {}]
  %s5 = inlined_call_operand.vmem [shape: f32[1,32], index: 5, kind: input, shape index: {}]
  %s6 = inlined_call_operand.hbm [shape: f32[32,96], index: 6, kind: input, shape index: {}]
  %s7 = inlined_call_operand.hbm [shape: f32[32,96], index: 7, kind: input, shape index: {}]
  %s8 = inlined_call_operand.vmem [shape: f32[1,96], index: 8, kind: input, shape index: {}]
  %s9 = inlined_call_operand.vmem [shape: f32[1,32], index: 9, kind: input, shape index: {}]
  %s10 = inlined_call_operand.vmem [shape: f32[32,128], index: 10, kind: input, shape index: {}]
  %s11 = inlined_call_operand.vmem [shape: f32[1,128], index: 11, kind: input, shape index: {}]
  %s12 = inlined_call_operand.hbm [shape: f32[2,8,128], index: 12, kind: output, shape index: {0}]
  %s13 = inlined_call_operand.hbm [shape: f32[2,8,32], index: 13, kind: output, shape index: {1}]
  %14 = xla_tuple %s12, %s13
  %s15 = sld [smem:[#allocation0]]
  $region90: #{tpu_custom_call.1} parent=0
    _
  %s17 = ssub.s32 1, %s15
  %s18 = scalar_select 0, %s17, %s15
  $region1: #{tpu_custom_call.1} parent=0
    #allocation4 [shape = 'u8[32768]{0}', space=vmem, size = 0x8000, scoped, tag = 'input window, operand 0, single buffered']
    #allocation5 [shape = 's32[1]{0}', space=sflag, size = 0x4, scoped, tag = 'scoped memory for tpu_custom_call.1']
    #allocation6 [shape = 's32[1]{0}', space=sflag, size = 0x4, scoped, tag = 'scoped memory for tpu_custom_call.1']
    #allocation7 [shape = 'u8[8192]{0}', space=vmem, size = 0x2000, scoped, tag = 'input window, operand 1, single buffered']
    #allocation8 [shape = 's32[1]{0}', space=sflag, size = 0x4, scoped, tag = 'scoped memory for tpu_custom_call.1']
    #allocation9 [shape = 'u8[32768]{0}', space=vmem, size = 0x8000, scoped, tag = 'input window, operand 2, single buffered']
    #allocation10 [shape = 'u8[16384]{0}', space=vmem, size = 0x4000, scoped, tag = 'input window, operand 3, single buffered']
    #allocation11 [shape = 's32[1]{0}', space=sflag, size = 0x4, scoped, tag = 'scoped memory for tpu_custom_call.1']
    #allocation12 [shape = 'u8[16384]{0}', space=vmem, size = 0x4000, scoped, tag = 'input window, operand 6, single buffered']
    #allocation13 [shape = 'u8[16384]{0}', space=vmem, size = 0x4000, scoped, tag = 'input window, operand 7, single buffered']
    #allocation14 [shape = 's32[1]{0}', space=sflag, size = 0x4, scoped, tag = 'scoped memory for tpu_custom_call.1']
    #allocation15 [shape = 'u8[8192]{0}', space=vmem, size = 0x2000, scoped, tag = 'output window, operand 0, single buffered']
    #allocation16 [shape = 'u8[8192]{0}', space=vmem, size = 0x2000, scoped, tag = 'output window, operand 1, single buffered']
    #allocation17 [shape = 's32[1]{0}', space=sflag, size = 0x4, scoped, tag = 'scoped memory for tpu_custom_call.1']
    %19 = vsyncpa [#allocation5], 0
    %20 = vsyncpa [#allocation8], 0
    %21 = vsyncpa [#allocation11], 0
    %22 = vsyncpa [#allocation14], 0
    %23 = vsyncpa [#allocation6], 0
    %24 = vsyncpa [#allocation17], 0
    // Predicated region
    $region2: #{tpu_custom_call.1} parent=1 // pred_check
      _
    $region3: #{tpu_custom_call.1} parent=1 // pred_check_branch
      %26 = sbr.rel (0) target = $region5
    $region4: #{tpu_custom_call.1} parent=1 // pred_region
      %s28 = ssub.s32 1024, 1024
      %29 = vsyncadd [#allocation5], %s28
      %s30 = sshll.u32 [#allocation4], 4
      %s31 = int_to_ptr.vmem [resolvable:$true] %s30
      %36 = dma.hbm_to_vmem [thread:$0]  %s0, 1024, %s31, [#allocation5], 128, 128, 8
    $region5: #{tpu_custom_call.1} parent=1 // pred_fallthru
      _
    // Predicated region
    $region6: #{tpu_custom_call.1} parent=1 // pred_check
      _
    $region7: #{tpu_custom_call.1} parent=1 // pred_check_branch
      %38 = sbr.rel (0) target = $region9
    $region8: #{tpu_custom_call.1} parent=1 // pred_region
      %s40 = ssub.s32 256, 256
      %41 = vsyncadd [#allocation8], %s40
      %s42 = sshll.u32 [#allocation7], 4
      %s43 = int_to_ptr.vmem [resolvable:$true] %s42
      %48 = dma.hbm_to_vmem [thread:$0]  %s1, 256, %s43, [#allocation8], 128, 128, 8
    $region9: #{tpu_custom_call.1} parent=1 // pred_fallthru
      _
    // Predicated region
    $region10: #{tpu_custom_call.1} parent=1 // pred_check
      _
    $region11: #{tpu_custom_call.1} parent=1 // pred_check_branch
      %50 = sbr.rel (0) target = $region13
    $region12: #{tpu_custom_call.1} parent=1 // pred_region
      %s52 = ssub.s32 1024, 1024
      %53 = vsyncadd [#allocation8], %s52
      %s54 = sshll.u32 [#allocation9], 4
      %s55 = int_to_ptr.vmem [resolvable:$true] %s54
      %60 = dma.hbm_to_vmem [thread:$0]  %s2, 1024, %s55, [#allocation8], 128, 128, 8
    $region13: #{tpu_custom_call.1} parent=1 // pred_fallthru
      _
    // Predicated region
    $region14: #{tpu_custom_call.1} parent=1 // pred_check
      _
    $region15: #{tpu_custom_call.1} parent=1 // pred_check_branch
      %62 = sbr.rel (0) target = $region17
    $region16: #{tpu_custom_call.1} parent=1 // pred_region
      %s64 = ssub.s32 512, 512
      %65 = vsyncadd [#allocation11], %s64
      %s66 = sshll.u32 [#allocation10], 4
      %s67 = int_to_ptr.vmem [resolvable:$true] %s66
      %72 = dma.hbm_to_vmem [thread:$0]  %s3, 512, %s67, [#allocation11], 128, 128, 8
    $region17: #{tpu_custom_call.1} parent=1 // pred_fallthru
      _
    // Predicated region
    $region18: #{tpu_custom_call.1} parent=1 // pred_check
      _
    $region19: #{tpu_custom_call.1} parent=1 // pred_check_branch
      %74 = sbr.rel (0) target = $region21
    $region20: #{tpu_custom_call.1} parent=1 // pred_region
      _
    $region21: #{tpu_custom_call.1} parent=1 // pred_fallthru
      _
    // Predicated region
    $region22: #{tpu_custom_call.1} parent=1 // pred_check
      _
    $region23: #{tpu_custom_call.1} parent=1 // pred_check_branch
      %76 = sbr.rel (0) target = $region25
    $region24: #{tpu_custom_call.1} parent=1 // pred_region
      _
    $region25: #{tpu_custom_call.1} parent=1 // pred_fallthru
      _
    // Predicated region
    $region26: #{tpu_custom_call.1} parent=1 // pred_check
      _
    $region27: #{tpu_custom_call.1} parent=1 // pred_check_branch
      %78 = sbr.rel (0) target = $region29
    $region28: #{tpu_custom_call.1} parent=1 // pred_region
      %s80 = ssub.s32 512, 512
      %81 = vsyncadd [#allocation11], %s80
      %s82 = sshll.u32 [#allocation12], 4
      %s83 = int_to_ptr.vmem [resolvable:$true] %s82
      %88 = dma.hbm_to_vmem [thread:$0]  %s6, 512, %s83, [#allocation11], 128, 128, 8
    $region29: #{tpu_custom_call.1} parent=1 // pred_fallthru
      _
    // Predicated region
    $region30: #{tpu_custom_call.1} parent=1 // pred_check
      _
    $region31: #{tpu_custom_call.1} parent=1 // pred_check_branch
      %90 = sbr.rel (0) target = $region33
    $region32: #{tpu_custom_call.1} parent=1 // pred_region
      %s92 = ssub.s32 512, 512
      %93 = vsyncadd [#allocation14], %s92
      %s94 = sshll.u32 [#allocation13], 4
      %s95 = int_to_ptr.vmem [resolvable:$true] %s94
      %100 = dma.hbm_to_vmem [thread:$0]  %s7, 512, %s95, [#allocation14], 128, 128, 8
    $region33: #{tpu_custom_call.1} parent=1 // pred_fallthru
      _
    // Predicated region
    $region34: #{tpu_custom_call.1} parent=1 // pred_check
      _
    $region35: #{tpu_custom_call.1} parent=1 // pred_check_branch
      %102 = sbr.rel (0) target = $region37
    $region36: #{tpu_custom_call.1} parent=1 // pred_region
      _
    $region37: #{tpu_custom_call.1} parent=1 // pred_fallthru
      _
    // Predicated region
    $region38: #{tpu_custom_call.1} parent=1 // pred_check
      _
    $region39: #{tpu_custom_call.1} parent=1 // pred_check_branch
      %104 = sbr.rel (0) target = $region41
    $region40: #{tpu_custom_call.1} parent=1 // pred_region
      _
    $region41: #{tpu_custom_call.1} parent=1 // pred_fallthru
      _
    // Predicated region
    $region42: #{tpu_custom_call.1} parent=1 // pred_check
      _
    $region43: #{tpu_custom_call.1} parent=1 // pred_check_branch
      %106 = sbr.rel (0) target = $region45
    $region44: #{tpu_custom_call.1} parent=1 // pred_region
      _
    $region45: #{tpu_custom_call.1} parent=1 // pred_fallthru
      _
    // Predicated region
    $region46: #{tpu_custom_call.1} parent=1 // pred_check
      _
    $region47: #{tpu_custom_call.1} parent=1 // pred_check_branch
      %108 = sbr.rel (0) target = $region49
    $region48: #{tpu_custom_call.1} parent=1 // pred_region
      _
    $region49: #{tpu_custom_call.1} parent=1 // pred_fallthru
      _
    // Predicated region
    $region50: #{tpu_custom_call.1} parent=1 // pred_check
      _
    $region51: #{tpu_custom_call.1} parent=1 // pred_check_branch
      %110 = sbr.rel (0) target = $region53
    $region52: #{tpu_custom_call.1} parent=1 // pred_region
      %111 = dma.done [#allocation5], 1024
    $region53: #{tpu_custom_call.1} parent=1 // pred_fallthru
      _
    // Predicated region
    $region54: #{tpu_custom_call.1} parent=1 // pred_check
      _
    $region55: #{tpu_custom_call.1} parent=1 // pred_check_branch
      %113 = sbr.rel (0) target = $region57
    $region56: #{tpu_custom_call.1} parent=1 // pred_region
      %114 = dma.done [#allocation8], 256
    $region57: #{tpu_custom_call.1} parent=1 // pred_fallthru
      _
    // Predicated region
    $region58: #{tpu_custom_call.1} parent=1 // pred_check
      _
    $region59: #{tpu_custom_call.1} parent=1 // pred_check_branch
      %116 = sbr.rel (0) target = $region61
    $region60: #{tpu_custom_call.1} parent=1 // pred_region
      %117 = dma.done [#allocation8], 1024
    $region61: #{tpu_custom_call.1} parent=1 // pred_fallthru
      _
    // Predicated region
    $region62: #{tpu_custom_call.1} parent=1 // pred_check
      _
    $region63: #{tpu_custom_call.1} parent=1 // pred_check_branch
      %119 = sbr.rel (0) target = $region65
    $region64: #{tpu_custom_call.1} parent=1 // pred_region
      %120 = dma.done [#allocation11], 512
    $region65: #{tpu_custom_call.1} parent=1 // pred_fallthru
      _
    // Predicated region
    $region66: #{tpu_custom_call.1} parent=1 // pred_check
      _
    $region67: #{tpu_custom_call.1} parent=1 // pred_check_branch
      %122 = sbr.rel (0) target = $region69
    $region68: #{tpu_custom_call.1} parent=1 // pred_region
      %123 = dma.done [#allocation11], 512
    $region69: #{tpu_custom_call.1} parent=1 // pred_fallthru
      _
    // Predicated region
    $region70: #{tpu_custom_call.1} parent=1 // pred_check
      _
    $region71: #{tpu_custom_call.1} parent=1 // pred_check_branch
      %125 = sbr.rel (0) target = $region73
    $region72: #{tpu_custom_call.1} parent=1 // pred_region
      %126 = dma.done [#allocation14], 512
    $region73: #{tpu_custom_call.1} parent=1 // pred_fallthru
      _
    %v127 = vld [vmem:[#allocation4] sm:$0xff]
    %v128 = vld [vmem:[#allocation4 + $0x8] sm:$0xff]
    %v129 = vld [vmem:[#allocation4 + $0x10] sm:$0xff]
    %v130 = vld [vmem:[#allocation4 + $0x18] sm:$0xff]
    %v131 = vld [vmem:[#allocation4 + $0x20] sm:$0xff]
    %v132 = vld [vmem:[#allocation4 + $0x28] sm:$0xff]
    %v133 = vld [vmem:[#allocation4 + $0x30] sm:$0xff]
    %v134 = vld [vmem:[#allocation4 + $0x38] sm:$0xff]
    %v135 = vld [vmem:[#allocation9] sm:$0xff]
    %v136 = vld [vmem:[#allocation9 + $0x8] sm:$0xff]
    %v137 = vld [vmem:[#allocation9 + $0x10] sm:$0xff]
    %v138 = vld [vmem:[#allocation9 + $0x18] sm:$0xff]
    %v139 = vld [vmem:[#allocation9 + $0x20] sm:$0xff]
    %v140 = vld [vmem:[#allocation9 + $0x28] sm:$0xff]
    %v141 = vld [vmem:[#allocation9 + $0x30] sm:$0xff]
    %v142 = vld [vmem:[#allocation9 + $0x38] sm:$0xff]
    %v143 = vld [vmem:[%s4] sm:$0x1]
    %v145 = vlaneseq
    %v146 = vshrl.u32 %v145, 7
    %v147 = vsub.s32 0, %v146
    %v148 = vrot.slane %v143, %v147
    %vm150 = vcmask 523264
    %v152 = vsel %vm150, %v127, 0
    %v155 = vsel %vm150, %v128, 0
    %v158 = vsel %vm150, %v129, 0
    %v161 = vsel %vm150, %v130, 0
    %v164 = vsel %vm150, %v131, 0
    %v167 = vsel %vm150, %v132, 0
    %v170 = vsel %vm150, %v133, 0
    %v173 = vsel %vm150, %v134, 0
    %175 = vmatprep.subr.mxu0 0.0
    %176 = vmatpush1.msra.mxu0 %v135
    %177 = vmatprep.subr.mxu0 0.0
    %178 = vmatpush1.msra.mxu0 %v136
    %179 = vmatprep.subr.mxu0 0.0
    %180 = vmatpush1.msra.mxu0 %v137
    %181 = vmatprep.subr.mxu0 0.0
    %182 = vmatpush1.msra.mxu0 %v138
    %183 = vmatprep.subr.mxu0 0.0
    %184 = vmatpush1.msra.mxu0 %v139
    %185 = vmatprep.subr.mxu0 0.0
    %186 = vmatpush1.msra.mxu0 %v140
    %187 = vmatprep.subr.mxu0 0.0
    %188 = vmatpush1.msra.mxu0 %v141
    %189 = vmatprep.subr.mxu0 0.0
    %190 = vmatpush1.msra.mxu0 %v142
    %191 = vmatprep.subr.mxu0 0.0
    %192 = vmatpush1.msra.mxu0 0.0
    %193 = vmatprep.subr.mxu0 0.0
    %194 = vmatpush1.msra.mxu0 0.0
    %195 = vmatprep.subr.mxu0 0.0
    %196 = vmatpush1.msra.mxu0 0.0
    %197 = vmatprep.subr.mxu0 0.0
    %198 = vmatpush1.msra.mxu0 0.0
    %199 = vmatprep.subr.mxu0 0.0
    %200 = vmatpush1.msra.mxu0 0.0
    %201 = vmatprep.subr.mxu0 0.0
    %202 = vmatpush1.msra.mxu0 0.0
    %203 = vmatprep.subr.mxu0 0.0
    %204 = vmatpush1.msra.mxu0 0.0
    %205 = vmatprep.subr.mxu0 0.0
    %206 = vmatpush1.msra.mxu0 0.0
    %207 = vmatprep.subr.mxu0 0.0
    %208 = vmatpush1.msra.mxu0 0.0
    %209 = vmatprep.subr.mxu0 0.0
    %210 = vmatpush1.msra.mxu0 0.0
    %211 = vmatprep.subr.mxu0 0.0
    %212 = vmatpush1.msra.mxu0 0.0
    %213 = vmatprep.subr.mxu0 0.0
    %214 = vmatpush1.msra.mxu0 0.0
    %215 = vmatprep.subr.mxu0 0.0
    %216 = vmatpush1.msra.mxu0 0.0
    %217 = vmatprep.subr.mxu0 0.0
    %218 = vmatpush1.msra.mxu0 0.0
    %219 = vmatprep.subr.mxu0 0.0
    %220 = vmatpush1.msra.mxu0 0.0
    %221 = vmatprep.subr.mxu0 0.0
    %222 = vmatpush1.msra.mxu0 0.0
    %223 = vmatprep.subr.mxu0 0.0
    %224 = vmatpush1.msra.mxu0 0.0
    %225 = vmatprep.subr.mxu0 0.0
    %226 = vmatpush1.msra.mxu0 0.0
    %227 = vmatprep.subr.mxu0 0.0
    %228 = vmatpush1.msra.mxu0 0.0
    %229 = vmatprep.subr.mxu0 0.0
    %230 = vmatpush1.msra.mxu0 0.0
    %231 = vmatprep.subr.mxu0 0.0
    %232 = vmatpush1.msra.mxu0 0.0
    %233 = vmatprep.subr.mxu0 0.0
    %234 = vmatpush1.msra.mxu0 0.0
    %235 = vmatprep.subr.mxu0 0.0
    %236 = vmatpush1.msra.mxu0 0.0
    %237 = vmatprep.subr.mxu0 0.0
    %238 = vmatpush1.msra.mxu0 0.0
    %239 = vmatprep.mubr.f32.mxu0 0.0
    %240 = vmatmul.mubr.f32.gmra.mrb[0].mxu0 %v152
    %v241 = vpop.f32.mrb[0].mxu0
    %v242 = vadd.f32 %v148, %v241
    %v243 = vpop.f32.mrb[0].mxu0
    %244 = vmatprep.mubr.f32.mxu0 0.0
    %245 = vmatmul.mubr.f32.gmra.mrb[0].mxu0 %v155
    %v246 = vpop.f32.mrb[0].mxu0
    %v247 = vadd.f32 %v148, %v246
    %v248 = vpop.f32.mrb[0].mxu0
    %249 = vmatprep.mubr.f32.mxu0 0.0
    %250 = vmatmul.mubr.f32.gmra.mrb[0].mxu0 %v158
    %v251 = vpop.f32.mrb[0].mxu0
    %v252 = vadd.f32 %v148, %v251
    %v253 = vpop.f32.mrb[0].mxu0
    %254 = vmatprep.mubr.f32.mxu0 0.0
    %255 = vmatmul.mubr.f32.gmra.mrb[0].mxu0 %v161
    %v256 = vpop.f32.mrb[0].mxu0
    %v257 = vadd.f32 %v148, %v256
    %v258 = vpop.f32.mrb[0].mxu0
    %259 = vmatprep.mubr.f32.mxu0 0.0
    %260 = vmatmul.mubr.f32.gmra.mrb[0].mxu0 %v164
    %v261 = vpop.f32.mrb[0].mxu0
    %v262 = vadd.f32 %v148, %v261
    %v263 = vpop.f32.mrb[0].mxu0
    %264 = vmatprep.mubr.f32.mxu0 0.0
    %265 = vmatmul.mubr.f32.gmra.mrb[0].mxu0 %v167
    %v266 = vpop.f32.mrb[0].mxu0
    %v267 = vadd.f32 %v148, %v266
    %v268 = vpop.f32.mrb[0].mxu0
    %269 = vmatprep.mubr.f32.mxu0 0.0
    %270 = vmatmul.mubr.f32.gmra.mrb[0].mxu0 %v170
    %v271 = vpop.f32.mrb[0].mxu0
    %v272 = vadd.f32 %v148, %v271
    %v273 = vpop.f32.mrb[0].mxu0
    %274 = vmatprep.mubr.f32.mxu0 0.0
    %275 = vmatmul.mubr.f32.gmra.mrb[0].mxu0 %v173
    %v276 = vpop.f32.mrb[0].mxu0
    %v277 = vadd.f32 %v148, %v276
    %v278 = vpop.f32.mrb[0].mxu0
    %279 = vdwg.mxu0
    %vm280 = vcmask 785408
    %281 = vst.msk [vmem:[#allocation3] sm:$0xff] %vm280, %v242
    %282 = vst.msk [vmem:[#allocation3 + $0x8] sm:$0xff] %vm280, %v247
    %283 = vst.msk [vmem:[#allocation3 + $0x10] sm:$0xff] %vm280, %v252
    %284 = vst.msk [vmem:[#allocation3 + $0x18] sm:$0xff] %vm280, %v257
    %285 = vst.msk [vmem:[#allocation3 + $0x20] sm:$0xff] %vm280, %v262
    %286 = vst.msk [vmem:[#allocation3 + $0x28] sm:$0xff] %vm280, %v267
    %287 = vst.msk [vmem:[#allocation3 + $0x30] sm:$0xff] %vm280, %v272
    %288 = vst.msk [vmem:[#allocation3 + $0x38] sm:$0xff] %vm280, %v277
    %v289 = vld [vmem:[#allocation10] sm:$0xff]
    %v290 = vld [vmem:[#allocation10 + $0x8] sm:$0xff]
    %v291 = vld [vmem:[#allocation10 + $0x10] sm:$0xff]
    %v292 = vld [vmem:[#allocation10 + $0x18] sm:$0xff]
    %v293 = vld [vmem:[%s5] sm:$0x1]
    %v294 = vld [vmem:[#allocation7] sm:$0xff]
    %v295 = vld [vmem:[#allocation3] sm:$0xff]
    %vm296 = vcmask 261120
    %v298 = vsel %vm296, %v294, 0
    %300 = vmatprep.subr.mxu0 0.0
    %301 = vmatpush1.msra.mxu0 %v289
    %302 = vmatprep.subr.mxu0 0.0
    %303 = vmatpush1.msra.mxu0 %v290
    %304 = vmatprep.subr.mxu0 0.0
    %305 = vmatpush1.msra.mxu0 %v291
    %306 = vmatprep.subr.mxu0 0.0
    %307 = vmatpush1.msra.mxu0 %v292
    %308 = vmatprep.subr.mxu0 0.0
    %309 = vmatpush1.msra.mxu0 0.0
    %310 = vmatprep.subr.mxu0 0.0
    %311 = vmatpush1.msra.mxu0 0.0
    %312 = vmatprep.subr.mxu0 0.0
    %313 = vmatpush1.msra.mxu0 0.0
    %314 = vmatprep.subr.mxu0 0.0
    %315 = vmatpush1.msra.mxu0 0.0
    %316 = vmatprep.subr.mxu0 0.0
    %317 = vmatpush1.msra.mxu0 0.0
    %318 = vmatprep.subr.mxu0 0.0
    %319 = vmatpush1.msra.mxu0 0.0
    %320 = vmatprep.subr.mxu0 0.0
    %321 = vmatpush1.msra.mxu0 0.0
    %322 = vmatprep.subr.mxu0 0.0
    %323 = vmatpush1.msra.mxu0 0.0
    %324 = vmatprep.subr.mxu0 0.0
    %325 = vmatpush1.msra.mxu0 0.0
    %326 = vmatprep.subr.mxu0 0.0
    %327 = vmatpush1.msra.mxu0 0.0
    %328 = vmatprep.subr.mxu0 0.0
    %329 = vmatpush1.msra.mxu0 0.0
    %330 = vmatprep.subr.mxu0 0.0
    %331 = vmatpush1.msra.mxu0 0.0
    %332 = vmatprep.subr.mxu0 0.0
    %333 = vmatpush1.msra.mxu0 0.0
    %334 = vmatprep.subr.mxu0 0.0
    %335 = vmatpush1.msra.mxu0 0.0
    %336 = vmatprep.subr.mxu0 0.0
    %337 = vmatpush1.msra.mxu0 0.0
    %338 = vmatprep.subr.mxu0 0.0
    %339 = vmatpush1.msra.mxu0 0.0
    %340 = vmatprep.subr.mxu0 0.0
    %341 = vmatpush1.msra.mxu0 0.0
    %342 = vmatprep.subr.mxu0 0.0
    %343 = vmatpush1.msra.mxu0 0.0
    %344 = vmatprep.subr.mxu0 0.0
    %345 = vmatpush1.msra.mxu0 0.0
    %346 = vmatprep.subr.mxu0 0.0
    %347 = vmatpush1.msra.mxu0 0.0
    %348 = vmatprep.subr.mxu0 0.0
    %349 = vmatpush1.msra.mxu0 0.0
    %350 = vmatprep.subr.mxu0 0.0
    %351 = vmatpush1.msra.mxu0 0.0
    %352 = vmatprep.subr.mxu0 0.0
    %353 = vmatpush1.msra.mxu0 0.0
    %354 = vmatprep.subr.mxu0 0.0
    %355 = vmatpush1.msra.mxu0 0.0
    %356 = vmatprep.subr.mxu0 0.0
    %357 = vmatpush1.msra.mxu0 0.0
    %358 = vmatprep.subr.mxu0 0.0
    %359 = vmatpush1.msra.mxu0 0.0
    %360 = vmatprep.subr.mxu0 0.0
    %361 = vmatpush1.msra.mxu0 0.0
    %362 = vmatprep.subr.mxu0 0.0
    %363 = vmatpush1.msra.mxu0 0.0
    %364 = vmatprep.mubr.f32.mxu0 0.0
    %365 = vmatmul.mubr.f32.gmra.mrb[0].mxu0 %v298
    %v366 = vpop.f32.mrb[0].mxu0
    %v367 = vadd.f32 0.0, %v366
    %v368 = vpop.f32.mrb[0].mxu0
    %369 = vdwg.mxu0
    %v370 = vadd.f32 %v295, %v367
    %v371 = vxor.u32 %v370, 2147483648
    %v372 = vmul.f32 %v371, 1.442695
    %v373 = vpow.pop %v372
    %v374 = vadd.f32 %v373, 1.0
    %v375 = vrcp.pop %v374
    %v376 = vmul.f32 1.0, %v375
    %v378 = vlaneseq
    %v379 = vshrl.u32 %v378, 7
    %v380 = vsub.s32 0, %v379
    %v381 = vrot.slane %v293, %v380
    %382 = vrot.lane.b32.xlu0 %v381, 64
    %v383 = vpop.permute.xlu0 %382
    %v385 = vadd.f32 %v367, %v383
    %387 = vrot.lane.b32.xlu0 %v385, 64
    %v388 = vpop.permute.xlu0 %387
    %v390 = vmul.f32 %v376, %v388
    %392 = vrot.lane.b32.xlu0 %v390, 64
    %v393 = vpop.permute.xlu0 %392
    %v395 = vadd.f32 %v295, %v393
    %v396 = vtanh.pop %v395
    %v397 = vsub.f32 1.0, %v376
    %399 = vrot.lane.b32.xlu0 %v396, 96
    %v400 = vpop.permute.xlu0 %399
    %v402 = vmul.f32 %v397, %v400
    %403 = vrot.lane.b32.xlu0 %v294, 32
    %v404 = vpop.permute.xlu0 %403
    %v406 = vmul.f32 %v376, %v404
    %v407 = vadd.f32 %v402, %v406
    %409 = vrot.lane.b32.xlu0 %v407, 96
    %v410 = vpop.permute.xlu0 %409
    %412 = vst.msk [vmem:[#allocation2] sm:$0xff] %vm296, %v410
    %v413 = vld [vmem:[#allocation3 + $0x8] sm:$0xff]
    %v414 = vsel %vm296, %v410, 0
    %416 = vmatprep.subr.mxu0 0.0
    %417 = vmatpush1.msra.mxu0 %v289
    %418 = vmatprep.subr.mxu0 0.0
    %419 = vmatpush1.msra.mxu0 %v290
    %420 = vmatprep.subr.mxu0 0.0
    %421 = vmatpush1.msra.mxu0 %v291
    %422 = vmatprep.subr.mxu0 0.0
    %423 = vmatpush1.msra.mxu0 %v292
    %424 = vmatprep.subr.mxu0 0.0
    %425 = vmatpush1.msra.mxu0 0.0
    %426 = vmatprep.subr.mxu0 0.0
    %427 = vmatpush1.msra.mxu0 0.0
    %428 = vmatprep.subr.mxu0 0.0
    %429 = vmatpush1.msra.mxu0 0.0
    %430 = vmatprep.subr.mxu0 0.0
    %431 = vmatpush1.msra.mxu0 0.0
    %432 = vmatprep.subr.mxu0 0.0
    %433 = vmatpush1.msra.mxu0 0.0
    %434 = vmatprep.subr.mxu0 0.0
    %435 = vmatpush1.msra.mxu0 0.0
    %436 = vmatprep.subr.mxu0 0.0
    %437 = vmatpush1.msra.mxu0 0.0
    %438 = vmatprep.subr.mxu0 0.0
    %439 = vmatpush1.msra.mxu0 0.0
    %440 = vmatprep.subr.mxu0 0.0
    %441 = vmatpush1.msra.mxu0 0.0
    %442 = vmatprep.subr.mxu0 0.0
    %443 = vmatpush1.msra.mxu0 0.0
    %444 = vmatprep.subr.mxu0 0.0
    %445 = vmatpush1.msra.mxu0 0.0
    %446 = vmatprep.subr.mxu0 0.0
    %447 = vmatpush1.msra.mxu0 0.0
    %448 = vmatprep.subr.mxu0 0.0
    %449 = vmatpush1.msra.mxu0 0.0
    %450 = vmatprep.subr.mxu0 0.0
    %451 = vmatpush1.msra.mxu0 0.0
    %452 = vmatprep.subr.mxu0 0.0
    %453 = vmatpush1.msra.mxu0 0.0
    %454 = vmatprep.subr.mxu0 0.0
    %455 = vmatpush1.msra.mxu0 0.0
    %456 = vmatprep.subr.mxu0 0.0
    %457 = vmatpush1.msra.mxu0 0.0
    %458 = vmatprep.subr.mxu0 0.0
    %459 = vmatpush1.msra.mxu0 0.0
    %460 = vmatprep.subr.mxu0 0.0
    %461 = vmatpush1.msra.mxu0 0.0
    %462 = vmatprep.subr.mxu0 0.0
    %463 = vmatpush1.msra.mxu0 0.0
    %464 = vmatprep.subr.mxu0 0.0
    %465 = vmatpush1.msra.mxu0 0.0
    %466 = vmatprep.subr.mxu0 0.0
    %467 = vmatpush1.msra.mxu0 0.0
    %468 = vmatprep.subr.mxu0 0.0
    %469 = vmatpush1.msra.mxu0 0.0
    %470 = vmatprep.subr.mxu0 0.0
    %471 = vmatpush1.msra.mxu0 0.0
    %472 = vmatprep.subr.mxu0 0.0
    %473 = vmatpush1.msra.mxu0 0.0
    %474 = vmatprep.subr.mxu0 0.0
    %475 = vmatpush1.msra.mxu0 0.0
    %476 = vmatprep.subr.mxu0 0.0
    %477 = vmatpush1.msra.mxu0 0.0
    %478 = vmatprep.subr.mxu0 0.0
    %479 = vmatpush1.msra.mxu0 0.0
    %480 = vmatprep.mubr.f32.mxu0 0.0
    %481 = vmatmul.mubr.f32.gmra.mrb[0].mxu0 %v414
    %v482 = vpop.f32.mrb[0].mxu0
    %v483 = vadd.f32 0.0, %v482
    %v484 = vpop.f32.mrb[0].mxu0
    %485 = vdwg.mxu0
    %v486 = vadd.f32 %v413, %v483
    %v487 = vxor.u32 %v486, 2147483648
    %v488 = vmul.f32 %v487, 1.442695
    %v489 = vpow.pop %v488
    %v490 = vadd.f32 %v489, 1.0
    %v491 = vrcp.pop %v490
    %v492 = vmul.f32 1.0, %v491
    %v493 = vadd.f32 %v483, %v383
    %495 = vrot.lane.b32.xlu0 %v493, 64
    %v496 = vpop.permute.xlu0 %495
    %v498 = vmul.f32 %v492, %v496
    %500 = vrot.lane.b32.xlu0 %v498, 64
    %v501 = vpop.permute.xlu0 %500
    %v503 = vadd.f32 %v413, %v501
    %v504 = vtanh.pop %v503
    %v505 = vsub.f32 1.0, %v492
    %507 = vrot.lane.b32.xlu0 %v504, 96
    %v508 = vpop.permute.xlu0 %507
    %v510 = vmul.f32 %v505, %v508
    %v511 = vmul.f32 %v492, %v407
    %v512 = vadd.f32 %v510, %v511
    %514 = vrot.lane.b32.xlu0 %v512, 96
    %v515 = vpop.permute.xlu0 %514
    %517 = vst.msk [vmem:[#allocation2 + $0x8] sm:$0xff] %vm296, %v515
    %v518 = vld [vmem:[#allocation3 + $0x10] sm:$0xff]
    %v519 = vsel %vm296, %v515, 0
    %521 = vmatprep.subr.mxu0 0.0
    %522 = vmatpush1.msra.mxu0 %v289
    %523 = vmatprep.subr.mxu0 0.0
    %524 = vmatpush1.msra.mxu0 %v290
    %525 = vmatprep.subr.mxu0 0.0
    %526 = vmatpush1.msra.mxu0 %v291
    %527 = vmatprep.subr.mxu0 0.0
    %528 = vmatpush1.msra.mxu0 %v292
    %529 = vmatprep.subr.mxu0 0.0
    %530 = vmatpush1.msra.mxu0 0.0
    %531 = vmatprep.subr.mxu0 0.0
    %532 = vmatpush1.msra.mxu0 0.0
    %533 = vmatprep.subr.mxu0 0.0
    %534 = vmatpush1.msra.mxu0 0.0
    %535 = vmatprep.subr.mxu0 0.0
    %536 = vmatpush1.msra.mxu0 0.0
    %537 = vmatprep.subr.mxu0 0.0
    %538 = vmatpush1.msra.mxu0 0.0
    %539 = vmatprep.subr.mxu0 0.0
    %540 = vmatpush1.msra.mxu0 0.0
    %541 = vmatprep.subr.mxu0 0.0
    %542 = vmatpush1.msra.mxu0 0.0
    %543 = vmatprep.subr.mxu0 0.0
    %544 = vmatpush1.msra.mxu0 0.0
    %545 = vmatprep.subr.mxu0 0.0
    %546 = vmatpush1.msra.mxu0 0.0
    %547 = vmatprep.subr.mxu0 0.0
    %548 = vmatpush1.msra.mxu0 0.0
    %549 = vmatprep.subr.mxu0 0.0
    %550 = vmatpush1.msra.mxu0 0.0
    %551 = vmatprep.subr.mxu0 0.0
    %552 = vmatpush1.msra.mxu0 0.0
    %553 = vmatprep.subr.mxu0 0.0
    %554 = vmatpush1.msra.mxu0 0.0
    %555 = vmatprep.subr.mxu0 0.0
    %556 = vmatpush1.msra.mxu0 0.0
    %557 = vmatprep.subr.mxu0 0.0
    %558 = vmatpush1.msra.mxu0 0.0
    %559 = vmatprep.subr.mxu0 0.0
    %560 = vmatpush1.msra.mxu0 0.0
    %561 = vmatprep.subr.mxu0 0.0
    %562 = vmatpush1.msra.mxu0 0.0
    %563 = vmatprep.subr.mxu0 0.0
    %564 = vmatpush1.msra.mxu0 0.0
    %565 = vmatprep.subr.mxu0 0.0
    %566 = vmatpush1.msra.mxu0 0.0
    %567 = vmatprep.subr.mxu0 0.0
    %568 = vmatpush1.msra.mxu0 0.0
    %569 = vmatprep.subr.mxu0 0.0
    %570 = vmatpush1.msra.mxu0 0.0
    %571 = vmatprep.subr.mxu0 0.0
    %572 = vmatpush1.msra.mxu0 0.0
    %573 = vmatprep.subr.mxu0 0.0
    %574 = vmatpush1.msra.mxu0 0.0
    %575 = vmatprep.subr.mxu0 0.0
    %576 = vmatpush1.msra.mxu0 0.0
    %577 = vmatprep.subr.mxu0 0.0
    %578 = vmatpush1.msra.mxu0 0.0
    %579 = vmatprep.subr.mxu0 0.0
    %580 = vmatpush1.msra.mxu0 0.0
    %581 = vmatprep.subr.mxu0 0.0
    %582 = vmatpush1.msra.mxu0 0.0
    %583 = vmatprep.subr.mxu0 0.0
    %584 = vmatpush1.msra.mxu0 0.0
    %585 = vmatprep.mubr.f32.mxu0 0.0
    %586 = vmatmul.mubr.f32.gmra.mrb[0].mxu0 %v519
    %v587 = vpop.f32.mrb[0].mxu0
    %v588 = vadd.f32 0.0, %v587
    %v589 = vpop.f32.mrb[0].mxu0
    %590 = vdwg.mxu0
    %v591 = vadd.f32 %v518, %v588
    %v592 = vxor.u32 %v591, 2147483648
    %v593 = vmul.f32 %v592, 1.442695
    %v594 = vpow.pop %v593
    %v595 = vadd.f32 %v594, 1.0
    %v596 = vrcp.pop %v595
    %v597 = vmul.f32 1.0, %v596
    %v598 = vadd.f32 %v588, %v383
    %600 = vrot.lane.b32.xlu0 %v598, 64
    %v601 = vpop.permute.xlu0 %600
    %v603 = vmul.f32 %v597, %v601
    %605 = vrot.lane.b32.xlu0 %v603, 64
    %v606 = vpop.permute.xlu0 %605
    %v608 = vadd.f32 %v518, %v606
    %v609 = vtanh.pop %v608
    %v610 = vsub.f32 1.0, %v597
    %612 = vrot.lane.b32.xlu0 %v609, 96
    %v613 = vpop.permute.xlu0 %612
    %v615 = vmul.f32 %v610, %v613
    %v616 = vmul.f32 %v597, %v512
    %v617 = vadd.f32 %v615, %v616
    %619 = vrot.lane.b32.xlu0 %v617, 96
    %v620 = vpop.permute.xlu0 %619
    %622 = vst.msk [vmem:[#allocation2 + $0x10] sm:$0xff] %vm296, %v620
    %v623 = vld [vmem:[#allocation3 + $0x18] sm:$0xff]
    %v624 = vsel %vm296, %v620, 0
    %626 = vmatprep.subr.mxu0 0.0
    %627 = vmatpush1.msra.mxu0 %v289
    %628 = vmatprep.subr.mxu0 0.0
    %629 = vmatpush1.msra.mxu0 %v290
    %630 = vmatprep.subr.mxu0 0.0
    %631 = vmatpush1.msra.mxu0 %v291
    %632 = vmatprep.subr.mxu0 0.0
    %633 = vmatpush1.msra.mxu0 %v292
    %634 = vmatprep.subr.mxu0 0.0
    %635 = vmatpush1.msra.mxu0 0.0
    %636 = vmatprep.subr.mxu0 0.0
    %637 = vmatpush1.msra.mxu0 0.0
    %638 = vmatprep.subr.mxu0 0.0
    %639 = vmatpush1.msra.mxu0 0.0
    %640 = vmatprep.subr.mxu0 0.0
    %641 = vmatpush1.msra.mxu0 0.0
    %642 = vmatprep.subr.mxu0 0.0
    %643 = vmatpush1.msra.mxu0 0.0
    %644 = vmatprep.subr.mxu0 0.0
    %645 = vmatpush1.msra.mxu0 0.0
    %646 = vmatprep.subr.mxu0 0.0
    %647 = vmatpush1.msra.mxu0 0.0
    %648 = vmatprep.subr.mxu0 0.0
    %649 = vmatpush1.msra.mxu0 0.0
    %650 = vmatprep.subr.mxu0 0.0
    %651 = vmatpush1.msra.mxu0 0.0
    %652 = vmatprep.subr.mxu0 0.0
    %653 = vmatpush1.msra.mxu0 0.0
    %654 = vmatprep.subr.mxu0 0.0
    %655 = vmatpush1.msra.mxu0 0.0
    %656 = vmatprep.subr.mxu0 0.0
    %657 = vmatpush1.msra.mxu0 0.0
    %658 = vmatprep.subr.mxu0 0.0
    %659 = vmatpush1.msra.mxu0 0.0
    %660 = vmatprep.subr.mxu0 0.0
    %661 = vmatpush1.msra.mxu0 0.0
    %662 = vmatprep.subr.mxu0 0.0
    %663 = vmatpush1.msra.mxu0 0.0
    %664 = vmatprep.subr.mxu0 0.0
    %665 = vmatpush1.msra.mxu0 0.0
    %666 = vmatprep.subr.mxu0 0.0
    %667 = vmatpush1.msra.mxu0 0.0
    %668 = vmatprep.subr.mxu0 0.0
    %669 = vmatpush1.msra.mxu0 0.0
    %670 = vmatprep.subr.mxu0 0.0
    %671 = vmatpush1.msra.mxu0 0.0
    %672 = vmatprep.subr.mxu0 0.0
    %673 = vmatpush1.msra.mxu0 0.0
    %674 = vmatprep.subr.mxu0 0.0
    %675 = vmatpush1.msra.mxu0 0.0
    %676 = vmatprep.subr.mxu0 0.0
    %677 = vmatpush1.msra.mxu0 0.0
    %678 = vmatprep.subr.mxu0 0.0
    %679 = vmatpush1.msra.mxu0 0.0
    %680 = vmatprep.subr.mxu0 0.0
    %681 = vmatpush1.msra.mxu0 0.0
    %682 = vmatprep.subr.mxu0 0.0
    %683 = vmatpush1.msra.mxu0 0.0
    %684 = vmatprep.subr.mxu0 0.0
    %685 = vmatpush1.msra.mxu0 0.0
    %686 = vmatprep.subr.mxu0 0.0
    %687 = vmatpush1.msra.mxu0 0.0
    %688 = vmatprep.subr.mxu0 0.0
    %689 = vmatpush1.msra.mxu0 0.0
    %690 = vmatprep.mubr.f32.mxu0 0.0
    %691 = vmatmul.mubr.f32.gmra.mrb[0].mxu0 %v624
    %v692 = vpop.f32.mrb[0].mxu0
    %v693 = vadd.f32 0.0, %v692
    %v694 = vpop.f32.mrb[0].mxu0
    %695 = vdwg.mxu0
    %v696 = vadd.f32 %v623, %v693
    %v697 = vxor.u32 %v696, 2147483648
    %v698 = vmul.f32 %v697, 1.442695
    %v699 = vpow.pop %v698
    %v700 = vadd.f32 %v699, 1.0
    %v701 = vrcp.pop %v700
    %v702 = vmul.f32 1.0, %v701
    %v703 = vadd.f32 %v693, %v383
    %705 = vrot.lane.b32.xlu0 %v703, 64
    %v706 = vpop.permute.xlu0 %705
    %v708 = vmul.f32 %v702, %v706
    %710 = vrot.lane.b32.xlu0 %v708, 64
    %v711 = vpop.permute.xlu0 %710
    %v713 = vadd.f32 %v623, %v711
    %v714 = vtanh.pop %v713
    %v715 = vsub.f32 1.0, %v702
    %717 = vrot.lane.b32.xlu0 %v714, 96
    %v718 = vpop.permute.xlu0 %717
    %v720 = vmul.f32 %v715, %v718
    %v721 = vmul.f32 %v702, %v617
    %v722 = vadd.f32 %v720, %v721
    %724 = vrot.lane.b32.xlu0 %v722, 96
    %v725 = vpop.permute.xlu0 %724
    %727 = vst.msk [vmem:[#allocation2 + $0x18] sm:$0xff] %vm296, %v725
    %v728 = vld [vmem:[#allocation3 + $0x20] sm:$0xff]
    %v729 = vsel %vm296, %v725, 0
    %731 = vmatprep.subr.mxu0 0.0
    %732 = vmatpush1.msra.mxu0 %v289
    %733 = vmatprep.subr.mxu0 0.0
    %734 = vmatpush1.msra.mxu0 %v290
    %735 = vmatprep.subr.mxu0 0.0
    %736 = vmatpush1.msra.mxu0 %v291
    %737 = vmatprep.subr.mxu0 0.0
    %738 = vmatpush1.msra.mxu0 %v292
    %739 = vmatprep.subr.mxu0 0.0
    %740 = vmatpush1.msra.mxu0 0.0
    %741 = vmatprep.subr.mxu0 0.0
    %742 = vmatpush1.msra.mxu0 0.0
    %743 = vmatprep.subr.mxu0 0.0
    %744 = vmatpush1.msra.mxu0 0.0
    %745 = vmatprep.subr.mxu0 0.0
    %746 = vmatpush1.msra.mxu0 0.0
    %747 = vmatprep.subr.mxu0 0.0
    %748 = vmatpush1.msra.mxu0 0.0
    %749 = vmatprep.subr.mxu0 0.0
    %750 = vmatpush1.msra.mxu0 0.0
    %751 = vmatprep.subr.mxu0 0.0
    %752 = vmatpush1.msra.mxu0 0.0
    %753 = vmatprep.subr.mxu0 0.0
    %754 = vmatpush1.msra.mxu0 0.0
    %755 = vmatprep.subr.mxu0 0.0
    %756 = vmatpush1.msra.mxu0 0.0
    %757 = vmatprep.subr.mxu0 0.0
    %758 = vmatpush1.msra.mxu0 0.0
    %759 = vmatprep.subr.mxu0 0.0
    %760 = vmatpush1.msra.mxu0 0.0
    %761 = vmatprep.subr.mxu0 0.0
    %762 = vmatpush1.msra.mxu0 0.0
    %763 = vmatprep.subr.mxu0 0.0
    %764 = vmatpush1.msra.mxu0 0.0
    %765 = vmatprep.subr.mxu0 0.0
    %766 = vmatpush1.msra.mxu0 0.0
    %767 = vmatprep.subr.mxu0 0.0
    %768 = vmatpush1.msra.mxu0 0.0
    %769 = vmatprep.subr.mxu0 0.0
    %770 = vmatpush1.msra.mxu0 0.0
    %771 = vmatprep.subr.mxu0 0.0
    %772 = vmatpush1.msra.mxu0 0.0
    %773 = vmatprep.subr.mxu0 0.0
    %774 = vmatpush1.msra.mxu0 0.0
    %775 = vmatprep.subr.mxu0 0.0
    %776 = vmatpush1.msra.mxu0 0.0
    %777 = vmatprep.subr.mxu0 0.0
    %778 = vmatpush1.msra.mxu0 0.0
    %779 = vmatprep.subr.mxu0 0.0
    %780 = vmatpush1.msra.mxu0 0.0
    %781 = vmatprep.subr.mxu0 0.0
    %782 = vmatpush1.msra.mxu0 0.0
    %783 = vmatprep.subr.mxu0 0.0
    %784 = vmatpush1.msra.mxu0 0.0
    %785 = vmatprep.subr.mxu0 0.0
    %786 = vmatpush1.msra.mxu0 0.0
    %787 = vmatprep.subr.mxu0 0.0
    %788 = vmatpush1.msra.mxu0 0.0
    %789 = vmatprep.subr.mxu0 0.0
    %790 = vmatpush1.msra.mxu0 0.0
    %791 = vmatprep.subr.mxu0 0.0
    %792 = vmatpush1.msra.mxu0 0.0
    %793 = vmatprep.subr.mxu0 0.0
    %794 = vmatpush1.msra.mxu0 0.0
    %795 = vmatprep.mubr.f32.mxu0 0.0
    %796 = vmatmul.mubr.f32.gmra.mrb[0].mxu0 %v729
    %v797 = vpop.f32.mrb[0].mxu0
    %v798 = vadd.f32 0.0, %v797
    %v799 = vpop.f32.mrb[0].mxu0
    %800 = vdwg.mxu0
    %v801 = vadd.f32 %v728, %v798
    %v802 = vxor.u32 %v801, 2147483648
    %v803 = vmul.f32 %v802, 1.442695
    %v804 = vpow.pop %v803
    %v805 = vadd.f32 %v804, 1.0
    %v806 = vrcp.pop %v805
    %v807 = vmul.f32 1.0, %v806
    %v808 = vadd.f32 %v798, %v383
    %810 = vrot.lane.b32.xlu0 %v808, 64
    %v811 = vpop.permute.xlu0 %810
    %v813 = vmul.f32 %v807, %v811
    %815 = vrot.lane.b32.xlu0 %v813, 64
    %v816 = vpop.permute.xlu0 %815
    %v818 = vadd.f32 %v728, %v816
    %v819 = vtanh.pop %v818
    %v820 = vsub.f32 1.0, %v807
    %822 = vrot.lane.b32.xlu0 %v819, 96
    %v823 = vpop.permute.xlu0 %822
    %v825 = vmul.f32 %v820, %v823
    %v826 = vmul.f32 %v807, %v722
    %v827 = vadd.f32 %v825, %v826
    %829 = vrot.lane.b32.xlu0 %v827, 96
    %v830 = vpop.permute.xlu0 %829
    %832 = vst.msk [vmem:[#allocation2 + $0x20] sm:$0xff] %vm296, %v830
    %v833 = vld [vmem:[#allocation3 + $0x28] sm:$0xff]
    %v834 = vsel %vm296, %v830, 0
    %836 = vmatprep.subr.mxu0 0.0
    %837 = vmatpush1.msra.mxu0 %v289
    %838 = vmatprep.subr.mxu0 0.0
    %839 = vmatpush1.msra.mxu0 %v290
    %840 = vmatprep.subr.mxu0 0.0
    %841 = vmatpush1.msra.mxu0 %v291
    %842 = vmatprep.subr.mxu0 0.0
    %843 = vmatpush1.msra.mxu0 %v292
    %844 = vmatprep.subr.mxu0 0.0
    %845 = vmatpush1.msra.mxu0 0.0
    %846 = vmatprep.subr.mxu0 0.0
    %847 = vmatpush1.msra.mxu0 0.0
    %848 = vmatprep.subr.mxu0 0.0
    %849 = vmatpush1.msra.mxu0 0.0
    %850 = vmatprep.subr.mxu0 0.0
    %851 = vmatpush1.msra.mxu0 0.0
    %852 = vmatprep.subr.mxu0 0.0
    %853 = vmatpush1.msra.mxu0 0.0
    %854 = vmatprep.subr.mxu0 0.0
    %855 = vmatpush1.msra.mxu0 0.0
    %856 = vmatprep.subr.mxu0 0.0
    %857 = vmatpush1.msra.mxu0 0.0
    %858 = vmatprep.subr.mxu0 0.0
    %859 = vmatpush1.msra.mxu0 0.0
    %860 = vmatprep.subr.mxu0 0.0
    %861 = vmatpush1.msra.mxu0 0.0
    %862 = vmatprep.subr.mxu0 0.0
    %863 = vmatpush1.msra.mxu0 0.0
    %864 = vmatprep.subr.mxu0 0.0
    %865 = vmatpush1.msra.mxu0 0.0
    %866 = vmatprep.subr.mxu0 0.0
    %867 = vmatpush1.msra.mxu0 0.0
    %868 = vmatprep.subr.mxu0 0.0
    %869 = vmatpush1.msra.mxu0 0.0
    %870 = vmatprep.subr.mxu0 0.0
    %871 = vmatpush1.msra.mxu0 0.0
    %872 = vmatprep.subr.mxu0 0.0
    %873 = vmatpush1.msra.mxu0 0.0
    %874 = vmatprep.subr.mxu0 0.0
    %875 = vmatpush1.msra.mxu0 0.0
    %876 = vmatprep.subr.mxu0 0.0
    %877 = vmatpush1.msra.mxu0 0.0
    %878 = vmatprep.subr.mxu0 0.0
    %879 = vmatpush1.msra.mxu0 0.0
    %880 = vmatprep.subr.mxu0 0.0
    %881 = vmatpush1.msra.mxu0 0.0
    %882 = vmatprep.subr.mxu0 0.0
    %883 = vmatpush1.msra.mxu0 0.0
    %884 = vmatprep.subr.mxu0 0.0
    %885 = vmatpush1.msra.mxu0 0.0
    %886 = vmatprep.subr.mxu0 0.0
    %887 = vmatpush1.msra.mxu0 0.0
    %888 = vmatprep.subr.mxu0 0.0
    %889 = vmatpush1.msra.mxu0 0.0
    %890 = vmatprep.subr.mxu0 0.0
    %891 = vmatpush1.msra.mxu0 0.0
    %892 = vmatprep.subr.mxu0 0.0
    %893 = vmatpush1.msra.mxu0 0.0
    %894 = vmatprep.subr.mxu0 0.0
    %895 = vmatpush1.msra.mxu0 0.0
    %896 = vmatprep.subr.mxu0 0.0
    %897 = vmatpush1.msra.mxu0 0.0
    %898 = vmatprep.subr.mxu0 0.0
    %899 = vmatpush1.msra.mxu0 0.0
    %900 = vmatprep.mubr.f32.mxu0 0.0
    %901 = vmatmul.mubr.f32.gmra.mrb[0].mxu0 %v834
    %v902 = vpop.f32.mrb[0].mxu0
    %v903 = vadd.f32 0.0, %v902
    %v904 = vpop.f32.mrb[0].mxu0
    %905 = vdwg.mxu0
    %v906 = vadd.f32 %v833, %v903
    %v907 = vxor.u32 %v906, 2147483648
    %v908 = vmul.f32 %v907, 1.442695
    %v909 = vpow.pop %v908
    %v910 = vadd.f32 %v909, 1.0
    %v911 = vrcp.pop %v910
    %v912 = vmul.f32 1.0, %v911
    %v913 = vadd.f32 %v903, %v383
    %915 = vrot.lane.b32.xlu0 %v913, 64
    %v916 = vpop.permute.xlu0 %915
    %v918 = vmul.f32 %v912, %v916
    %920 = vrot.lane.b32.xlu0 %v918, 64
    %v921 = vpop.permute.xlu0 %920
    %v923 = vadd.f32 %v833, %v921
    %v924 = vtanh.pop %v923
    %v925 = vsub.f32 1.0, %v912
    %927 = vrot.lane.b32.xlu0 %v924, 96
    %v928 = vpop.permute.xlu0 %927
    %v930 = vmul.f32 %v925, %v928
    %v931 = vmul.f32 %v912, %v827
    %v932 = vadd.f32 %v930, %v931
    %934 = vrot.lane.b32.xlu0 %v932, 96
    %v935 = vpop.permute.xlu0 %934
    %937 = vst.msk [vmem:[#allocation2 + $0x28] sm:$0xff] %vm296, %v935
    %v938 = vld [vmem:[#allocation3 + $0x30] sm:$0xff]
    %v939 = vsel %vm296, %v935, 0
    %941 = vmatprep.subr.mxu0 0.0
    %942 = vmatpush1.msra.mxu0 %v289
    %943 = vmatprep.subr.mxu0 0.0
    %944 = vmatpush1.msra.mxu0 %v290
    %945 = vmatprep.subr.mxu0 0.0
    %946 = vmatpush1.msra.mxu0 %v291
    %947 = vmatprep.subr.mxu0 0.0
    %948 = vmatpush1.msra.mxu0 %v292
    %949 = vmatprep.subr.mxu0 0.0
    %950 = vmatpush1.msra.mxu0 0.0
    %951 = vmatprep.subr.mxu0 0.0
    %952 = vmatpush1.msra.mxu0 0.0
    %953 = vmatprep.subr.mxu0 0.0
    %954 = vmatpush1.msra.mxu0 0.0
    %955 = vmatprep.subr.mxu0 0.0
    %956 = vmatpush1.msra.mxu0 0.0
    %957 = vmatprep.subr.mxu0 0.0
    %958 = vmatpush1.msra.mxu0 0.0
    %959 = vmatprep.subr.mxu0 0.0
    %960 = vmatpush1.msra.mxu0 0.0
    %961 = vmatprep.subr.mxu0 0.0
    %962 = vmatpush1.msra.mxu0 0.0
    %963 = vmatprep.subr.mxu0 0.0
    %964 = vmatpush1.msra.mxu0 0.0
    %965 = vmatprep.subr.mxu0 0.0
    %966 = vmatpush1.msra.mxu0 0.0
    %967 = vmatprep.subr.mxu0 0.0
    %968 = vmatpush1.msra.mxu0 0.0
    %969 = vmatprep.subr.mxu0 0.0
    %970 = vmatpush1.msra.mxu0 0.0
    %971 = vmatprep.subr.mxu0 0.0
    %972 = vmatpush1.msra.mxu0 0.0
    %973 = vmatprep.subr.mxu0 0.0
    %974 = vmatpush1.msra.mxu0 0.0
    %975 = vmatprep.subr.mxu0 0.0
    %976 = vmatpush1.msra.mxu0 0.0
    %977 = vmatprep.subr.mxu0 0.0
    %978 = vmatpush1.msra.mxu0 0.0
    %979 = vmatprep.subr.mxu0 0.0
    %980 = vmatpush1.msra.mxu0 0.0
    %981 = vmatprep.subr.mxu0 0.0
    %982 = vmatpush1.msra.mxu0 0.0
    %983 = vmatprep.subr.mxu0 0.0
    %984 = vmatpush1.msra.mxu0 0.0
    %985 = vmatprep.subr.mxu0 0.0
    %986 = vmatpush1.msra.mxu0 0.0
    %987 = vmatprep.subr.mxu0 0.0
    %988 = vmatpush1.msra.mxu0 0.0
    %989 = vmatprep.subr.mxu0 0.0
    %990 = vmatpush1.msra.mxu0 0.0
    %991 = vmatprep.subr.mxu0 0.0
    %992 = vmatpush1.msra.mxu0 0.0
    %993 = vmatprep.subr.mxu0 0.0
    %994 = vmatpush1.msra.mxu0 0.0
    %995 = vmatprep.subr.mxu0 0.0
    %996 = vmatpush1.msra.mxu0 0.0
    %997 = vmatprep.subr.mxu0 0.0
    %998 = vmatpush1.msra.mxu0 0.0
    %999 = vmatprep.subr.mxu0 0.0
    %1000 = vmatpush1.msra.mxu0 0.0
    %1001 = vmatprep.subr.mxu0 0.0
    %1002 = vmatpush1.msra.mxu0 0.0
    %1003 = vmatprep.subr.mxu0 0.0
    %1004 = vmatpush1.msra.mxu0 0.0
    %1005 = vmatprep.mubr.f32.mxu0 0.0
    %1006 = vmatmul.mubr.f32.gmra.mrb[0].mxu0 %v939
    %v1007 = vpop.f32.mrb[0].mxu0
    %v1008 = vadd.f32 0.0, %v1007
    %v1009 = vpop.f32.mrb[0].mxu0
    %1010 = vdwg.mxu0
    %v1011 = vadd.f32 %v938, %v1008
    %v1012 = vxor.u32 %v1011, 2147483648
    %v1013 = vmul.f32 %v1012, 1.442695
    %v1014 = vpow.pop %v1013
    %v1015 = vadd.f32 %v1014, 1.0
    %v1016 = vrcp.pop %v1015
    %v1017 = vmul.f32 1.0, %v1016
    %v1018 = vadd.f32 %v1008, %v383
    %1020 = vrot.lane.b32.xlu0 %v1018, 64
    %v1021 = vpop.permute.xlu0 %1020
    %v1023 = vmul.f32 %v1017, %v1021
    %1025 = vrot.lane.b32.xlu0 %v1023, 64
    %v1026 = vpop.permute.xlu0 %1025
    %v1028 = vadd.f32 %v938, %v1026
    %v1029 = vtanh.pop %v1028
    %v1030 = vsub.f32 1.0, %v1017
    %1032 = vrot.lane.b32.xlu0 %v1029, 96
    %v1033 = vpop.permute.xlu0 %1032
    %v1035 = vmul.f32 %v1030, %v1033
    %v1036 = vmul.f32 %v1017, %v932
    %v1037 = vadd.f32 %v1035, %v1036
    %1039 = vrot.lane.b32.xlu0 %v1037, 96
    %v1040 = vpop.permute.xlu0 %1039
    %1042 = vst.msk [vmem:[#allocation2 + $0x30] sm:$0xff] %vm296, %v1040
    %v1043 = vld [vmem:[#allocation3 + $0x38] sm:$0xff]
    %v1044 = vsel %vm296, %v1040, 0
    %1046 = vmatprep.subr.mxu0 0.0
    %1047 = vmatpush1.msra.mxu0 %v289
    %1048 = vmatprep.subr.mxu0 0.0
    %1049 = vmatpush1.msra.mxu0 %v290
    %1050 = vmatprep.subr.mxu0 0.0
    %1051 = vmatpush1.msra.mxu0 %v291
    %1052 = vmatprep.subr.mxu0 0.0
    %1053 = vmatpush1.msra.mxu0 %v292
    %1054 = vmatprep.subr.mxu0 0.0
    %1055 = vmatpush1.msra.mxu0 0.0
    %1056 = vmatprep.subr.mxu0 0.0
    %1057 = vmatpush1.msra.mxu0 0.0
    %1058 = vmatprep.subr.mxu0 0.0
    %1059 = vmatpush1.msra.mxu0 0.0
    %1060 = vmatprep.subr.mxu0 0.0
    %1061 = vmatpush1.msra.mxu0 0.0
    %1062 = vmatprep.subr.mxu0 0.0
    %1063 = vmatpush1.msra.mxu0 0.0
    %1064 = vmatprep.subr.mxu0 0.0
    %1065 = vmatpush1.msra.mxu0 0.0
    %1066 = vmatprep.subr.mxu0 0.0
    %1067 = vmatpush1.msra.mxu0 0.0
    %1068 = vmatprep.subr.mxu0 0.0
    %1069 = vmatpush1.msra.mxu0 0.0
    %1070 = vmatprep.subr.mxu0 0.0
    %1071 = vmatpush1.msra.mxu0 0.0
    %1072 = vmatprep.subr.mxu0 0.0
    %1073 = vmatpush1.msra.mxu0 0.0
    %1074 = vmatprep.subr.mxu0 0.0
    %1075 = vmatpush1.msra.mxu0 0.0
    %1076 = vmatprep.subr.mxu0 0.0
    %1077 = vmatpush1.msra.mxu0 0.0
    %1078 = vmatprep.subr.mxu0 0.0
    %1079 = vmatpush1.msra.mxu0 0.0
    %1080 = vmatprep.subr.mxu0 0.0
    %1081 = vmatpush1.msra.mxu0 0.0
    %1082 = vmatprep.subr.mxu0 0.0
    %1083 = vmatpush1.msra.mxu0 0.0
    %1084 = vmatprep.subr.mxu0 0.0
    %1085 = vmatpush1.msra.mxu0 0.0
    %1086 = vmatprep.subr.mxu0 0.0
    %1087 = vmatpush1.msra.mxu0 0.0
    %1088 = vmatprep.subr.mxu0 0.0
    %1089 = vmatpush1.msra.mxu0 0.0
    %1090 = vmatprep.subr.mxu0 0.0
    %1091 = vmatpush1.msra.mxu0 0.0
    %1092 = vmatprep.subr.mxu0 0.0
    %1093 = vmatpush1.msra.mxu0 0.0
    %1094 = vmatprep.subr.mxu0 0.0
    %1095 = vmatpush1.msra.mxu0 0.0
    %1096 = vmatprep.subr.mxu0 0.0
    %1097 = vmatpush1.msra.mxu0 0.0
    %1098 = vmatprep.subr.mxu0 0.0
    %1099 = vmatpush1.msra.mxu0 0.0
    %1100 = vmatprep.subr.mxu0 0.0
    %1101 = vmatpush1.msra.mxu0 0.0
    %1102 = vmatprep.subr.mxu0 0.0
    %1103 = vmatpush1.msra.mxu0 0.0
    %1104 = vmatprep.subr.mxu0 0.0
    %1105 = vmatpush1.msra.mxu0 0.0
    %1106 = vmatprep.subr.mxu0 0.0
    %1107 = vmatpush1.msra.mxu0 0.0
    %1108 = vmatprep.subr.mxu0 0.0
    %1109 = vmatpush1.msra.mxu0 0.0
    %1110 = vmatprep.mubr.f32.mxu0 0.0
    %1111 = vmatmul.mubr.f32.gmra.mrb[0].mxu0 %v1044
    %v1112 = vpop.f32.mrb[0].mxu0
    %v1113 = vadd.f32 0.0, %v1112
    %v1114 = vpop.f32.mrb[0].mxu0
    %1115 = vdwg.mxu0
    %v1116 = vadd.f32 %v1043, %v1113
    %v1117 = vxor.u32 %v1116, 2147483648
    %v1118 = vmul.f32 %v1117, 1.442695
    %v1119 = vpow.pop %v1118
    %v1120 = vadd.f32 %v1119, 1.0
    %v1121 = vrcp.pop %v1120
    %v1122 = vmul.f32 1.0, %v1121
    %v1123 = vadd.f32 %v1113, %v383
    %1125 = vrot.lane.b32.xlu0 %v1123, 64
    %v1126 = vpop.permute.xlu0 %1125
    %v1128 = vmul.f32 %v1122, %v1126
    %1130 = vrot.lane.b32.xlu0 %v1128, 64
    %v1131 = vpop.permute.xlu0 %1130
    %v1133 = vadd.f32 %v1043, %v1131
    %v1134 = vtanh.pop %v1133
    %v1135 = vsub.f32 1.0, %v1122
    %1137 = vrot.lane.b32.xlu0 %v1134, 96
    %v1138 = vpop.permute.xlu0 %1137
    %v1140 = vmul.f32 %v1135, %v1138
    %v1141 = vmul.f32 %v1122, %v1037
    %v1142 = vadd.f32 %v1140, %v1141
    %1144 = vrot.lane.b32.xlu0 %v1142, 96
    %v1145 = vpop.permute.xlu0 %1144
    %1147 = vst.msk [vmem:[#allocation2 + $0x38] sm:$0xff] %vm296, %v1145
    %1148 = vst.msk [vmem:[#allocation16] sm:$0xff] %vm296, %v1145
    %v1149 = vld [vmem:[#allocation2] sm:$0xff]
    %v1150 = vld [vmem:[#allocation2 + $0x8] sm:$0xff]
    %v1151 = vld [vmem:[#allocation2 + $0x10] sm:$0xff]
    %v1152 = vld [vmem:[#allocation2 + $0x18] sm:$0xff]
    %v1153 = vld [vmem:[#allocation2 + $0x20] sm:$0xff]
    %v1154 = vld [vmem:[#allocation2 + $0x28] sm:$0xff]
    %v1155 = vld [vmem:[#allocation2 + $0x30] sm:$0xff]
    %v1156 = vld [vmem:[#allocation2 + $0x38] sm:$0xff]
    %v1157 = vld [vmem:[#allocation12] sm:$0xff]
    %v1158 = vld [vmem:[#allocation12 + $0x8] sm:$0xff]
    %v1159 = vld [vmem:[#allocation12 + $0x10] sm:$0xff]
    %v1160 = vld [vmem:[#allocation12 + $0x18] sm:$0xff]
    %v1161 = vld [vmem:[%s8] sm:$0x1]
    %v1163 = vlaneseq
    %v1164 = vshrl.u32 %v1163, 7
    %v1165 = vsub.s32 0, %v1164
    %v1166 = vrot.slane %v1161, %v1165
    %v1169 = vsel %vm296, %v1149, 0
    %v1172 = vsel %vm296, %v1150, 0
    %v1175 = vsel %vm296, %v1151, 0
    %v1178 = vsel %vm296, %v1152, 0
    %v1181 = vsel %vm296, %v1153, 0
    %v1184 = vsel %vm296, %v1154, 0
    %v1187 = vsel %vm296, %v1155, 0
    %v1190 = vsel %vm296, %v1156, 0
    %1192 = vmatprep.subr.mxu0 0.0
    %1193 = vmatpush1.msra.mxu0 %v1157
    %1194 = vmatprep.subr.mxu0 0.0
    %1195 = vmatpush1.msra.mxu0 %v1158
    %1196 = vmatprep.subr.mxu0 0.0
    %1197 = vmatpush1.msra.mxu0 %v1159
    %1198 = vmatprep.subr.mxu0 0.0
    %1199 = vmatpush1.msra.mxu0 %v1160
    %1200 = vmatprep.subr.mxu0 0.0
    %1201 = vmatpush1.msra.mxu0 0.0
    %1202 = vmatprep.subr.mxu0 0.0
    %1203 = vmatpush1.msra.mxu0 0.0
    %1204 = vmatprep.subr.mxu0 0.0
    %1205 = vmatpush1.msra.mxu0 0.0
    %1206 = vmatprep.subr.mxu0 0.0
    %1207 = vmatpush1.msra.mxu0 0.0
    %1208 = vmatprep.subr.mxu0 0.0
    %1209 = vmatpush1.msra.mxu0 0.0
    %1210 = vmatprep.subr.mxu0 0.0
    %1211 = vmatpush1.msra.mxu0 0.0
    %1212 = vmatprep.subr.mxu0 0.0
    %1213 = vmatpush1.msra.mxu0 0.0
    %1214 = vmatprep.subr.mxu0 0.0
    %1215 = vmatpush1.msra.mxu0 0.0
    %1216 = vmatprep.subr.mxu0 0.0
    %1217 = vmatpush1.msra.mxu0 0.0
    %1218 = vmatprep.subr.mxu0 0.0
    %1219 = vmatpush1.msra.mxu0 0.0
    %1220 = vmatprep.subr.mxu0 0.0
    %1221 = vmatpush1.msra.mxu0 0.0
    %1222 = vmatprep.subr.mxu0 0.0
    %1223 = vmatpush1.msra.mxu0 0.0
    %1224 = vmatprep.subr.mxu0 0.0
    %1225 = vmatpush1.msra.mxu0 0.0
    %1226 = vmatprep.subr.mxu0 0.0
    %1227 = vmatpush1.msra.mxu0 0.0
    %1228 = vmatprep.subr.mxu0 0.0
    %1229 = vmatpush1.msra.mxu0 0.0
    %1230 = vmatprep.subr.mxu0 0.0
    %1231 = vmatpush1.msra.mxu0 0.0
    %1232 = vmatprep.subr.mxu0 0.0
    %1233 = vmatpush1.msra.mxu0 0.0
    %1234 = vmatprep.subr.mxu0 0.0
    %1235 = vmatpush1.msra.mxu0 0.0
    %1236 = vmatprep.subr.mxu0 0.0
    %1237 = vmatpush1.msra.mxu0 0.0
    %1238 = vmatprep.subr.mxu0 0.0
    %1239 = vmatpush1.msra.mxu0 0.0
    %1240 = vmatprep.subr.mxu0 0.0
    %1241 = vmatpush1.msra.mxu0 0.0
    %1242 = vmatprep.subr.mxu0 0.0
    %1243 = vmatpush1.msra.mxu0 0.0
    %1244 = vmatprep.subr.mxu0 0.0
    %1245 = vmatpush1.msra.mxu0 0.0
    %1246 = vmatprep.subr.mxu0 0.0
    %1247 = vmatpush1.msra.mxu0 0.0
    %1248 = vmatprep.subr.mxu0 0.0
    %1249 = vmatpush1.msra.mxu0 0.0
    %1250 = vmatprep.subr.mxu0 0.0
    %1251 = vmatpush1.msra.mxu0 0.0
    %1252 = vmatprep.subr.mxu0 0.0
    %1253 = vmatpush1.msra.mxu0 0.0
    %1254 = vmatprep.subr.mxu0 0.0
    %1255 = vmatpush1.msra.mxu0 0.0
    %1256 = vmatprep.mubr.f32.mxu0 0.0
    %1257 = vmatmul.mubr.f32.gmra.mrb[0].mxu0 %v1169
    %v1258 = vpop.f32.mrb[0].mxu0
    %v1259 = vadd.f32 %v1166, %v1258
    %v1260 = vpop.f32.mrb[0].mxu0
    %1261 = vmatprep.mubr.f32.mxu0 0.0
    %1262 = vmatmul.mubr.f32.gmra.mrb[0].mxu0 %v1172
    %v1263 = vpop.f32.mrb[0].mxu0
    %v1264 = vadd.f32 %v1166, %v1263
    %v1265 = vpop.f32.mrb[0].mxu0
    %1266 = vmatprep.mubr.f32.mxu0 0.0
    %1267 = vmatmul.mubr.f32.gmra.mrb[0].mxu0 %v1175
    %v1268 = vpop.f32.mrb[0].mxu0
    %v1269 = vadd.f32 %v1166, %v1268
    %v1270 = vpop.f32.mrb[0].mxu0
    %1271 = vmatprep.mubr.f32.mxu0 0.0
    %1272 = vmatmul.mubr.f32.gmra.mrb[0].mxu0 %v1178
    %v1273 = vpop.f32.mrb[0].mxu0
    %v1274 = vadd.f32 %v1166, %v1273
    %v1275 = vpop.f32.mrb[0].mxu0
    %1276 = vmatprep.mubr.f32.mxu0 0.0
    %1277 = vmatmul.mubr.f32.gmra.mrb[0].mxu0 %v1181
    %v1278 = vpop.f32.mrb[0].mxu0
    %v1279 = vadd.f32 %v1166, %v1278
    %v1280 = vpop.f32.mrb[0].mxu0
    %1281 = vmatprep.mubr.f32.mxu0 0.0
    %1282 = vmatmul.mubr.f32.gmra.mrb[0].mxu0 %v1184
    %v1283 = vpop.f32.mrb[0].mxu0
    %v1284 = vadd.f32 %v1166, %v1283
    %v1285 = vpop.f32.mrb[0].mxu0
    %1286 = vmatprep.mubr.f32.mxu0 0.0
    %1287 = vmatmul.mubr.f32.gmra.mrb[0].mxu0 %v1187
    %v1288 = vpop.f32.mrb[0].mxu0
    %v1289 = vadd.f32 %v1166, %v1288
    %v1290 = vpop.f32.mrb[0].mxu0
    %1291 = vmatprep.mubr.f32.mxu0 0.0
    %1292 = vmatmul.mubr.f32.gmra.mrb[0].mxu0 %v1190
    %v1293 = vpop.f32.mrb[0].mxu0
    %v1294 = vadd.f32 %v1166, %v1293
    %v1295 = vpop.f32.mrb[0].mxu0
    %1296 = vdwg.mxu0
    %1297 = vst.msk [vmem:[#allocation3] sm:$0xff] %vm280, %v1259
    %1298 = vst.msk [vmem:[#allocation3 + $0x8] sm:$0xff] %vm280, %v1264
    %1299 = vst.msk [vmem:[#allocation3 + $0x10] sm:$0xff] %vm280, %v1269
    %1300 = vst.msk [vmem:[#allocation3 + $0x18] sm:$0xff] %vm280, %v1274
    %1301 = vst.msk [vmem:[#allocation3 + $0x20] sm:$0xff] %vm280, %v1279
    %1302 = vst.msk [vmem:[#allocation3 + $0x28] sm:$0xff] %vm280, %v1284
    %1303 = vst.msk [vmem:[#allocation3 + $0x30] sm:$0xff] %vm280, %v1289
    %1304 = vst.msk [vmem:[#allocation3 + $0x38] sm:$0xff] %vm280, %v1294
    %v1305 = vld [vmem:[#allocation13] sm:$0xff]
    %v1306 = vld [vmem:[#allocation13 + $0x8] sm:$0xff]
    %v1307 = vld [vmem:[#allocation13 + $0x10] sm:$0xff]
    %v1308 = vld [vmem:[#allocation13 + $0x18] sm:$0xff]
    %v1309 = vld [vmem:[%s9] sm:$0x1]
    %s1310 = scalar_lea.vmem [#allocation7], 8
    %v1311 = vld [vmem:[%s1310] sm:$0xff]
    %v1312 = vld [vmem:[#allocation3] sm:$0xff]
    %v1314 = vsel %vm296, %v1311, 0
    %1316 = vmatprep.subr.mxu0 0.0
    %1317 = vmatpush1.msra.mxu0 %v1305
    %1318 = vmatprep.subr.mxu0 0.0
    %1319 = vmatpush1.msra.mxu0 %v1306
    %1320 = vmatprep.subr.mxu0 0.0
    %1321 = vmatpush1.msra.mxu0 %v1307
    %1322 = vmatprep.subr.mxu0 0.0
    %1323 = vmatpush1.msra.mxu0 %v1308
    %1324 = vmatprep.subr.mxu0 0.0
    %1325 = vmatpush1.msra.mxu0 0.0
    %1326 = vmatprep.subr.mxu0 0.0
    %1327 = vmatpush1.msra.mxu0 0.0
    %1328 = vmatprep.subr.mxu0 0.0
    %1329 = vmatpush1.msra.mxu0 0.0
    %1330 = vmatprep.subr.mxu0 0.0
    %1331 = vmatpush1.msra.mxu0 0.0
    %1332 = vmatprep.subr.mxu0 0.0
    %1333 = vmatpush1.msra.mxu0 0.0
    %1334 = vmatprep.subr.mxu0 0.0
    %1335 = vmatpush1.msra.mxu0 0.0
    %1336 = vmatprep.subr.mxu0 0.0
    %1337 = vmatpush1.msra.mxu0 0.0
    %1338 = vmatprep.subr.mxu0 0.0
    %1339 = vmatpush1.msra.mxu0 0.0
    %1340 = vmatprep.subr.mxu0 0.0
    %1341 = vmatpush1.msra.mxu0 0.0
    %1342 = vmatprep.subr.mxu0 0.0
    %1343 = vmatpush1.msra.mxu0 0.0
    %1344 = vmatprep.subr.mxu0 0.0
    %1345 = vmatpush1.msra.mxu0 0.0
    %1346 = vmatprep.subr.mxu0 0.0
    %1347 = vmatpush1.msra.mxu0 0.0
    %1348 = vmatprep.subr.mxu0 0.0
    %1349 = vmatpush1.msra.mxu0 0.0
    %1350 = vmatprep.subr.mxu0 0.0
    %1351 = vmatpush1.msra.mxu0 0.0
    %1352 = vmatprep.subr.mxu0 0.0
    %1353 = vmatpush1.msra.mxu0 0.0
    %1354 = vmatprep.subr.mxu0 0.0
    %1355 = vmatpush1.msra.mxu0 0.0
    %1356 = vmatprep.subr.mxu0 0.0
    %1357 = vmatpush1.msra.mxu0 0.0
    %1358 = vmatprep.subr.mxu0 0.0
    %1359 = vmatpush1.msra.mxu0 0.0
    %1360 = vmatprep.subr.mxu0 0.0
    %1361 = vmatpush1.msra.mxu0 0.0
    %1362 = vmatprep.subr.mxu0 0.0
    %1363 = vmatpush1.msra.mxu0 0.0
    %1364 = vmatprep.subr.mxu0 0.0
    %1365 = vmatpush1.msra.mxu0 0.0
    %1366 = vmatprep.subr.mxu0 0.0
    %1367 = vmatpush1.msra.mxu0 0.0
    %1368 = vmatprep.subr.mxu0 0.0
    %1369 = vmatpush1.msra.mxu0 0.0
    %1370 = vmatprep.subr.mxu0 0.0
    %1371 = vmatpush1.msra.mxu0 0.0
    %1372 = vmatprep.subr.mxu0 0.0
    %1373 = vmatpush1.msra.mxu0 0.0
    %1374 = vmatprep.subr.mxu0 0.0
    %1375 = vmatpush1.msra.mxu0 0.0
    %1376 = vmatprep.subr.mxu0 0.0
    %1377 = vmatpush1.msra.mxu0 0.0
    %1378 = vmatprep.subr.mxu0 0.0
    %1379 = vmatpush1.msra.mxu0 0.0
    %1380 = vmatprep.mubr.f32.mxu0 0.0
    %1381 = vmatmul.mubr.f32.gmra.mrb[0].mxu0 %v1314
    %v1382 = vpop.f32.mrb[0].mxu0
    %v1383 = vadd.f32 0.0, %v1382
    %v1384 = vpop.f32.mrb[0].mxu0
    %1385 = vdwg.mxu0
    %v1386 = vadd.f32 %v1312, %v1383
    %v1387 = vxor.u32 %v1386, 2147483648
    %v1388 = vmul.f32 %v1387, 1.442695
    %v1389 = vpow.pop %v1388
    %v1390 = vadd.f32 %v1389, 1.0
    %v1391 = vrcp.pop %v1390
    %v1392 = vmul.f32 1.0, %v1391
    %v1394 = vlaneseq
    %v1395 = vshrl.u32 %v1394, 7
    %v1396 = vsub.s32 0, %v1395
    %v1397 = vrot.slane %v1309, %v1396
    %1398 = vrot.lane.b32.xlu0 %v1397, 64
    %v1399 = vpop.permute.xlu0 %1398
    %v1401 = vadd.f32 %v1383, %v1399
    %1403 = vrot.lane.b32.xlu0 %v1401, 64
    %v1404 = vpop.permute.xlu0 %1403
    %v1406 = vmul.f32 %v1392, %v1404
    %1408 = vrot.lane.b32.xlu0 %v1406, 64
    %v1409 = vpop.permute.xlu0 %1408
    %v1411 = vadd.f32 %v1312, %v1409
    %v1412 = vtanh.pop %v1411
    %v1413 = vsub.f32 1.0, %v1392
    %1415 = vrot.lane.b32.xlu0 %v1412, 96
    %v1416 = vpop.permute.xlu0 %1415
    %v1418 = vmul.f32 %v1413, %v1416
    %1419 = vrot.lane.b32.xlu0 %v1311, 32
    %v1420 = vpop.permute.xlu0 %1419
    %v1422 = vmul.f32 %v1392, %v1420
    %v1423 = vadd.f32 %v1418, %v1422
    %1425 = vrot.lane.b32.xlu0 %v1423, 96
    %v1426 = vpop.permute.xlu0 %1425
    %1428 = vst.msk [vmem:[#allocation2] sm:$0xff] %vm296, %v1426
    %v1429 = vld [vmem:[#allocation3 + $0x8] sm:$0xff]
    %v1430 = vsel %vm296, %v1426, 0
    %1432 = vmatprep.subr.mxu0 0.0
    %1433 = vmatpush1.msra.mxu0 %v1305
    %1434 = vmatprep.subr.mxu0 0.0
    %1435 = vmatpush1.msra.mxu0 %v1306
    %1436 = vmatprep.subr.mxu0 0.0
    %1437 = vmatpush1.msra.mxu0 %v1307
    %1438 = vmatprep.subr.mxu0 0.0
    %1439 = vmatpush1.msra.mxu0 %v1308
    %1440 = vmatprep.subr.mxu0 0.0
    %1441 = vmatpush1.msra.mxu0 0.0
    %1442 = vmatprep.subr.mxu0 0.0
    %1443 = vmatpush1.msra.mxu0 0.0
    %1444 = vmatprep.subr.mxu0 0.0
    %1445 = vmatpush1.msra.mxu0 0.0
    %1446 = vmatprep.subr.mxu0 0.0
    %1447 = vmatpush1.msra.mxu0 0.0
    %1448 = vmatprep.subr.mxu0 0.0
    %1449 = vmatpush1.msra.mxu0 0.0
    %1450 = vmatprep.subr.mxu0 0.0
    %1451 = vmatpush1.msra.mxu0 0.0
    %1452 = vmatprep.subr.mxu0 0.0
    %1453 = vmatpush1.msra.mxu0 0.0
    %1454 = vmatprep.subr.mxu0 0.0
    %1455 = vmatpush1.msra.mxu0 0.0
    %1456 = vmatprep.subr.mxu0 0.0
    %1457 = vmatpush1.msra.mxu0 0.0
    %1458 = vmatprep.subr.mxu0 0.0
    %1459 = vmatpush1.msra.mxu0 0.0
    %1460 = vmatprep.subr.mxu0 0.0
    %1461 = vmatpush1.msra.mxu0 0.0
    %1462 = vmatprep.subr.mxu0 0.0
    %1463 = vmatpush1.msra.mxu0 0.0
    %1464 = vmatprep.subr.mxu0 0.0
    %1465 = vmatpush1.msra.mxu0 0.0
    %1466 = vmatprep.subr.mxu0 0.0
    %1467 = vmatpush1.msra.mxu0 0.0
    %1468 = vmatprep.subr.mxu0 0.0
    %1469 = vmatpush1.msra.mxu0 0.0
    %1470 = vmatprep.subr.mxu0 0.0
    %1471 = vmatpush1.msra.mxu0 0.0
    %1472 = vmatprep.subr.mxu0 0.0
    %1473 = vmatpush1.msra.mxu0 0.0
    %1474 = vmatprep.subr.mxu0 0.0
    %1475 = vmatpush1.msra.mxu0 0.0
    %1476 = vmatprep.subr.mxu0 0.0
    %1477 = vmatpush1.msra.mxu0 0.0
    %1478 = vmatprep.subr.mxu0 0.0
    %1479 = vmatpush1.msra.mxu0 0.0
    %1480 = vmatprep.subr.mxu0 0.0
    %1481 = vmatpush1.msra.mxu0 0.0
    %1482 = vmatprep.subr.mxu0 0.0
    %1483 = vmatpush1.msra.mxu0 0.0
    %1484 = vmatprep.subr.mxu0 0.0
    %1485 = vmatpush1.msra.mxu0 0.0
    %1486 = vmatprep.subr.mxu0 0.0
    %1487 = vmatpush1.msra.mxu0 0.0
    %1488 = vmatprep.subr.mxu0 0.0
    %1489 = vmatpush1.msra.mxu0 0.0
    %1490 = vmatprep.subr.mxu0 0.0
    %1491 = vmatpush1.msra.mxu0 0.0
    %1492 = vmatprep.subr.mxu0 0.0
    %1493 = vmatpush1.msra.mxu0 0.0
    %1494 = vmatprep.subr.mxu0 0.0
    %1495 = vmatpush1.msra.mxu0 0.0
    %1496 = vmatprep.mubr.f32.mxu0 0.0
    %1497 = vmatmul.mubr.f32.gmra.mrb[0].mxu0 %v1430
    %v1498 = vpop.f32.mrb[0].mxu0
    %v1499 = vadd.f32 0.0, %v1498
    %v1500 = vpop.f32.mrb[0].mxu0
    %1501 = vdwg.mxu0
    %v1502 = vadd.f32 %v1429, %v1499
    %v1503 = vxor.u32 %v1502, 2147483648
    %v1504 = vmul.f32 %v1503, 1.442695
    %v1505 = vpow.pop %v1504
    %v1506 = vadd.f32 %v1505, 1.0
    %v1507 = vrcp.pop %v1506
    %v1508 = vmul.f32 1.0, %v1507
    %v1509 = vadd.f32 %v1499, %v1399
    %1511 = vrot.lane.b32.xlu0 %v1509, 64
    %v1512 = vpop.permute.xlu0 %1511
    %v1514 = vmul.f32 %v1508, %v1512
    %1516 = vrot.lane.b32.xlu0 %v1514, 64
    %v1517 = vpop.permute.xlu0 %1516
    %v1519 = vadd.f32 %v1429, %v1517
    %v1520 = vtanh.pop %v1519
    %v1521 = vsub.f32 1.0, %v1508
    %1523 = vrot.lane.b32.xlu0 %v1520, 96
    %v1524 = vpop.permute.xlu0 %1523
    %v1526 = vmul.f32 %v1521, %v1524
    %v1527 = vmul.f32 %v1508, %v1423
    %v1528 = vadd.f32 %v1526, %v1527
    %1530 = vrot.lane.b32.xlu0 %v1528, 96
    %v1531 = vpop.permute.xlu0 %1530
    %1533 = vst.msk [vmem:[#allocation2 + $0x8] sm:$0xff] %vm296, %v1531
    %v1534 = vld [vmem:[#allocation3 + $0x10] sm:$0xff]
    %v1535 = vsel %vm296, %v1531, 0
    %1537 = vmatprep.subr.mxu0 0.0
    %1538 = vmatpush1.msra.mxu0 %v1305
    %1539 = vmatprep.subr.mxu0 0.0
    %1540 = vmatpush1.msra.mxu0 %v1306
    %1541 = vmatprep.subr.mxu0 0.0
    %1542 = vmatpush1.msra.mxu0 %v1307
    %1543 = vmatprep.subr.mxu0 0.0
    %1544 = vmatpush1.msra.mxu0 %v1308
    %1545 = vmatprep.subr.mxu0 0.0
    %1546 = vmatpush1.msra.mxu0 0.0
    %1547 = vmatprep.subr.mxu0 0.0
    %1548 = vmatpush1.msra.mxu0 0.0
    %1549 = vmatprep.subr.mxu0 0.0
    %1550 = vmatpush1.msra.mxu0 0.0
    %1551 = vmatprep.subr.mxu0 0.0
    %1552 = vmatpush1.msra.mxu0 0.0
    %1553 = vmatprep.subr.mxu0 0.0
    %1554 = vmatpush1.msra.mxu0 0.0
    %1555 = vmatprep.subr.mxu0 0.0
    %1556 = vmatpush1.msra.mxu0 0.0
    %1557 = vmatprep.subr.mxu0 0.0
    %1558 = vmatpush1.msra.mxu0 0.0
    %1559 = vmatprep.subr.mxu0 0.0
    %1560 = vmatpush1.msra.mxu0 0.0
    %1561 = vmatprep.subr.mxu0 0.0
    %1562 = vmatpush1.msra.mxu0 0.0
    %1563 = vmatprep.subr.mxu0 0.0
    %1564 = vmatpush1.msra.mxu0 0.0
    %1565 = vmatprep.subr.mxu0 0.0
    %1566 = vmatpush1.msra.mxu0 0.0
    %1567 = vmatprep.subr.mxu0 0.0
    %1568 = vmatpush1.msra.mxu0 0.0
    %1569 = vmatprep.subr.mxu0 0.0
    %1570 = vmatpush1.msra.mxu0 0.0
    %1571 = vmatprep.subr.mxu0 0.0
    %1572 = vmatpush1.msra.mxu0 0.0
    %1573 = vmatprep.subr.mxu0 0.0
    %1574 = vmatpush1.msra.mxu0 0.0
    %1575 = vmatprep.subr.mxu0 0.0
    %1576 = vmatpush1.msra.mxu0 0.0
    %1577 = vmatprep.subr.mxu0 0.0
    %1578 = vmatpush1.msra.mxu0 0.0
    %1579 = vmatprep.subr.mxu0 0.0
    %1580 = vmatpush1.msra.mxu0 0.0
    %1581 = vmatprep.subr.mxu0 0.0
    %1582 = vmatpush1.msra.mxu0 0.0
    %1583 = vmatprep.subr.mxu0 0.0
    %1584 = vmatpush1.msra.mxu0 0.0
    %1585 = vmatprep.subr.mxu0 0.0
    %1586 = vmatpush1.msra.mxu0 0.0
    %1587 = vmatprep.subr.mxu0 0.0
    %1588 = vmatpush1.msra.mxu0 0.0
    %1589 = vmatprep.subr.mxu0 0.0
    %1590 = vmatpush1.msra.mxu0 0.0
    %1591 = vmatprep.subr.mxu0 0.0
    %1592 = vmatpush1.msra.mxu0 0.0
    %1593 = vmatprep.subr.mxu0 0.0
    %1594 = vmatpush1.msra.mxu0 0.0
    %1595 = vmatprep.subr.mxu0 0.0
    %1596 = vmatpush1.msra.mxu0 0.0
    %1597 = vmatprep.subr.mxu0 0.0
    %1598 = vmatpush1.msra.mxu0 0.0
    %1599 = vmatprep.subr.mxu0 0.0
    %1600 = vmatpush1.msra.mxu0 0.0
    %1601 = vmatprep.mubr.f32.mxu0 0.0
    %1602 = vmatmul.mubr.f32.gmra.mrb[0].mxu0 %v1535
    %v1603 = vpop.f32.mrb[0].mxu0
    %v1604 = vadd.f32 0.0, %v1603
    %v1605 = vpop.f32.mrb[0].mxu0
    %1606 = vdwg.mxu0
    %v1607 = vadd.f32 %v1534, %v1604
    %v1608 = vxor.u32 %v1607, 2147483648
    %v1609 = vmul.f32 %v1608, 1.442695
    %v1610 = vpow.pop %v1609
    %v1611 = vadd.f32 %v1610, 1.0
    %v1612 = vrcp.pop %v1611
    %v1613 = vmul.f32 1.0, %v1612
    %v1614 = vadd.f32 %v1604, %v1399
    %1616 = vrot.lane.b32.xlu0 %v1614, 64
    %v1617 = vpop.permute.xlu0 %1616
    %v1619 = vmul.f32 %v1613, %v1617
    %1621 = vrot.lane.b32.xlu0 %v1619, 64
    %v1622 = vpop.permute.xlu0 %1621
    %v1624 = vadd.f32 %v1534, %v1622
    %v1625 = vtanh.pop %v1624
    %v1626 = vsub.f32 1.0, %v1613
    %1628 = vrot.lane.b32.xlu0 %v1625, 96
    %v1629 = vpop.permute.xlu0 %1628
    %v1631 = vmul.f32 %v1626, %v1629
    %v1632 = vmul.f32 %v1613, %v1528
    %v1633 = vadd.f32 %v1631, %v1632
    %1635 = vrot.lane.b32.xlu0 %v1633, 96
    %v1636 = vpop.permute.xlu0 %1635
    %1638 = vst.msk [vmem:[#allocation2 + $0x10] sm:$0xff] %vm296, %v1636
    %v1639 = vld [vmem:[#allocation3 + $0x18] sm:$0xff]
    %v1640 = vsel %vm296, %v1636, 0
    %1642 = vmatprep.subr.mxu0 0.0
    %1643 = vmatpush1.msra.mxu0 %v1305
    %1644 = vmatprep.subr.mxu0 0.0
    %1645 = vmatpush1.msra.mxu0 %v1306
    %1646 = vmatprep.subr.mxu0 0.0
    %1647 = vmatpush1.msra.mxu0 %v1307
    %1648 = vmatprep.subr.mxu0 0.0
    %1649 = vmatpush1.msra.mxu0 %v1308
    %1650 = vmatprep.subr.mxu0 0.0
    %1651 = vmatpush1.msra.mxu0 0.0
    %1652 = vmatprep.subr.mxu0 0.0
    %1653 = vmatpush1.msra.mxu0 0.0
    %1654 = vmatprep.subr.mxu0 0.0
    %1655 = vmatpush1.msra.mxu0 0.0
    %1656 = vmatprep.subr.mxu0 0.0
    %1657 = vmatpush1.msra.mxu0 0.0
    %1658 = vmatprep.subr.mxu0 0.0
    %1659 = vmatpush1.msra.mxu0 0.0
    %1660 = vmatprep.subr.mxu0 0.0
    %1661 = vmatpush1.msra.mxu0 0.0
    %1662 = vmatprep.subr.mxu0 0.0
    %1663 = vmatpush1.msra.mxu0 0.0
    %1664 = vmatprep.subr.mxu0 0.0
    %1665 = vmatpush1.msra.mxu0 0.0
    %1666 = vmatprep.subr.mxu0 0.0
    %1667 = vmatpush1.msra.mxu0 0.0
    %1668 = vmatprep.subr.mxu0 0.0
    %1669 = vmatpush1.msra.mxu0 0.0
    %1670 = vmatprep.subr.mxu0 0.0
    %1671 = vmatpush1.msra.mxu0 0.0
    %1672 = vmatprep.subr.mxu0 0.0
    %1673 = vmatpush1.msra.mxu0 0.0
    %1674 = vmatprep.subr.mxu0 0.0
    %1675 = vmatpush1.msra.mxu0 0.0
    %1676 = vmatprep.subr.mxu0 0.0
    %1677 = vmatpush1.msra.mxu0 0.0
    %1678 = vmatprep.subr.mxu0 0.0
    %1679 = vmatpush1.msra.mxu0 0.0
    %1680 = vmatprep.subr.mxu0 0.0
    %1681 = vmatpush1.msra.mxu0 0.0
    %1682 = vmatprep.subr.mxu0 0.0
    %1683 = vmatpush1.msra.mxu0 0.0
    %1684 = vmatprep.subr.mxu0 0.0
    %1685 = vmatpush1.msra.mxu0 0.0
    %1686 = vmatprep.subr.mxu0 0.0
    %1687 = vmatpush1.msra.mxu0 0.0
    %1688 = vmatprep.subr.mxu0 0.0
    %1689 = vmatpush1.msra.mxu0 0.0
    %1690 = vmatprep.subr.mxu0 0.0
    %1691 = vmatpush1.msra.mxu0 0.0
    %1692 = vmatprep.subr.mxu0 0.0
    %1693 = vmatpush1.msra.mxu0 0.0
    %1694 = vmatprep.subr.mxu0 0.0
    %1695 = vmatpush1.msra.mxu0 0.0
    %1696 = vmatprep.subr.mxu0 0.0
    %1697 = vmatpush1.msra.mxu0 0.0
    %1698 = vmatprep.subr.mxu0 0.0
    %1699 = vmatpush1.msra.mxu0 0.0
    %1700 = vmatprep.subr.mxu0 0.0
    %1701 = vmatpush1.msra.mxu0 0.0
    %1702 = vmatprep.subr.mxu0 0.0
    %1703 = vmatpush1.msra.mxu0 0.0
    %1704 = vmatprep.subr.mxu0 0.0
    %1705 = vmatpush1.msra.mxu0 0.0
    %1706 = vmatprep.mubr.f32.mxu0 0.0
    %1707 = vmatmul.mubr.f32.gmra.mrb[0].mxu0 %v1640
    %v1708 = vpop.f32.mrb[0].mxu0
    %v1709 = vadd.f32 0.0, %v1708
    %v1710 = vpop.f32.mrb[0].mxu0
    %1711 = vdwg.mxu0
    %v1712 = vadd.f32 %v1639, %v1709
    %v1713 = vxor.u32 %v1712, 2147483648
    %v1714 = vmul.f32 %v1713, 1.442695
    %v1715 = vpow.pop %v1714
    %v1716 = vadd.f32 %v1715, 1.0
    %v1717 = vrcp.pop %v1716
    %v1718 = vmul.f32 1.0, %v1717
    %v1719 = vadd.f32 %v1709, %v1399
    %1721 = vrot.lane.b32.xlu0 %v1719, 64
    %v1722 = vpop.permute.xlu0 %1721
    %v1724 = vmul.f32 %v1718, %v1722
    %1726 = vrot.lane.b32.xlu0 %v1724, 64
    %v1727 = vpop.permute.xlu0 %1726
    %v1729 = vadd.f32 %v1639, %v1727
    %v1730 = vtanh.pop %v1729
    %v1731 = vsub.f32 1.0, %v1718
    %1733 = vrot.lane.b32.xlu0 %v1730, 96
    %v1734 = vpop.permute.xlu0 %1733
    %v1736 = vmul.f32 %v1731, %v1734
    %v1737 = vmul.f32 %v1718, %v1633
    %v1738 = vadd.f32 %v1736, %v1737
    %1740 = vrot.lane.b32.xlu0 %v1738, 96
    %v1741 = vpop.permute.xlu0 %1740
    %1743 = vst.msk [vmem:[#allocation2 + $0x18] sm:$0xff] %vm296, %v1741
    %v1744 = vld [vmem:[#allocation3 + $0x20] sm:$0xff]
    %v1745 = vsel %vm296, %v1741, 0
    %1747 = vmatprep.subr.mxu0 0.0
    %1748 = vmatpush1.msra.mxu0 %v1305
    %1749 = vmatprep.subr.mxu0 0.0
    %1750 = vmatpush1.msra.mxu0 %v1306
    %1751 = vmatprep.subr.mxu0 0.0
    %1752 = vmatpush1.msra.mxu0 %v1307
    %1753 = vmatprep.subr.mxu0 0.0
    %1754 = vmatpush1.msra.mxu0 %v1308
    %1755 = vmatprep.subr.mxu0 0.0
    %1756 = vmatpush1.msra.mxu0 0.0
    %1757 = vmatprep.subr.mxu0 0.0
    %1758 = vmatpush1.msra.mxu0 0.0
    %1759 = vmatprep.subr.mxu0 0.0
    %1760 = vmatpush1.msra.mxu0 0.0
    %1761 = vmatprep.subr.mxu0 0.0
    %1762 = vmatpush1.msra.mxu0 0.0
    %1763 = vmatprep.subr.mxu0 0.0
    %1764 = vmatpush1.msra.mxu0 0.0
    %1765 = vmatprep.subr.mxu0 0.0
    %1766 = vmatpush1.msra.mxu0 0.0
    %1767 = vmatprep.subr.mxu0 0.0
    %1768 = vmatpush1.msra.mxu0 0.0
    %1769 = vmatprep.subr.mxu0 0.0
    %1770 = vmatpush1.msra.mxu0 0.0
    %1771 = vmatprep.subr.mxu0 0.0
    %1772 = vmatpush1.msra.mxu0 0.0
    %1773 = vmatprep.subr.mxu0 0.0
    %1774 = vmatpush1.msra.mxu0 0.0
    %1775 = vmatprep.subr.mxu0 0.0
    %1776 = vmatpush1.msra.mxu0 0.0
    %1777 = vmatprep.subr.mxu0 0.0
    %1778 = vmatpush1.msra.mxu0 0.0
    %1779 = vmatprep.subr.mxu0 0.0
    %1780 = vmatpush1.msra.mxu0 0.0
    %1781 = vmatprep.subr.mxu0 0.0
    %1782 = vmatpush1.msra.mxu0 0.0
    %1783 = vmatprep.subr.mxu0 0.0
    %1784 = vmatpush1.msra.mxu0 0.0
    %1785 = vmatprep.subr.mxu0 0.0
    %1786 = vmatpush1.msra.mxu0 0.0
    %1787 = vmatprep.subr.mxu0 0.0
    %1788 = vmatpush1.msra.mxu0 0.0
    %1789 = vmatprep.subr.mxu0 0.0
    %1790 = vmatpush1.msra.mxu0 0.0
    %1791 = vmatprep.subr.mxu0 0.0
    %1792 = vmatpush1.msra.mxu0 0.0
    %1793 = vmatprep.subr.mxu0 0.0
    %1794 = vmatpush1.msra.mxu0 0.0
    %1795 = vmatprep.subr.mxu0 0.0
    %1796 = vmatpush1.msra.mxu0 0.0
    %1797 = vmatprep.subr.mxu0 0.0
    %1798 = vmatpush1.msra.mxu0 0.0
    %1799 = vmatprep.subr.mxu0 0.0
    %1800 = vmatpush1.msra.mxu0 0.0
    %1801 = vmatprep.subr.mxu0 0.0
    %1802 = vmatpush1.msra.mxu0 0.0
    %1803 = vmatprep.subr.mxu0 0.0
    %1804 = vmatpush1.msra.mxu0 0.0
    %1805 = vmatprep.subr.mxu0 0.0
    %1806 = vmatpush1.msra.mxu0 0.0
    %1807 = vmatprep.subr.mxu0 0.0
    %1808 = vmatpush1.msra.mxu0 0.0
    %1809 = vmatprep.subr.mxu0 0.0
    %1810 = vmatpush1.msra.mxu0 0.0
    %1811 = vmatprep.mubr.f32.mxu0 0.0
    %1812 = vmatmul.mubr.f32.gmra.mrb[0].mxu0 %v1745
    %v1813 = vpop.f32.mrb[0].mxu0
    %v1814 = vadd.f32 0.0, %v1813
    %v1815 = vpop.f32.mrb[0].mxu0
    %1816 = vdwg.mxu0
    %v1817 = vadd.f32 %v1744, %v1814
    %v1818 = vxor.u32 %v1817, 2147483648
    %v1819 = vmul.f32 %v1818, 1.442695
    %v1820 = vpow.pop %v1819
    %v1821 = vadd.f32 %v1820, 1.0
    %v1822 = vrcp.pop %v1821
    %v1823 = vmul.f32 1.0, %v1822
    %v1824 = vadd.f32 %v1814, %v1399
    %1826 = vrot.lane.b32.xlu0 %v1824, 64
    %v1827 = vpop.permute.xlu0 %1826
    %v1829 = vmul.f32 %v1823, %v1827
    %1831 = vrot.lane.b32.xlu0 %v1829, 64
    %v1832 = vpop.permute.xlu0 %1831
    %v1834 = vadd.f32 %v1744, %v1832
    %v1835 = vtanh.pop %v1834
    %v1836 = vsub.f32 1.0, %v1823
    %1838 = vrot.lane.b32.xlu0 %v1835, 96
    %v1839 = vpop.permute.xlu0 %1838
    %v1841 = vmul.f32 %v1836, %v1839
    %v1842 = vmul.f32 %v1823, %v1738
    %v1843 = vadd.f32 %v1841, %v1842
    %1845 = vrot.lane.b32.xlu0 %v1843, 96
    %v1846 = vpop.permute.xlu0 %1845
    %1848 = vst.msk [vmem:[#allocation2 + $0x20] sm:$0xff] %vm296, %v1846
    %v1849 = vld [vmem:[#allocation3 + $0x28] sm:$0xff]
    %v1850 = vsel %vm296, %v1846, 0
    %1852 = vmatprep.subr.mxu0 0.0
    %1853 = vmatpush1.msra.mxu0 %v1305
    %1854 = vmatprep.subr.mxu0 0.0
    %1855 = vmatpush1.msra.mxu0 %v1306
    %1856 = vmatprep.subr.mxu0 0.0
    %1857 = vmatpush1.msra.mxu0 %v1307
    %1858 = vmatprep.subr.mxu0 0.0
    %1859 = vmatpush1.msra.mxu0 %v1308
    %1860 = vmatprep.subr.mxu0 0.0
    %1861 = vmatpush1.msra.mxu0 0.0
    %1862 = vmatprep.subr.mxu0 0.0
    %1863 = vmatpush1.msra.mxu0 0.0
    %1864 = vmatprep.subr.mxu0 0.0
    %1865 = vmatpush1.msra.mxu0 0.0
    %1866 = vmatprep.subr.mxu0 0.0
    %1867 = vmatpush1.msra.mxu0 0.0
    %1868 = vmatprep.subr.mxu0 0.0
    %1869 = vmatpush1.msra.mxu0 0.0
    %1870 = vmatprep.subr.mxu0 0.0
    %1871 = vmatpush1.msra.mxu0 0.0
    %1872 = vmatprep.subr.mxu0 0.0
    %1873 = vmatpush1.msra.mxu0 0.0
    %1874 = vmatprep.subr.mxu0 0.0
    %1875 = vmatpush1.msra.mxu0 0.0
    %1876 = vmatprep.subr.mxu0 0.0
    %1877 = vmatpush1.msra.mxu0 0.0
    %1878 = vmatprep.subr.mxu0 0.0
    %1879 = vmatpush1.msra.mxu0 0.0
    %1880 = vmatprep.subr.mxu0 0.0
    %1881 = vmatpush1.msra.mxu0 0.0
    %1882 = vmatprep.subr.mxu0 0.0
    %1883 = vmatpush1.msra.mxu0 0.0
    %1884 = vmatprep.subr.mxu0 0.0
    %1885 = vmatpush1.msra.mxu0 0.0
    %1886 = vmatprep.subr.mxu0 0.0
    %1887 = vmatpush1.msra.mxu0 0.0
    %1888 = vmatprep.subr.mxu0 0.0
    %1889 = vmatpush1.msra.mxu0 0.0
    %1890 = vmatprep.subr.mxu0 0.0
    %1891 = vmatpush1.msra.mxu0 0.0
    %1892 = vmatprep.subr.mxu0 0.0
    %1893 = vmatpush1.msra.mxu0 0.0
    %1894 = vmatprep.subr.mxu0 0.0
    %1895 = vmatpush1.msra.mxu0 0.0
    %1896 = vmatprep.subr.mxu0 0.0
    %1897 = vmatpush1.msra.mxu0 0.0
    %1898 = vmatprep.subr.mxu0 0.0
    %1899 = vmatpush1.msra.mxu0 0.0
    %1900 = vmatprep.subr.mxu0 0.0
    %1901 = vmatpush1.msra.mxu0 0.0
    %1902 = vmatprep.subr.mxu0 0.0
    %1903 = vmatpush1.msra.mxu0 0.0
    %1904 = vmatprep.subr.mxu0 0.0
    %1905 = vmatpush1.msra.mxu0 0.0
    %1906 = vmatprep.subr.mxu0 0.0
    %1907 = vmatpush1.msra.mxu0 0.0
    %1908 = vmatprep.subr.mxu0 0.0
    %1909 = vmatpush1.msra.mxu0 0.0
    %1910 = vmatprep.subr.mxu0 0.0
    %1911 = vmatpush1.msra.mxu0 0.0
    %1912 = vmatprep.subr.mxu0 0.0
    %1913 = vmatpush1.msra.mxu0 0.0
    %1914 = vmatprep.subr.mxu0 0.0
    %1915 = vmatpush1.msra.mxu0 0.0
    %1916 = vmatprep.mubr.f32.mxu0 0.0
    %1917 = vmatmul.mubr.f32.gmra.mrb[0].mxu0 %v1850
    %v1918 = vpop.f32.mrb[0].mxu0
    %v1919 = vadd.f32 0.0, %v1918
    %v1920 = vpop.f32.mrb[0].mxu0
    %1921 = vdwg.mxu0
    %v1922 = vadd.f32 %v1849, %v1919
    %v1923 = vxor.u32 %v1922, 2147483648
    %v1924 = vmul.f32 %v1923, 1.442695
    %v1925 = vpow.pop %v1924
    %v1926 = vadd.f32 %v1925, 1.0
    %v1927 = vrcp.pop %v1926
    %v1928 = vmul.f32 1.0, %v1927
    %v1929 = vadd.f32 %v1919, %v1399
    %1931 = vrot.lane.b32.xlu0 %v1929, 64
    %v1932 = vpop.permute.xlu0 %1931
    %v1934 = vmul.f32 %v1928, %v1932
    %1936 = vrot.lane.b32.xlu0 %v1934, 64
    %v1937 = vpop.permute.xlu0 %1936
    %v1939 = vadd.f32 %v1849, %v1937
    %v1940 = vtanh.pop %v1939
    %v1941 = vsub.f32 1.0, %v1928
    %1943 = vrot.lane.b32.xlu0 %v1940, 96
    %v1944 = vpop.permute.xlu0 %1943
    %v1946 = vmul.f32 %v1941, %v1944
    %v1947 = vmul.f32 %v1928, %v1843
    %v1948 = vadd.f32 %v1946, %v1947
    %1950 = vrot.lane.b32.xlu0 %v1948, 96
    %v1951 = vpop.permute.xlu0 %1950
    %1953 = vst.msk [vmem:[#allocation2 + $0x28] sm:$0xff] %vm296, %v1951
    %v1954 = vld [vmem:[#allocation3 + $0x30] sm:$0xff]
    %v1955 = vsel %vm296, %v1951, 0
    %1957 = vmatprep.subr.mxu0 0.0
    %1958 = vmatpush1.msra.mxu0 %v1305
    %1959 = vmatprep.subr.mxu0 0.0
    %1960 = vmatpush1.msra.mxu0 %v1306
    %1961 = vmatprep.subr.mxu0 0.0
    %1962 = vmatpush1.msra.mxu0 %v1307
    %1963 = vmatprep.subr.mxu0 0.0
    %1964 = vmatpush1.msra.mxu0 %v1308
    %1965 = vmatprep.subr.mxu0 0.0
    %1966 = vmatpush1.msra.mxu0 0.0
    %1967 = vmatprep.subr.mxu0 0.0
    %1968 = vmatpush1.msra.mxu0 0.0
    %1969 = vmatprep.subr.mxu0 0.0
    %1970 = vmatpush1.msra.mxu0 0.0
    %1971 = vmatprep.subr.mxu0 0.0
    %1972 = vmatpush1.msra.mxu0 0.0
    %1973 = vmatprep.subr.mxu0 0.0
    %1974 = vmatpush1.msra.mxu0 0.0
    %1975 = vmatprep.subr.mxu0 0.0
    %1976 = vmatpush1.msra.mxu0 0.0
    %1977 = vmatprep.subr.mxu0 0.0
    %1978 = vmatpush1.msra.mxu0 0.0
    %1979 = vmatprep.subr.mxu0 0.0
    %1980 = vmatpush1.msra.mxu0 0.0
    %1981 = vmatprep.subr.mxu0 0.0
    %1982 = vmatpush1.msra.mxu0 0.0
    %1983 = vmatprep.subr.mxu0 0.0
    %1984 = vmatpush1.msra.mxu0 0.0
    %1985 = vmatprep.subr.mxu0 0.0
    %1986 = vmatpush1.msra.mxu0 0.0
    %1987 = vmatprep.subr.mxu0 0.0
    %1988 = vmatpush1.msra.mxu0 0.0
    %1989 = vmatprep.subr.mxu0 0.0
    %1990 = vmatpush1.msra.mxu0 0.0
    %1991 = vmatprep.subr.mxu0 0.0
    %1992 = vmatpush1.msra.mxu0 0.0
    %1993 = vmatprep.subr.mxu0 0.0
    %1994 = vmatpush1.msra.mxu0 0.0
    %1995 = vmatprep.subr.mxu0 0.0
    %1996 = vmatpush1.msra.mxu0 0.0
    %1997 = vmatprep.subr.mxu0 0.0
    %1998 = vmatpush1.msra.mxu0 0.0
    %1999 = vmatprep.subr.mxu0 0.0
    %2000 = vmatpush1.msra.mxu0 0.0
    %2001 = vmatprep.subr.mxu0 0.0
    %2002 = vmatpush1.msra.mxu0 0.0
    %2003 = vmatprep.subr.mxu0 0.0
    %2004 = vmatpush1.msra.mxu0 0.0
    %2005 = vmatprep.subr.mxu0 0.0
    %2006 = vmatpush1.msra.mxu0 0.0
    %2007 = vmatprep.subr.mxu0 0.0
    %2008 = vmatpush1.msra.mxu0 0.0
    %2009 = vmatprep.subr.mxu0 0.0
    %2010 = vmatpush1.msra.mxu0 0.0
    %2011 = vmatprep.subr.mxu0 0.0
    %2012 = vmatpush1.msra.mxu0 0.0
    %2013 = vmatprep.subr.mxu0 0.0
    %2014 = vmatpush1.msra.mxu0 0.0
    %2015 = vmatprep.subr.mxu0 0.0
    %2016 = vmatpush1.msra.mxu0 0.0
    %2017 = vmatprep.subr.mxu0 0.0
    %2018 = vmatpush1.msra.mxu0 0.0
    %2019 = vmatprep.subr.mxu0 0.0
    %2020 = vmatpush1.msra.mxu0 0.0
    %2021 = vmatprep.mubr.f32.mxu0 0.0
    %2022 = vmatmul.mubr.f32.gmra.mrb[0].mxu0 %v1955
    %v2023 = vpop.f32.mrb[0].mxu0
    %v2024 = vadd.f32 0.0, %v2023
    %v2025 = vpop.f32.mrb[0].mxu0
    %2026 = vdwg.mxu0
    %v2027 = vadd.f32 %v1954, %v2024
    %v2028 = vxor.u32 %v2027, 2147483648
    %v2029 = vmul.f32 %v2028, 1.442695
    %v2030 = vpow.pop %v2029
    %v2031 = vadd.f32 %v2030, 1.0
    %v2032 = vrcp.pop %v2031
    %v2033 = vmul.f32 1.0, %v2032
    %v2034 = vadd.f32 %v2024, %v1399
    %2036 = vrot.lane.b32.xlu0 %v2034, 64
    %v2037 = vpop.permute.xlu0 %2036
    %v2039 = vmul.f32 %v2033, %v2037
    %2041 = vrot.lane.b32.xlu0 %v2039, 64
    %v2042 = vpop.permute.xlu0 %2041
    %v2044 = vadd.f32 %v1954, %v2042
    %v2045 = vtanh.pop %v2044
    %v2046 = vsub.f32 1.0, %v2033
    %2048 = vrot.lane.b32.xlu0 %v2045, 96
    %v2049 = vpop.permute.xlu0 %2048
    %v2051 = vmul.f32 %v2046, %v2049
    %v2052 = vmul.f32 %v2033, %v1948
    %v2053 = vadd.f32 %v2051, %v2052
    %2055 = vrot.lane.b32.xlu0 %v2053, 96
    %v2056 = vpop.permute.xlu0 %2055
    %2058 = vst.msk [vmem:[#allocation2 + $0x30] sm:$0xff] %vm296, %v2056
    %v2059 = vld [vmem:[#allocation3 + $0x38] sm:$0xff]
    %v2060 = vsel %vm296, %v2056, 0
    %2062 = vmatprep.subr.mxu0 0.0
    %2063 = vmatpush1.msra.mxu0 %v1305
    %2064 = vmatprep.subr.mxu0 0.0
    %2065 = vmatpush1.msra.mxu0 %v1306
    %2066 = vmatprep.subr.mxu0 0.0
    %2067 = vmatpush1.msra.mxu0 %v1307
    %2068 = vmatprep.subr.mxu0 0.0
    %2069 = vmatpush1.msra.mxu0 %v1308
    %2070 = vmatprep.subr.mxu0 0.0
    %2071 = vmatpush1.msra.mxu0 0.0
    %2072 = vmatprep.subr.mxu0 0.0
    %2073 = vmatpush1.msra.mxu0 0.0
    %2074 = vmatprep.subr.mxu0 0.0
    %2075 = vmatpush1.msra.mxu0 0.0
    %2076 = vmatprep.subr.mxu0 0.0
    %2077 = vmatpush1.msra.mxu0 0.0
    %2078 = vmatprep.subr.mxu0 0.0
    %2079 = vmatpush1.msra.mxu0 0.0
    %2080 = vmatprep.subr.mxu0 0.0
    %2081 = vmatpush1.msra.mxu0 0.0
    %2082 = vmatprep.subr.mxu0 0.0
    %2083 = vmatpush1.msra.mxu0 0.0
    %2084 = vmatprep.subr.mxu0 0.0
    %2085 = vmatpush1.msra.mxu0 0.0
    %2086 = vmatprep.subr.mxu0 0.0
    %2087 = vmatpush1.msra.mxu0 0.0
    %2088 = vmatprep.subr.mxu0 0.0
    %2089 = vmatpush1.msra.mxu0 0.0
    %2090 = vmatprep.subr.mxu0 0.0
    %2091 = vmatpush1.msra.mxu0 0.0
    %2092 = vmatprep.subr.mxu0 0.0
    %2093 = vmatpush1.msra.mxu0 0.0
    %2094 = vmatprep.subr.mxu0 0.0
    %2095 = vmatpush1.msra.mxu0 0.0
    %2096 = vmatprep.subr.mxu0 0.0
    %2097 = vmatpush1.msra.mxu0 0.0
    %2098 = vmatprep.subr.mxu0 0.0
    %2099 = vmatpush1.msra.mxu0 0.0
    %2100 = vmatprep.subr.mxu0 0.0
    %2101 = vmatpush1.msra.mxu0 0.0
    %2102 = vmatprep.subr.mxu0 0.0
    %2103 = vmatpush1.msra.mxu0 0.0
    %2104 = vmatprep.subr.mxu0 0.0
    %2105 = vmatpush1.msra.mxu0 0.0
    %2106 = vmatprep.subr.mxu0 0.0
    %2107 = vmatpush1.msra.mxu0 0.0
    %2108 = vmatprep.subr.mxu0 0.0
    %2109 = vmatpush1.msra.mxu0 0.0
    %2110 = vmatprep.subr.mxu0 0.0
    %2111 = vmatpush1.msra.mxu0 0.0
    %2112 = vmatprep.subr.mxu0 0.0
    %2113 = vmatpush1.msra.mxu0 0.0
    %2114 = vmatprep.subr.mxu0 0.0
    %2115 = vmatpush1.msra.mxu0 0.0
    %2116 = vmatprep.subr.mxu0 0.0
    %2117 = vmatpush1.msra.mxu0 0.0
    %2118 = vmatprep.subr.mxu0 0.0
    %2119 = vmatpush1.msra.mxu0 0.0
    %2120 = vmatprep.subr.mxu0 0.0
    %2121 = vmatpush1.msra.mxu0 0.0
    %2122 = vmatprep.subr.mxu0 0.0
    %2123 = vmatpush1.msra.mxu0 0.0
    %2124 = vmatprep.subr.mxu0 0.0
    %2125 = vmatpush1.msra.mxu0 0.0
    %2126 = vmatprep.mubr.f32.mxu0 0.0
    %2127 = vmatmul.mubr.f32.gmra.mrb[0].mxu0 %v2060
    %v2128 = vpop.f32.mrb[0].mxu0
    %v2129 = vadd.f32 0.0, %v2128
    %v2130 = vpop.f32.mrb[0].mxu0
    %2131 = vdwg.mxu0
    %v2132 = vadd.f32 %v2059, %v2129
    %v2133 = vxor.u32 %v2132, 2147483648
    %v2134 = vmul.f32 %v2133, 1.442695
    %v2135 = vpow.pop %v2134
    %v2136 = vadd.f32 %v2135, 1.0
    %v2137 = vrcp.pop %v2136
    %v2138 = vmul.f32 1.0, %v2137
    %v2139 = vadd.f32 %v2129, %v1399
    %2141 = vrot.lane.b32.xlu0 %v2139, 64
    %v2142 = vpop.permute.xlu0 %2141
    %v2144 = vmul.f32 %v2138, %v2142
    %2146 = vrot.lane.b32.xlu0 %v2144, 64
    %v2147 = vpop.permute.xlu0 %2146
    %v2149 = vadd.f32 %v2059, %v2147
    %v2150 = vtanh.pop %v2149
    %v2151 = vsub.f32 1.0, %v2138
    %2153 = vrot.lane.b32.xlu0 %v2150, 96
    %v2154 = vpop.permute.xlu0 %2153
    %v2156 = vmul.f32 %v2151, %v2154
    %v2157 = vmul.f32 %v2138, %v2053
    %v2158 = vadd.f32 %v2156, %v2157
    %2160 = vrot.lane.b32.xlu0 %v2158, 96
    %v2161 = vpop.permute.xlu0 %2160
    %2163 = vst.msk [vmem:[#allocation2 + $0x38] sm:$0xff] %vm296, %v2161
    %s2164 = scalar_lea.vmem [#allocation16], 8
    %2165 = vst.msk [vmem:[%s2164] sm:$0xff] %vm296, %v2161
    %v2166 = vld [vmem:[%s10] sm:$0xff]
    %v2167 = vld [vmem:[%s10 + $0x8] sm:$0xff]
    %v2168 = vld [vmem:[%s10 + $0x10] sm:$0xff]
    %v2169 = vld [vmem:[%s10 + $0x18] sm:$0xff]
    %v2170 = vld [vmem:[%s11] sm:$0x1]
    %v2171 = vld [vmem:[#allocation2] ss:$8 sm:$0xf]
    %v2172 = vld [vmem:[#allocation2] ss:$8 sm:$0xf0]
    %v2173 = vor.u32 %v2171, %v2172
    %v2175 = vlaneseq
    %v2176 = vshrl.u32 %v2175, 7
    %v2177 = vsub.s32 0, %v2176
    %v2178 = vrot.slane %v2170, %v2177
    %v2181 = vsel %vm296, %v2173, 0
    %2183 = vmatprep.subr.mxu0 0.0
    %2184 = vmatpush1.msra.mxu0 %v2166
    %2185 = vmatprep.subr.mxu0 0.0
    %2186 = vmatpush1.msra.mxu0 %v2167
    %2187 = vmatprep.subr.mxu0 0.0
    %2188 = vmatpush1.msra.mxu0 %v2168
    %2189 = vmatprep.subr.mxu0 0.0
    %2190 = vmatpush1.msra.mxu0 %v2169
    %2191 = vmatprep.subr.mxu0 0.0
    %2192 = vmatpush1.msra.mxu0 0.0
    %2193 = vmatprep.subr.mxu0 0.0
    %2194 = vmatpush1.msra.mxu0 0.0
    %2195 = vmatprep.subr.mxu0 0.0
    %2196 = vmatpush1.msra.mxu0 0.0
    %2197 = vmatprep.subr.mxu0 0.0
    %2198 = vmatpush1.msra.mxu0 0.0
    %2199 = vmatprep.subr.mxu0 0.0
    %2200 = vmatpush1.msra.mxu0 0.0
    %2201 = vmatprep.subr.mxu0 0.0
    %2202 = vmatpush1.msra.mxu0 0.0
    %2203 = vmatprep.subr.mxu0 0.0
    %2204 = vmatpush1.msra.mxu0 0.0
    %2205 = vmatprep.subr.mxu0 0.0
    %2206 = vmatpush1.msra.mxu0 0.0
    %2207 = vmatprep.subr.mxu0 0.0
    %2208 = vmatpush1.msra.mxu0 0.0
    %2209 = vmatprep.subr.mxu0 0.0
    %2210 = vmatpush1.msra.mxu0 0.0
    %2211 = vmatprep.subr.mxu0 0.0
    %2212 = vmatpush1.msra.mxu0 0.0
    %2213 = vmatprep.subr.mxu0 0.0
    %2214 = vmatpush1.msra.mxu0 0.0
    %2215 = vmatprep.subr.mxu0 0.0
    %2216 = vmatpush1.msra.mxu0 0.0
    %2217 = vmatprep.subr.mxu0 0.0
    %2218 = vmatpush1.msra.mxu0 0.0
    %2219 = vmatprep.subr.mxu0 0.0
    %2220 = vmatpush1.msra.mxu0 0.0
    %2221 = vmatprep.subr.mxu0 0.0
    %2222 = vmatpush1.msra.mxu0 0.0
    %2223 = vmatprep.subr.mxu0 0.0
    %2224 = vmatpush1.msra.mxu0 0.0
    %2225 = vmatprep.subr.mxu0 0.0
    %2226 = vmatpush1.msra.mxu0 0.0
    %2227 = vmatprep.subr.mxu0 0.0
    %2228 = vmatpush1.msra.mxu0 0.0
    %2229 = vmatprep.subr.mxu0 0.0
    %2230 = vmatpush1.msra.mxu0 0.0
    %2231 = vmatprep.subr.mxu0 0.0
    %2232 = vmatpush1.msra.mxu0 0.0
    %2233 = vmatprep.subr.mxu0 0.0
    %2234 = vmatpush1.msra.mxu0 0.0
    %2235 = vmatprep.subr.mxu0 0.0
    %2236 = vmatpush1.msra.mxu0 0.0
    %2237 = vmatprep.subr.mxu0 0.0
    %2238 = vmatpush1.msra.mxu0 0.0
    %2239 = vmatprep.subr.mxu0 0.0
    %2240 = vmatpush1.msra.mxu0 0.0
    %2241 = vmatprep.subr.mxu0 0.0
    %2242 = vmatpush1.msra.mxu0 0.0
    %2243 = vmatprep.subr.mxu0 0.0
    %2244 = vmatpush1.msra.mxu0 0.0
    %2245 = vmatprep.subr.mxu0 0.0
    %2246 = vmatpush1.msra.mxu0 0.0
    %2247 = vmatprep.mubr.f32.mxu0 0.0
    %2248 = vmatmul.mubr.f32.gmra.mrb[0].mxu0 %v2181
    %v2249 = vpop.f32.mrb[0].mxu0
    %v2250 = vadd.f32 %v2178, %v2249
    %v2251 = vpop.f32.mrb[0].mxu0
    %2252 = vdwg.mxu0
    %2253 = vst [vmem:[#allocation15] sm:$0xff] %v2250
    %s2254 = scalar_lea.vmem [#allocation2], 1
    %v2255 = vld [vmem:[%s2254] ss:$8 sm:$0xf]
    %v2256 = vld [vmem:[%s2254] ss:$8 sm:$0xf0]
    %v2257 = vor.u32 %v2255, %v2256
    %v2259 = vsel %vm296, %v2257, 0
    %2261 = vmatprep.subr.mxu0 0.0
    %2262 = vmatpush1.msra.mxu0 %v2166
    %2263 = vmatprep.subr.mxu0 0.0
    %2264 = vmatpush1.msra.mxu0 %v2167
    %2265 = vmatprep.subr.mxu0 0.0
    %2266 = vmatpush1.msra.mxu0 %v2168
    %2267 = vmatprep.subr.mxu0 0.0
    %2268 = vmatpush1.msra.mxu0 %v2169
    %2269 = vmatprep.subr.mxu0 0.0
    %2270 = vmatpush1.msra.mxu0 0.0
    %2271 = vmatprep.subr.mxu0 0.0
    %2272 = vmatpush1.msra.mxu0 0.0
    %2273 = vmatprep.subr.mxu0 0.0
    %2274 = vmatpush1.msra.mxu0 0.0
    %2275 = vmatprep.subr.mxu0 0.0
    %2276 = vmatpush1.msra.mxu0 0.0
    %2277 = vmatprep.subr.mxu0 0.0
    %2278 = vmatpush1.msra.mxu0 0.0
    %2279 = vmatprep.subr.mxu0 0.0
    %2280 = vmatpush1.msra.mxu0 0.0
    %2281 = vmatprep.subr.mxu0 0.0
    %2282 = vmatpush1.msra.mxu0 0.0
    %2283 = vmatprep.subr.mxu0 0.0
    %2284 = vmatpush1.msra.mxu0 0.0
    %2285 = vmatprep.subr.mxu0 0.0
    %2286 = vmatpush1.msra.mxu0 0.0
    %2287 = vmatprep.subr.mxu0 0.0
    %2288 = vmatpush1.msra.mxu0 0.0
    %2289 = vmatprep.subr.mxu0 0.0
    %2290 = vmatpush1.msra.mxu0 0.0
    %2291 = vmatprep.subr.mxu0 0.0
    %2292 = vmatpush1.msra.mxu0 0.0
    %2293 = vmatprep.subr.mxu0 0.0
    %2294 = vmatpush1.msra.mxu0 0.0
    %2295 = vmatprep.subr.mxu0 0.0
    %2296 = vmatpush1.msra.mxu0 0.0
    %2297 = vmatprep.subr.mxu0 0.0
    %2298 = vmatpush1.msra.mxu0 0.0
    %2299 = vmatprep.subr.mxu0 0.0
    %2300 = vmatpush1.msra.mxu0 0.0
    %2301 = vmatprep.subr.mxu0 0.0
    %2302 = vmatpush1.msra.mxu0 0.0
    %2303 = vmatprep.subr.mxu0 0.0
    %2304 = vmatpush1.msra.mxu0 0.0
    %2305 = vmatprep.subr.mxu0 0.0
    %2306 = vmatpush1.msra.mxu0 0.0
    %2307 = vmatprep.subr.mxu0 0.0
    %2308 = vmatpush1.msra.mxu0 0.0
    %2309 = vmatprep.subr.mxu0 0.0
    %2310 = vmatpush1.msra.mxu0 0.0
    %2311 = vmatprep.subr.mxu0 0.0
    %2312 = vmatpush1.msra.mxu0 0.0
    %2313 = vmatprep.subr.mxu0 0.0
    %2314 = vmatpush1.msra.mxu0 0.0
    %2315 = vmatprep.subr.mxu0 0.0
    %2316 = vmatpush1.msra.mxu0 0.0
    %2317 = vmatprep.subr.mxu0 0.0
    %2318 = vmatpush1.msra.mxu0 0.0
    %2319 = vmatprep.subr.mxu0 0.0
    %2320 = vmatpush1.msra.mxu0 0.0
    %2321 = vmatprep.subr.mxu0 0.0
    %2322 = vmatpush1.msra.mxu0 0.0
    %2323 = vmatprep.subr.mxu0 0.0
    %2324 = vmatpush1.msra.mxu0 0.0
    %2325 = vmatprep.mubr.f32.mxu0 0.0
    %2326 = vmatmul.mubr.f32.gmra.mrb[0].mxu0 %v2259
    %v2327 = vpop.f32.mrb[0].mxu0
    %v2328 = vadd.f32 %v2178, %v2327
    %v2329 = vpop.f32.mrb[0].mxu0
    %2330 = vdwg.mxu0
    %s2331 = scalar_lea.vmem [#allocation15], 8
    %2332 = vst [vmem:[%s2331] sm:$0xff] %v2328
    // Predicated region
    $region74: #{tpu_custom_call.1} parent=1 // pred_check
      _
    $region75: #{tpu_custom_call.1} parent=1 // pred_check_branch
      %2334 = sbr.rel (0) target = $region77
    $region76: #{tpu_custom_call.1} parent=1 // pred_region
      %s2336 = ssub.s32 256, 256
      %2337 = vsyncadd [#allocation6], %s2336
      %s2338 = sshll.u32 [#allocation15], 4
      %s2339 = int_to_ptr.vmem [resolvable:$true] %s2338
      %2344 = dma.vmem_to_hbm [thread:$0]  %s2339, 256, %s12, [#allocation6], 128, 128, 8
    $region77: #{tpu_custom_call.1} parent=1 // pred_fallthru
      _
    // Predicated region
    $region78: #{tpu_custom_call.1} parent=1 // pred_check
      _
    $region79: #{tpu_custom_call.1} parent=1 // pred_check_branch
      %2346 = sbr.rel (0) target = $region81
    $region80: #{tpu_custom_call.1} parent=1 // pred_region
      %s2348 = ssub.s32 256, 256
      %2349 = vsyncadd [#allocation17], %s2348
      %s2350 = sshll.u32 [#allocation16], 4
      %s2351 = int_to_ptr.vmem [resolvable:$true] %s2350
      %2356 = dma.vmem_to_hbm [thread:$0]  %s2351, 256, %s13, [#allocation17], 128, 128, 8
    $region81: #{tpu_custom_call.1} parent=1 // pred_fallthru
      _
    // Predicated region
    $region82: #{tpu_custom_call.1} parent=1 // pred_check
      _
    $region83: #{tpu_custom_call.1} parent=1 // pred_check_branch
      %2358 = sbr.rel (0) target = $region85
    $region84: #{tpu_custom_call.1} parent=1 // pred_region
      %2359 = dma.done [#allocation6], 256
    $region85: #{tpu_custom_call.1} parent=1 // pred_fallthru
      _
    // Predicated region
    $region86: #{tpu_custom_call.1} parent=1 // pred_check
      _
    $region87: #{tpu_custom_call.1} parent=1 // pred_check_branch
      %2361 = sbr.rel (0) target = $region89
    $region88: #{tpu_custom_call.1} parent=1 // pred_region
      %2362 = dma.done [#allocation17], 256
    $region89: #{tpu_custom_call.1} parent=1 // pred_fallthru
      _
    %2363 = vsyncpa [#allocation5], 1
    %2364 = vsyncpa [#allocation8], 1
    %2365 = vsyncpa [#allocation11], 1
    %2366 = vsyncpa [#allocation14], 1
    %2367 = vsyncpa [#allocation6], 1
    %2368 = vsyncpa [#allocation17], 1

</llo_original>
